<compile_context>
chip_gen: v7x
topology: tpu7x:2x2x1
jax: 0.10.0
libtpu: 0.0.40
codegen_flags: <defaults>
</compile_context>

<pallas_src>
import jax
import jax.numpy as jnp
from jax.experimental import pallas as pl
from jax.experimental.pallas import tpu as pltpu

LANE = 128


def _round_up(n, m=LANE):
    return ((n + m - 1) // m) * m


def _pad2(w, rows, cols):
    return jnp.pad(w, ((0, rows - w.shape[0]), (0, cols - w.shape[1])))


# ----------------------------- Pallas kernel -------------------------------

def _make_fused_gcn_kernel(layout, n_slabs, n_layers):
    """Builds the fused 12-layer kernel.

    `layout` holds the static placement (slab index, row offset, rows, lane width)
    of every weight block inside the packed bf16 weight slabs, so the kernel carves
    each layer's weight out with zero-cost static ref slices instead of taking
    ~24 separately-DMA'd inputs.
    """

    def kernel(*refs):
        a_ref, x_ref = refs[0], refs[1]
        slab_refs = refs[2:2 + n_slabs]
        bias_ref = refs[2 + n_slabs]
        o_ref = refs[3 + n_slabs]

        a = a_ref[...]            # (Np, Np) bf16 normalized adjacency, VMEM-resident
        x = x_ref[...]            # (Np, 128) bf16 lane-padded input features
        h_bf = x                  # bf16 activation fed to the MXU
        h = None                  # f32 activation (bias add / tanh kept f32 for v5e)

        for i, info in enumerate(layout):
            fo = info["fo"]
            if info["kind"] == "split":
                # concat(h, x) @ W7 == h @ W7_top + x @ W7_bot (no materialized concat)
                s_t, o_t, r_t = info["top"]
                s_b, o_b, r_b = info["bot"]
                w_top = slab_refs[s_t][o_t:o_t + r_t, :fo]
                w_bot = slab_refs[s_b][o_b:o_b + r_b, :fo]
                xw = (jnp.dot(h_bf, w_top, preferred_element_type=jnp.float32)
                      + jnp.dot(x, w_bot, preferred_element_type=jnp.float32))
                z = jnp.dot(a, xw.astype(jnp.bfloat16),
                            preferred_element_type=jnp.float32)
            else:
                s_w, o_w, r_w = info["w"]
                w = slab_refs[s_w][o_w:o_w + r_w, :fo]
                fi = h_bf.shape[1]
                if fo > fi:
                    # expansion (padded widths): aggregate on the narrow width first
                    ah = jnp.dot(a, h_bf, preferred_element_type=jnp.float32)
                    z = jnp.dot(ah.astype(jnp.bfloat16), w,
                                preferred_element_type=jnp.float32)
                else:
                    # contraction / equal: transform first, then aggregate
                    hw = jnp.dot(h_bf, w, preferred_element_type=jnp.float32)
                    z = jnp.dot(a, hw.astype(jnp.bfloat16),
                                preferred_element_type=jnp.float32)

            b = bias_ref[i:i + 1, :fo]         # (1, fo) f32, static slice
            h = z + b                          # f32 bias add (VPU)
            if i != n_layers - 1:              # final conv12 has no tanh
                h = jnp.tanh(h)                # f32 tanh (EUP slot; free filler here)
            h_bf = h.astype(jnp.bfloat16)

        o_ref[...] = h.astype(o_ref.dtype)

    return kernel


# ------------------------------ Glue (JAX) ---------------------------------

def build_norm_adj(edge_index, num_nodes):
    """Dense D^{-1/2} (A + I) D^{-1/2} as in PyG GCNConv default."""
    src = edge_index[0]
    dst = edge_index[1]
    loop = jnp.arange(num_nodes, dtype=edge_index.dtype)
    src = jnp.concatenate([src, loop])
    dst = jnp.concatenate([dst, loop])
    # A[i, j] = 1 if there is an edge j -> i (messages flow source -> target)
    a = jnp.zeros((num_nodes, num_nodes), jnp.float32).at[dst, src].add(1.0)
    deg = a.sum(axis=1)
    d_inv_sqrt = jnp.where(deg > 0, 1.0 / jnp.sqrt(deg), 0.0)
    return d_inv_sqrt[:, None] * a * d_inv_sqrt[None, :]


def init_params(in_dim, out_dim, seed=12345):
    """Deterministic glorot-uniform weights, zero biases (shapes per GCN.__init__)."""
    dims = [
        (in_dim, in_dim * 2),
        (in_dim * 2, in_dim * 4),
        (in_dim * 4, in_dim * 8),
        (in_dim * 8, in_dim * 16),
        (in_dim * 16, in_dim * 32),
        (in_dim * 32, in_dim * 64),
        (in_dim * 64 + in_dim, in_dim * 32),
        (in_dim * 32, in_dim * 16),
        (in_dim * 16, in_dim * 8),
        (in_dim * 8, in_dim * 4),
        (in_dim * 4, in_dim * 2),
        (in_dim * 2, out_dim),
    ]
    key = jax.random.PRNGKey(seed)
    params = []
    for (f_in, f_out) in dims:
        key, wk = jax.random.split(key)
        limit = jnp.sqrt(6.0 / (f_in + f_out))
        w = jax.random.uniform(wk, (f_in, f_out), jnp.float32, -limit, limit)
        b = jnp.zeros((f_out,), jnp.float32)
        params.append((w, b))
    return params


def _pack_params(params):
    """Pack all (lane-padded) weights into one bf16 slab per distinct output lane
    width plus one stacked f32 bias array.  Returns (slabs, bias, layout), where
    layout records each layer's static placement for zero-cost in-kernel slicing.
    """
    f_h = params[5][0].shape[1]          # conv6 output dim: rows of W7 that multiply h

    # Enumerate individual padded weight blocks (layer 6 is split for the skip-concat).
    blocks = []                          # (tag, padded rows, fo_pad, padded array)
    for i, (w, _) in enumerate(params):
        f_in, f_out = w.shape
        fo_pad = _round_up(f_out)
        if i == 6:
            blocks.append((("top", i), _round_up(f_h), fo_pad,
                           _pad2(w[:f_h], _round_up(f_h), fo_pad)))
            blocks.append((("bot", i), _round_up(f_in - f_h), fo_pad,
                           _pad2(w[f_h:], _round_up(f_in - f_h), fo_pad)))
        else:
            blocks.append((("w", i), _round_up(f_in), fo_pad,
                           _pad2(w, _round_up(f_in), fo_pad)))

    widths = sorted({blk[2] for blk in blocks})      # distinct lane widths (128, 256)
    slab_parts = {wd: [] for wd in widths}
    placement = {}                                    # tag -> (slab_idx, row_off, rows)
    for tag, rows, fo_pad, arr in blocks:
        s = widths.index(fo_pad)
        off = sum(p.shape[0] for p in slab_parts[fo_pad])
        slab_parts[fo_pad].append(arr)
        placement[tag] = (s, off, rows)

    slabs = [jnp.concatenate(slab_parts[wd], axis=0).astype(jnp.bfloat16)
             for wd in widths]

    max_fo = max(_round_up(w.shape[1]) for (w, _) in params)
    bias = jnp.stack([jnp.pad(b, (0, max_fo - b.shape[0])) for (_, b) in params]
                     ).astype(jnp.float32)            # (12, max_fo) f32

    layout = []
    for i, (w, _) in enumerate(params):
        fo_pad = _round_up(w.shape[1])
        if i == 6:
            layout.append(dict(kind="split", fo=fo_pad,
                               top=placement[("top", i)], bot=placement[("bot", i)]))
        else:
            layout.append(dict(kind="dense", fo=fo_pad, w=placement[("w", i)]))
    return slabs, bias, layout


@jax.jit
def gcn_forward(x, edge_index, batch, params):
    # `batch` is unused in the reference forward (no pooling); kept for signature parity.
    del batch
    n, in_dim = x.shape
    out_dim = params[-1][0].shape[1]
    out_pad = _round_up(out_dim)
    # Pad node rows to >=128: fills the MXU M dimension (was 16) and makes the final
    # store fully sublane/lane dense.  Padded rows cannot leak into real rows because
    # A's real rows are zero in the padded columns.
    n_pad = _round_up(n)

    a = build_norm_adj(edge_index, n)
    a_pad = (jnp.zeros((n_pad, n_pad), jnp.float32)
             .at[:n, :n].set(a).astype(jnp.bfloat16))
    x_pad = (jnp.zeros((n_pad, _round_up(in_dim)), jnp.float32)
             .at[:n, :in_dim].set(x).astype(jnp.bfloat16))

    slabs, bias, layout = _pack_params(params)
    kernel = _make_fused_gcn_kernel(layout, len(slabs), len(params))

    vmem = pl.BlockSpec(memory_space=pltpu.MemorySpace.VMEM)
    inputs = [a_pad, x_pad] + slabs + [bias]          # 5 input DMAs total (was 27)

    out = pl.pallas_call(
        kernel,
        out_shape=jax.ShapeDtypeStruct((n_pad, out_pad), jnp.float32),
        in_specs=[vmem] * len(inputs),
        out_specs=vmem,
        # Right-sized VMEM request: ~1.5 MiB live footprint + headroom for the
        # unrolled temporaries.  Never request the full 64 MiB of a v7x core.
        compiler_params=pltpu.CompilerParams(vmem_limit_bytes=16 << 20),
    )(*inputs)
    return out[:n, :out_dim]


def gcn_reference(x, edge_index, params):
    """Pure-JAX f32 reference (high precision) for validation."""
    hp = jax.lax.Precision.HIGHEST
    n = x.shape[0]
    a = build_norm_adj(edge_index, n)
    h = x
    for i, (w, b) in enumerate(params):
        if i == 6:
            h = jnp.concatenate([h, x], axis=1)
        h = jnp.dot(a, jnp.dot(h, w, precision=hp), precision=hp) + b
        if i != len(params) - 1:
            h = jnp.tanh(h)
    return h


# --------------------------------- main -------------------------------------

if __name__ == "__main__":
    IN_DIM = 4
    OUT_DIM = 2
    N_NODES = 16
    N_EDGES = 32

    key = jax.random.PRNGKey(0)
    kx, ke = jax.random.split(key)
    x = jax.random.normal(kx, (N_NODES, IN_DIM), jnp.float32)
    edge_index = jax.random.randint(ke, (2, N_EDGES), 0, N_NODES, jnp.int32)
    batch = jnp.zeros((N_NODES,), jnp.int32)

    params = init_params(IN_DIM, OUT_DIM)

    out = gcn_forward(x, edge_index, batch, params)
    out = jax.block_until_ready(out)
    assert out.shape == (N_NODES, OUT_DIM)

    ref = jax.block_until_ready(gcn_reference(x, edge_index, params))
    assert bool(jnp.all(jnp.isfinite(out)))
    # bf16 weights/activations with f32 accumulation over a 12-layer chain:
    # tolerance loosened vs. the f32-HIGHEST reference per the review note.
    assert bool(jnp.allclose(out, ref, rtol=5e-2, atol=5e-2)), (
        f"max abs err {float(jnp.max(jnp.abs(out - ref)))}")

    print("KERNEL_OK")
</pallas_src>

<mosaic_0001>
module attributes {stable_mosaic.version = 11 : i64} {
  func.func private @main(%arg0: i32) attributes {dimension_semantics = [#tpu.dimension_semantics<core_parallel>], iteration_bounds = array<i64: 2>, tpu.core_type = #tpu.core_type<sc_scalar_subcore>, window_params = []} {
    return
  }
}

module attributes {stable_mosaic.version = 11 : i64} {
  func.func private @main(%arg0: i32) attributes {dimension_semantics = [#tpu.dimension_semantics<core_parallel>], iteration_bounds = array<i64: 2>, tpu.core_type = #tpu.core_type<sc_scalar_subcore>, window_params = []} {
    return
  }
}

module attributes {stable_mosaic.version = 11 : i64} {
  func.func @kernel(%arg0: memref<128x128xbf16, #tpu.memory_space<vmem>>, %arg1: memref<128x128xbf16, #tpu.memory_space<vmem>>, %arg2: memref<1664x128xbf16, #tpu.memory_space<vmem>>, %arg3: memref<128x256xbf16, #tpu.memory_space<vmem>>, %arg4: memref<12x256xf32, #tpu.memory_space<vmem>>, %arg5: memref<128x128xf32, #tpu.memory_space<vmem>>) attributes {dimension_semantics = [], scalar_prefetch = 0 : i64, scratch_operands = 0 : i64, tpu.core_type = #tpu.core_type<tc>} {
    %c0 = arith.constant 0 : index
    %c0_0 = arith.constant 0 : index
    %0 = vector.load %arg0[%c0, %c0_0] : memref<128x128xbf16, #tpu.memory_space<vmem>>, vector<128x128xbf16>
    %c0_1 = arith.constant 0 : index
    %c0_2 = arith.constant 0 : index
    %1 = vector.load %arg1[%c0_1, %c0_2] : memref<128x128xbf16, #tpu.memory_space<vmem>>, vector<128x128xbf16>
    %c0_3 = arith.constant 0 : index
    %c0_4 = arith.constant 0 : index
    %2 = vector.load %arg2[%c0_3, %c0_4] : memref<1664x128xbf16, #tpu.memory_space<vmem>>, vector<128x128xbf16>
    %cst = arith.constant dense<0.000000e+00> : vector<128x128xf32>
    %3 = tpu.matmul %1, %2, %cst {dimension_numbers = #tpu.dot_dimension_numbers<[1], [0], [0], [1], [0, 0, 1, 1], [], []>} : vector<128x128xbf16>, vector<128x128xbf16>, vector<128x128xf32> -> vector<128x128xf32>
    %4 = arith.truncf %3 : vector<128x128xf32> to vector<128x128xbf16>
    %cst_5 = arith.constant dense<0.000000e+00> : vector<128x128xf32>
    %5 = tpu.matmul %0, %4, %cst_5 {dimension_numbers = #tpu.dot_dimension_numbers<[1], [0], [0], [1], [0, 0, 1, 1], [], []>} : vector<128x128xbf16>, vector<128x128xbf16>, vector<128x128xf32> -> vector<128x128xf32>
    %c0_6 = arith.constant 0 : index
    %c0_7 = arith.constant 0 : index
    %6 = vector.load %arg4[%c0_6, %c0_7] : memref<12x256xf32, #tpu.memory_space<vmem>>, vector<1x128xf32>
    %7 = vector.broadcast %6 : vector<1x128xf32> to vector<128x128xf32>
    %8 = arith.addf %5, %7 : vector<128x128xf32>
    %9 = math.tanh %8 : vector<128x128xf32>
    %10 = arith.truncf %9 : vector<128x128xf32> to vector<128x128xbf16>
    %c128 = arith.constant 128 : index
    %c0_8 = arith.constant 0 : index
    %11 = vector.load %arg2[%c128, %c0_8] : memref<1664x128xbf16, #tpu.memory_space<vmem>>, vector<128x128xbf16>
    %cst_9 = arith.constant dense<0.000000e+00> : vector<128x128xf32>
    %12 = tpu.matmul %10, %11, %cst_9 {dimension_numbers = #tpu.dot_dimension_numbers<[1], [0], [0], [1], [0, 0, 1, 1], [], []>} : vector<128x128xbf16>, vector<128x128xbf16>, vector<128x128xf32> -> vector<128x128xf32>
    %13 = arith.truncf %12 : vector<128x128xf32> to vector<128x128xbf16>
    %cst_10 = arith.constant dense<0.000000e+00> : vector<128x128xf32>
    %14 = tpu.matmul %0, %13, %cst_10 {dimension_numbers = #tpu.dot_dimension_numbers<[1], [0], [0], [1], [0, 0, 1, 1], [], []>} : vector<128x128xbf16>, vector<128x128xbf16>, vector<128x128xf32> -> vector<128x128xf32>
    %c1 = arith.constant 1 : index
    %c0_11 = arith.constant 0 : index
    %15 = vector.load %arg4[%c1, %c0_11] : memref<12x256xf32, #tpu.memory_space<vmem>>, vector<1x128xf32>
    %16 = vector.broadcast %15 : vector<1x128xf32> to vector<128x128xf32>
    %17 = arith.addf %14, %16 : vector<128x128xf32>
    %18 = math.tanh %17 : vector<128x128xf32>
    %19 = arith.truncf %18 : vector<128x128xf32> to vector<128x128xbf16>
    %c256 = arith.constant 256 : index
    %c0_12 = arith.constant 0 : index
    %20 = vector.load %arg2[%c256, %c0_12] : memref<1664x128xbf16, #tpu.memory_space<vmem>>, vector<128x128xbf16>
    %cst_13 = arith.constant dense<0.000000e+00> : vector<128x128xf32>
    %21 = tpu.matmul %19, %20, %cst_13 {dimension_numbers = #tpu.dot_dimension_numbers<[1], [0], [0], [1], [0, 0, 1, 1], [], []>} : vector<128x128xbf16>, vector<128x128xbf16>, vector<128x128xf32> -> vector<128x128xf32>
    %22 = arith.truncf %21 : vector<128x128xf32> to vector<128x128xbf16>
    %cst_14 = arith.constant dense<0.000000e+00> : vector<128x128xf32>
    %23 = tpu.matmul %0, %22, %cst_14 {dimension_numbers = #tpu.dot_dimension_numbers<[1], [0], [0], [1], [0, 0, 1, 1], [], []>} : vector<128x128xbf16>, vector<128x128xbf16>, vector<128x128xf32> -> vector<128x128xf32>
    %c2 = arith.constant 2 : index
    %c0_15 = arith.constant 0 : index
    %24 = vector.load %arg4[%c2, %c0_15] : memref<12x256xf32, #tpu.memory_space<vmem>>, vector<1x128xf32>
    %25 = vector.broadcast %24 : vector<1x128xf32> to vector<128x128xf32>
    %26 = arith.addf %23, %25 : vector<128x128xf32>
    %27 = math.tanh %26 : vector<128x128xf32>
    %28 = arith.truncf %27 : vector<128x128xf32> to vector<128x128xbf16>
    %c384 = arith.constant 384 : index
    %c0_16 = arith.constant 0 : index
    %29 = vector.load %arg2[%c384, %c0_16] : memref<1664x128xbf16, #tpu.memory_space<vmem>>, vector<128x128xbf16>
    %cst_17 = arith.constant dense<0.000000e+00> : vector<128x128xf32>
    %30 = tpu.matmul %28, %29, %cst_17 {dimension_numbers = #tpu.dot_dimension_numbers<[1], [0], [0], [1], [0, 0, 1, 1], [], []>} : vector<128x128xbf16>, vector<128x128xbf16>, vector<128x128xf32> -> vector<128x128xf32>
    %31 = arith.truncf %30 : vector<128x128xf32> to vector<128x128xbf16>
    %cst_18 = arith.constant dense<0.000000e+00> : vector<128x128xf32>
    %32 = tpu.matmul %0, %31, %cst_18 {dimension_numbers = #tpu.dot_dimension_numbers<[1], [0], [0], [1], [0, 0, 1, 1], [], []>} : vector<128x128xbf16>, vector<128x128xbf16>, vector<128x128xf32> -> vector<128x128xf32>
    %c3 = arith.constant 3 : index
    %c0_19 = arith.constant 0 : index
    %33 = vector.load %arg4[%c3, %c0_19] : memref<12x256xf32, #tpu.memory_space<vmem>>, vector<1x128xf32>
    %34 = vector.broadcast %33 : vector<1x128xf32> to vector<128x128xf32>
    %35 = arith.addf %32, %34 : vector<128x128xf32>
    %36 = math.tanh %35 : vector<128x128xf32>
    %37 = arith.truncf %36 : vector<128x128xf32> to vector<128x128xbf16>
    %c512 = arith.constant 512 : index
    %c0_20 = arith.constant 0 : index
    %38 = vector.load %arg2[%c512, %c0_20] : memref<1664x128xbf16, #tpu.memory_space<vmem>>, vector<128x128xbf16>
    %cst_21 = arith.constant dense<0.000000e+00> : vector<128x128xf32>
    %39 = tpu.matmul %37, %38, %cst_21 {dimension_numbers = #tpu.dot_dimension_numbers<[1], [0], [0], [1], [0, 0, 1, 1], [], []>} : vector<128x128xbf16>, vector<128x128xbf16>, vector<128x128xf32> -> vector<128x128xf32>
    %40 = arith.truncf %39 : vector<128x128xf32> to vector<128x128xbf16>
    %cst_22 = arith.constant dense<0.000000e+00> : vector<128x128xf32>
    %41 = tpu.matmul %0, %40, %cst_22 {dimension_numbers = #tpu.dot_dimension_numbers<[1], [0], [0], [1], [0, 0, 1, 1], [], []>} : vector<128x128xbf16>, vector<128x128xbf16>, vector<128x128xf32> -> vector<128x128xf32>
    %c4 = arith.constant 4 : index
    %c0_23 = arith.constant 0 : index
    %42 = vector.load %arg4[%c4, %c0_23] : memref<12x256xf32, #tpu.memory_space<vmem>>, vector<1x128xf32>
    %43 = vector.broadcast %42 : vector<1x128xf32> to vector<128x128xf32>
    %44 = arith.addf %41, %43 : vector<128x128xf32>
    %45 = math.tanh %44 : vector<128x128xf32>
    %46 = arith.truncf %45 : vector<128x128xf32> to vector<128x128xbf16>
    %c0_24 = arith.constant 0 : index
    %c0_25 = arith.constant 0 : index
    %47 = vector.load %arg3[%c0_24, %c0_25] : memref<128x256xbf16, #tpu.memory_space<vmem>>, vector<128x256xbf16>
    %cst_26 = arith.constant dense<0.000000e+00> : vector<128x128xf32>
    %48 = tpu.matmul %0, %46, %cst_26 {dimension_numbers = #tpu.dot_dimension_numbers<[1], [0], [0], [1], [0, 0, 1, 1], [], []>} : vector<128x128xbf16>, vector<128x128xbf16>, vector<128x128xf32> -> vector<128x128xf32>
    %49 = arith.truncf %48 : vector<128x128xf32> to vector<128x128xbf16>
    %cst_27 = arith.constant dense<0.000000e+00> : vector<128x256xf32>
    %50 = tpu.matmul %49, %47, %cst_27 {dimension_numbers = #tpu.dot_dimension_numbers<[1], [0], [0], [1], [0, 0, 1, 1], [], []>} : vector<128x128xbf16>, vector<128x256xbf16>, vector<128x256xf32> -> vector<128x256xf32>
    %c5 = arith.constant 5 : index
    %c0_28 = arith.constant 0 : index
    %51 = vector.load %arg4[%c5, %c0_28] : memref<12x256xf32, #tpu.memory_space<vmem>>, vector<1x256xf32>
    %52 = vector.broadcast %51 : vector<1x256xf32> to vector<128x256xf32>
    %53 = arith.addf %50, %52 : vector<128x256xf32>
    %54 = math.tanh %53 : vector<128x256xf32>
    %55 = arith.truncf %54 : vector<128x256xf32> to vector<128x256xbf16>
    %c640 = arith.constant 640 : index
    %c0_29 = arith.constant 0 : index
    %56 = vector.load %arg2[%c640, %c0_29] : memref<1664x128xbf16, #tpu.memory_space<vmem>>, vector<256x128xbf16>
    %c896 = arith.constant 896 : index
    %c0_30 = arith.constant 0 : index
    %57 = vector.load %arg2[%c896, %c0_30] : memref<1664x128xbf16, #tpu.memory_space<vmem>>, vector<128x128xbf16>
    %cst_31 = arith.constant dense<0.000000e+00> : vector<128x128xf32>
    %58 = tpu.matmul %55, %56, %cst_31 {dimension_numbers = #tpu.dot_dimension_numbers<[1], [0], [0], [1], [0, 0, 1, 1], [], []>} : vector<128x256xbf16>, vector<256x128xbf16>, vector<128x128xf32> -> vector<128x128xf32>
    %cst_32 = arith.constant dense<0.000000e+00> : vector<128x128xf32>
    %59 = tpu.matmul %1, %57, %cst_32 {dimension_numbers = #tpu.dot_dimension_numbers<[1], [0], [0], [1], [0, 0, 1, 1], [], []>} : vector<128x128xbf16>, vector<128x128xbf16>, vector<128x128xf32> -> vector<128x128xf32>
    %60 = arith.addf %58, %59 : vector<128x128xf32>
    %61 = arith.truncf %60 : vector<128x128xf32> to vector<128x128xbf16>
    %cst_33 = arith.constant dense<0.000000e+00> : vector<128x128xf32>
    %62 = tpu.matmul %0, %61, %cst_33 {dimension_numbers = #tpu.dot_dimension_numbers<[1], [0], [0], [1], [0, 0, 1, 1], [], []>} : vector<128x128xbf16>, vector<128x128xbf16>, vector<128x128xf32> -> vector<128x128xf32>
    %c6 = arith.constant 6 : index
    %c0_34 = arith.constant 0 : index
    %63 = vector.load %arg4[%c6, %c0_34] : memref<12x256xf32, #tpu.memory_space<vmem>>, vector<1x128xf32>
    %64 = vector.broadcast %63 : vector<1x128xf32> to vector<128x128xf32>
    %65 = arith.addf %62, %64 : vector<128x128xf32>
    %66 = math.tanh %65 : vector<128x128xf32>
    %67 = arith.truncf %66 : vector<128x128xf32> to vector<128x128xbf16>
    %c1024 = arith.constant 1024 : index
    %c0_35 = arith.constant 0 : index
    %68 = vector.load %arg2[%c1024, %c0_35] : memref<1664x128xbf16, #tpu.memory_space<vmem>>, vector<128x128xbf16>
    %cst_36 = arith.constant dense<0.000000e+00> : vector<128x128xf32>
    %69 = tpu.matmul %67, %68, %cst_36 {dimension_numbers = #tpu.dot_dimension_numbers<[1], [0], [0], [1], [0, 0, 1, 1], [], []>} : vector<128x128xbf16>, vector<128x128xbf16>, vector<128x128xf32> -> vector<128x128xf32>
    %70 = arith.truncf %69 : vector<128x128xf32> to vector<128x128xbf16>
    %cst_37 = arith.constant dense<0.000000e+00> : vector<128x128xf32>
    %71 = tpu.matmul %0, %70, %cst_37 {dimension_numbers = #tpu.dot_dimension_numbers<[1], [0], [0], [1], [0, 0, 1, 1], [], []>} : vector<128x128xbf16>, vector<128x128xbf16>, vector<128x128xf32> -> vector<128x128xf32>
    %c7 = arith.constant 7 : index
    %c0_38 = arith.constant 0 : index
    %72 = vector.load %arg4[%c7, %c0_38] : memref<12x256xf32, #tpu.memory_space<vmem>>, vector<1x128xf32>
    %73 = vector.broadcast %72 : vector<1x128xf32> to vector<128x128xf32>
    %74 = arith.addf %71, %73 : vector<128x128xf32>
    %75 = math.tanh %74 : vector<128x128xf32>
    %76 = arith.truncf %75 : vector<128x128xf32> to vector<128x128xbf16>
    %c1152 = arith.constant 1152 : index
    %c0_39 = arith.constant 0 : index
    %77 = vector.load %arg2[%c1152, %c0_39] : memref<1664x128xbf16, #tpu.memory_space<vmem>>, vector<128x128xbf16>
    %cst_40 = arith.constant dense<0.000000e+00> : vector<128x128xf32>
    %78 = tpu.matmul %76, %77, %cst_40 {dimension_numbers = #tpu.dot_dimension_numbers<[1], [0], [0], [1], [0, 0, 1, 1], [], []>} : vector<128x128xbf16>, vector<128x128xbf16>, vector<128x128xf32> -> vector<128x128xf32>
    %79 = arith.truncf %78 : vector<128x128xf32> to vector<128x128xbf16>
    %cst_41 = arith.constant dense<0.000000e+00> : vector<128x128xf32>
    %80 = tpu.matmul %0, %79, %cst_41 {dimension_numbers = #tpu.dot_dimension_numbers<[1], [0], [0], [1], [0, 0, 1, 1], [], []>} : vector<128x128xbf16>, vector<128x128xbf16>, vector<128x128xf32> -> vector<128x128xf32>
    %c8 = arith.constant 8 : index
    %c0_42 = arith.constant 0 : index
    %81 = vector.load %arg4[%c8, %c0_42] : memref<12x256xf32, #tpu.memory_space<vmem>>, vector<1x128xf32>
    %82 = vector.broadcast %81 : vector<1x128xf32> to vector<128x128xf32>
    %83 = arith.addf %80, %82 : vector<128x128xf32>
    %84 = math.tanh %83 : vector<128x128xf32>
    %85 = arith.truncf %84 : vector<128x128xf32> to vector<128x128xbf16>
    %c1280 = arith.constant 1280 : index
    %c0_43 = arith.constant 0 : index
    %86 = vector.load %arg2[%c1280, %c0_43] : memref<1664x128xbf16, #tpu.memory_space<vmem>>, vector<128x128xbf16>
    %cst_44 = arith.constant dense<0.000000e+00> : vector<128x128xf32>
    %87 = tpu.matmul %85, %86, %cst_44 {dimension_numbers = #tpu.dot_dimension_numbers<[1], [0], [0], [1], [0, 0, 1, 1], [], []>} : vector<128x128xbf16>, vector<128x128xbf16>, vector<128x128xf32> -> vector<128x128xf32>
    %88 = arith.truncf %87 : vector<128x128xf32> to vector<128x128xbf16>
    %cst_45 = arith.constant dense<0.000000e+00> : vector<128x128xf32>
    %89 = tpu.matmul %0, %88, %cst_45 {dimension_numbers = #tpu.dot_dimension_numbers<[1], [0], [0], [1], [0, 0, 1, 1], [], []>} : vector<128x128xbf16>, vector<128x128xbf16>, vector<128x128xf32> -> vector<128x128xf32>
    %c9 = arith.constant 9 : index
    %c0_46 = arith.constant 0 : index
    %90 = vector.load %arg4[%c9, %c0_46] : memref<12x256xf32, #tpu.memory_space<vmem>>, vector<1x128xf32>
    %91 = vector.broadcast %90 : vector<1x128xf32> to vector<128x128xf32>
    %92 = arith.addf %89, %91 : vector<128x128xf32>
    %93 = math.tanh %92 : vector<128x128xf32>
    %94 = arith.truncf %93 : vector<128x128xf32> to vector<128x128xbf16>
    %c1408 = arith.constant 1408 : index
    %c0_47 = arith.constant 0 : index
    %95 = vector.load %arg2[%c1408, %c0_47] : memref<1664x128xbf16, #tpu.memory_space<vmem>>, vector<128x128xbf16>
    %cst_48 = arith.constant dense<0.000000e+00> : vector<128x128xf32>
    %96 = tpu.matmul %94, %95, %cst_48 {dimension_numbers = #tpu.dot_dimension_numbers<[1], [0], [0], [1], [0, 0, 1, 1], [], []>} : vector<128x128xbf16>, vector<128x128xbf16>, vector<128x128xf32> -> vector<128x128xf32>
    %97 = arith.truncf %96 : vector<128x128xf32> to vector<128x128xbf16>
    %cst_49 = arith.constant dense<0.000000e+00> : vector<128x128xf32>
    %98 = tpu.matmul %0, %97, %cst_49 {dimension_numbers = #tpu.dot_dimension_numbers<[1], [0], [0], [1], [0, 0, 1, 1], [], []>} : vector<128x128xbf16>, vector<128x128xbf16>, vector<128x128xf32> -> vector<128x128xf32>
    %c10 = arith.constant 10 : index
    %c0_50 = arith.constant 0 : index
    %99 = vector.load %arg4[%c10, %c0_50] : memref<12x256xf32, #tpu.memory_space<vmem>>, vector<1x128xf32>
    %100 = vector.broadcast %99 : vector<1x128xf32> to vector<128x128xf32>
    %101 = arith.addf %98, %100 : vector<128x128xf32>
    %102 = math.tanh %101 : vector<128x128xf32>
    %103 = arith.truncf %102 : vector<128x128xf32> to vector<128x128xbf16>
    %c1536 = arith.constant 1536 : index
    %c0_51 = arith.constant 0 : index
    %104 = vector.load %arg2[%c1536, %c0_51] : memref<1664x128xbf16, #tpu.memory_space<vmem>>, vector<128x128xbf16>
    %cst_52 = arith.constant dense<0.000000e+00> : vector<128x128xf32>
    %105 = tpu.matmul %103, %104, %cst_52 {dimension_numbers = #tpu.dot_dimension_numbers<[1], [0], [0], [1], [0, 0, 1, 1], [], []>} : vector<128x128xbf16>, vector<128x128xbf16>, vector<128x128xf32> -> vector<128x128xf32>
    %106 = arith.truncf %105 : vector<128x128xf32> to vector<128x128xbf16>
    %cst_53 = arith.constant dense<0.000000e+00> : vector<128x128xf32>
    %107 = tpu.matmul %0, %106, %cst_53 {dimension_numbers = #tpu.dot_dimension_numbers<[1], [0], [0], [1], [0, 0, 1, 1], [], []>} : vector<128x128xbf16>, vector<128x128xbf16>, vector<128x128xf32> -> vector<128x128xf32>
    %c11 = arith.constant 11 : index
    %c0_54 = arith.constant 0 : index
    %108 = vector.load %arg4[%c11, %c0_54] : memref<12x256xf32, #tpu.memory_space<vmem>>, vector<1x128xf32>
    %109 = vector.broadcast %108 : vector<1x128xf32> to vector<128x128xf32>
    %110 = arith.addf %107, %109 : vector<128x128xf32>
    %c0_55 = arith.constant 0 : index
    %c0_56 = arith.constant 0 : index
    %111 = vector.load %arg5[%c0_55, %c0_56] : memref<128x128xf32, #tpu.memory_space<vmem>>, vector<128x128xf32>
    tpu.vector_store %arg5[%c0_55, %c0_56], %110 {strides = array<i32>} : memref<128x128xf32, #tpu.memory_space<vmem>>, vector<128x128xf32>,
    return
  }
}

</mosaic_0001>

<llo_original>
// kernel: gcn_forward.1
$region0: #{gcn_forward.1}
  #allocation0 [shape = 'u32[]', space=smem, size = 0x4, offset = 0x4, fixed_abs, tag = 'smem constant byte address 0x4 - core index']
  #allocation1 [shape = 'u32[144,128]{1,0:T(1,128)}', space=vmem, size = 0x12000, scoped, tag = 'internal scratch']
  %s0 = inlined_call_operand.vmem [shape: bf16[128,128], index: 0, kind: input, shape index: {}]
  %s1 = inlined_call_operand.vmem [shape: bf16[128,128], index: 1, kind: input, shape index: {}]
  %s2 = inlined_call_operand.vmem [shape: bf16[1664,128], index: 2, kind: input, shape index: {}]
  %s3 = inlined_call_operand.vmem [shape: bf16[128,256], index: 3, kind: input, shape index: {}]
  %s4 = inlined_call_operand.vmem [shape: f32[12,256], index: 4, kind: input, shape index: {}]
  %s5 = inlined_call_operand.vmem [shape: f32[128,128], index: 5, kind: output, shape index: {}]
  %s6 = sld [smem:[#allocation0]]
  $region30: #{gcn_forward.1} parent=0
    _
  %s8 = ssub.s32 1, %s6
  %s9 = scalar_select 0, %s8, %s6
  // Predicated region
  $region2: #{gcn_forward.1} parent=0 // pred_check
    _
  $region3: #{gcn_forward.1} parent=0 // pred_check_branch
    %11 = sbr.rel (0) target = $region5
  $region4: #{gcn_forward.1} parent=0 // pred_region
    _
  $region5: #{gcn_forward.1} parent=0 // pred_fallthru
    _
  // Predicated region
  $region6: #{gcn_forward.1} parent=0 // pred_check
    _
  $region7: #{gcn_forward.1} parent=0 // pred_check_branch
    %13 = sbr.rel (0) target = $region9
  $region8: #{gcn_forward.1} parent=0 // pred_region
    _
  $region9: #{gcn_forward.1} parent=0 // pred_fallthru
    _
  // Predicated region
  $region10: #{gcn_forward.1} parent=0 // pred_check
    _
  $region11: #{gcn_forward.1} parent=0 // pred_check_branch
    %15 = sbr.rel (0) target = $region13
  $region12: #{gcn_forward.1} parent=0 // pred_region
    _
  $region13: #{gcn_forward.1} parent=0 // pred_fallthru
    _
  // Predicated region
  $region14: #{gcn_forward.1} parent=0 // pred_check
    _
  $region15: #{gcn_forward.1} parent=0 // pred_check_branch
    %17 = sbr.rel (0) target = $region17
  $region16: #{gcn_forward.1} parent=0 // pred_region
    _
  $region17: #{gcn_forward.1} parent=0 // pred_fallthru
    _
  // Predicated region
  $region18: #{gcn_forward.1} parent=0 // pred_check
    _
  $region19: #{gcn_forward.1} parent=0 // pred_check_branch
    %19 = sbr.rel (0) target = $region21
  $region20: #{gcn_forward.1} parent=0 // pred_region
    _
  $region21: #{gcn_forward.1} parent=0 // pred_fallthru
    _
  %v21 = vld [vmem:[%s0] sm:$0xf]
  %v22 = vld [vmem:[%s0 + $0x4] sm:$0xf]
  %v23 = vld [vmem:[%s0 + $0x8] sm:$0xf]
  %v24 = vld [vmem:[%s0 + $0xc] sm:$0xf]
  %v25 = vld [vmem:[%s0 + $0x10] sm:$0xf]
  %v26 = vld [vmem:[%s0 + $0x14] sm:$0xf]
  %v27 = vld [vmem:[%s0 + $0x18] sm:$0xf]
  %v28 = vld [vmem:[%s0 + $0x1c] sm:$0xf]
  %v29 = vld [vmem:[%s0 + $0x20] sm:$0xf]
  %v30 = vld [vmem:[%s0 + $0x24] sm:$0xf]
  %v31 = vld [vmem:[%s0 + $0x28] sm:$0xf]
  %v32 = vld [vmem:[%s0 + $0x2c] sm:$0xf]
  %v33 = vld [vmem:[%s0 + $0x30] sm:$0xf]
  %v34 = vld [vmem:[%s0 + $0x34] sm:$0xf]
  %v35 = vld [vmem:[%s0 + $0x38] sm:$0xf]
  %v36 = vld [vmem:[%s0 + $0x3c] sm:$0xf]
  %v37 = vld [vmem:[%s1] sm:$0xf]
  %v38 = vld [vmem:[%s1 + $0x4] sm:$0xf]
  %v39 = vld [vmem:[%s1 + $0x8] sm:$0xf]
  %v40 = vld [vmem:[%s1 + $0xc] sm:$0xf]
  %v41 = vld [vmem:[%s1 + $0x10] sm:$0xf]
  %v42 = vld [vmem:[%s1 + $0x14] sm:$0xf]
  %v43 = vld [vmem:[%s1 + $0x18] sm:$0xf]
  %v44 = vld [vmem:[%s1 + $0x1c] sm:$0xf]
  %v45 = vld [vmem:[%s1 + $0x20] sm:$0xf]
  %v46 = vld [vmem:[%s1 + $0x24] sm:$0xf]
  %v47 = vld [vmem:[%s1 + $0x28] sm:$0xf]
  %v48 = vld [vmem:[%s1 + $0x2c] sm:$0xf]
  %v49 = vld [vmem:[%s1 + $0x30] sm:$0xf]
  %v50 = vld [vmem:[%s1 + $0x34] sm:$0xf]
  %v51 = vld [vmem:[%s1 + $0x38] sm:$0xf]
  %v52 = vld [vmem:[%s1 + $0x3c] sm:$0xf]
  %v53 = vld [vmem:[%s2] sm:$0xf]
  %v54 = vld [vmem:[%s2 + $0x4] sm:$0xf]
  %v55 = vld [vmem:[%s2 + $0x8] sm:$0xf]
  %v56 = vld [vmem:[%s2 + $0xc] sm:$0xf]
  %v57 = vld [vmem:[%s2 + $0x10] sm:$0xf]
  %v58 = vld [vmem:[%s2 + $0x14] sm:$0xf]
  %v59 = vld [vmem:[%s2 + $0x18] sm:$0xf]
  %v60 = vld [vmem:[%s2 + $0x1c] sm:$0xf]
  %v61 = vld [vmem:[%s2 + $0x20] sm:$0xf]
  %v62 = vld [vmem:[%s2 + $0x24] sm:$0xf]
  %v63 = vld [vmem:[%s2 + $0x28] sm:$0xf]
  %v64 = vld [vmem:[%s2 + $0x2c] sm:$0xf]
  %v65 = vld [vmem:[%s2 + $0x30] sm:$0xf]
  %v66 = vld [vmem:[%s2 + $0x34] sm:$0xf]
  %v67 = vld [vmem:[%s2 + $0x38] sm:$0xf]
  %v68 = vld [vmem:[%s2 + $0x3c] sm:$0xf]
  %v85 = vunpack.c.l.b16 %v37
  %v86 = vunpack.c.l.b16 %v38
  %v87 = vunpack.c.l.b16 %v39
  %v88 = vunpack.c.l.b16 %v40
  %v89 = vunpack.c.l.b16 %v41
  %v90 = vunpack.c.l.b16 %v42
  %v91 = vunpack.c.l.b16 %v43
  %v92 = vunpack.c.l.b16 %v44
  %v93 = vunpack.c.l.b16 %v45
  %v94 = vunpack.c.l.b16 %v46
  %v95 = vunpack.c.l.b16 %v47
  %v96 = vunpack.c.l.b16 %v48
  %v97 = vunpack.c.l.b16 %v49
  %v98 = vunpack.c.l.b16 %v50
  %v99 = vunpack.c.l.b16 %v51
  %v100 = vunpack.c.l.b16 %v52
  %v101 = vpack.c.b16 %v86, %v85
  %v102 = vpack.c.b16 %v88, %v87
  %v103 = vpack.c.b16 %v90, %v89
  %v104 = vpack.c.b16 %v92, %v91
  %v105 = vpack.c.b16 %v94, %v93
  %v106 = vpack.c.b16 %v96, %v95
  %v107 = vpack.c.b16 %v98, %v97
  %v108 = vpack.c.b16 %v100, %v99
  %v133 = vunpack.c.l.b16 %v53
  %v134 = vunpack.c.l.b16 %v54
  %v135 = vunpack.c.l.b16 %v55
  %v136 = vunpack.c.l.b16 %v56
  %v137 = vunpack.c.l.b16 %v57
  %v138 = vunpack.c.l.b16 %v58
  %v139 = vunpack.c.l.b16 %v59
  %v140 = vunpack.c.l.b16 %v60
  %v141 = vunpack.c.l.b16 %v61
  %v142 = vunpack.c.l.b16 %v62
  %v143 = vunpack.c.l.b16 %v63
  %v144 = vunpack.c.l.b16 %v64
  %v145 = vunpack.c.l.b16 %v65
  %v146 = vunpack.c.l.b16 %v66
  %v147 = vunpack.c.l.b16 %v67
  %v148 = vunpack.c.l.b16 %v68
  %v149 = vpack.c.b16 %v134, %v133
  %v150 = vpack.c.b16 %v136, %v135
  %v151 = vpack.c.b16 %v138, %v137
  %v152 = vpack.c.b16 %v140, %v139
  %v153 = vpack.c.b16 %v142, %v141
  %v154 = vpack.c.b16 %v144, %v143
  %v155 = vpack.c.b16 %v146, %v145
  %v156 = vpack.c.b16 %v148, %v147
  %165 = vmatprep.subr.bf16.mxu0 0
  %166 = vmatpush1.bf16.msra.mxu0 %v149
  %167 = vmatprep.subr.bf16.mxu0 0
  %168 = vmatpush1.bf16.msra.mxu0 %v150
  %169 = vmatprep.subr.bf16.mxu0 0
  %170 = vmatpush1.bf16.msra.mxu0 %v151
  %171 = vmatprep.subr.bf16.mxu0 0
  %172 = vmatpush1.bf16.msra.mxu0 %v152
  %173 = vmatprep.subr.bf16.mxu0 0
  %174 = vmatpush1.bf16.msra.mxu0 %v153
  %175 = vmatprep.subr.bf16.mxu0 0
  %176 = vmatpush1.bf16.msra.mxu0 %v154
  %177 = vmatprep.subr.bf16.mxu0 0
  %178 = vmatpush1.bf16.msra.mxu0 %v155
  %179 = vmatprep.subr.bf16.mxu0 0
  %180 = vmatpush1.bf16.msra.mxu0 %v156
  %181 = vmatprep.subr.bf16.mxu0 0
  %182 = vmatpush1.bf16.msra.mxu0 0
  %183 = vmatprep.subr.bf16.mxu0 0
  %184 = vmatpush1.bf16.msra.mxu0 0
  %185 = vmatprep.subr.bf16.mxu0 0
  %186 = vmatpush1.bf16.msra.mxu0 0
  %187 = vmatprep.subr.bf16.mxu0 0
  %188 = vmatpush1.bf16.msra.mxu0 0
  %189 = vmatprep.subr.bf16.mxu0 0
  %190 = vmatpush1.bf16.msra.mxu0 0
  %191 = vmatprep.subr.bf16.mxu0 0
  %192 = vmatpush1.bf16.msra.mxu0 0
  %193 = vmatprep.subr.bf16.mxu0 0
  %194 = vmatpush1.bf16.msra.mxu0 0
  %195 = vmatprep.subr.bf16.mxu0 0
  %196 = vmatpush1.bf16.msra.mxu0 0
  %197 = vmatprep.mubr.bf16.mxu0 0
  %198 = vmatmul.mubr.bf16.gmra.mrb[0].mxu0 %v101
  %v199 = vpop.f32.mrb[0].mxu0
  %v200 = vadd.f32 0.0, %v199
  %v201 = vpop.f32.mrb[0].mxu0
  %v202 = vpop.f32.mrb[0].mxu0
  %v203 = vadd.f32 0.0, %v202
  %v204 = vpop.f32.mrb[0].mxu0
  %205 = vmatprep.mubr.bf16.mxu0 0
  %206 = vmatmul.mubr.bf16.gmra.mrb[0].mxu0 %v102
  %v207 = vpop.f32.mrb[0].mxu0
  %v208 = vadd.f32 0.0, %v207
  %v209 = vpop.f32.mrb[0].mxu0
  %v210 = vpop.f32.mrb[0].mxu0
  %v211 = vadd.f32 0.0, %v210
  %v212 = vpop.f32.mrb[0].mxu0
  %213 = vmatprep.mubr.bf16.mxu0 0
  %214 = vmatmul.mubr.bf16.gmra.mrb[0].mxu0 %v103
  %v215 = vpop.f32.mrb[0].mxu0
  %v216 = vadd.f32 0.0, %v215
  %v217 = vpop.f32.mrb[0].mxu0
  %v218 = vpop.f32.mrb[0].mxu0
  %v219 = vadd.f32 0.0, %v218
  %v220 = vpop.f32.mrb[0].mxu0
  %221 = vmatprep.mubr.bf16.mxu0 0
  %222 = vmatmul.mubr.bf16.gmra.mrb[0].mxu0 %v104
  %v223 = vpop.f32.mrb[0].mxu0
  %v224 = vadd.f32 0.0, %v223
  %v225 = vpop.f32.mrb[0].mxu0
  %v226 = vpop.f32.mrb[0].mxu0
  %v227 = vadd.f32 0.0, %v226
  %v228 = vpop.f32.mrb[0].mxu0
  %229 = vmatprep.mubr.bf16.mxu0 0
  %230 = vmatmul.mubr.bf16.gmra.mrb[0].mxu0 %v105
  %v231 = vpop.f32.mrb[0].mxu0
  %v232 = vadd.f32 0.0, %v231
  %v233 = vpop.f32.mrb[0].mxu0
  %v234 = vpop.f32.mrb[0].mxu0
  %v235 = vadd.f32 0.0, %v234
  %v236 = vpop.f32.mrb[0].mxu0
  %237 = vmatprep.mubr.bf16.mxu0 0
  %238 = vmatmul.mubr.bf16.gmra.mrb[0].mxu0 %v106
  %v239 = vpop.f32.mrb[0].mxu0
  %v240 = vadd.f32 0.0, %v239
  %v241 = vpop.f32.mrb[0].mxu0
  %v242 = vpop.f32.mrb[0].mxu0
  %v243 = vadd.f32 0.0, %v242
  %v244 = vpop.f32.mrb[0].mxu0
  %245 = vmatprep.mubr.bf16.mxu0 0
  %246 = vmatmul.mubr.bf16.gmra.mrb[0].mxu0 %v107
  %v247 = vpop.f32.mrb[0].mxu0
  %v248 = vadd.f32 0.0, %v247
  %v249 = vpop.f32.mrb[0].mxu0
  %v250 = vpop.f32.mrb[0].mxu0
  %v251 = vadd.f32 0.0, %v250
  %v252 = vpop.f32.mrb[0].mxu0
  %253 = vmatprep.mubr.bf16.mxu0 0
  %254 = vmatmul.mubr.bf16.gmra.mrb[0].mxu0 %v108
  %v255 = vpop.f32.mrb[0].mxu0
  %v256 = vadd.f32 0.0, %v255
  %v257 = vpop.f32.mrb[0].mxu0
  %v258 = vpop.f32.mrb[0].mxu0
  %v259 = vadd.f32 0.0, %v258
  %v260 = vpop.f32.mrb[0].mxu0
  %261 = vdwg.mxu0
  %v262 = vpack.c.bf16 %v203, %v200
  %v263 = vpack.c.bf16 %v211, %v208
  %v264 = vpack.c.bf16 %v219, %v216
  %v265 = vpack.c.bf16 %v227, %v224
  %v266 = vpack.c.bf16 %v235, %v232
  %v267 = vpack.c.bf16 %v243, %v240
  %v268 = vpack.c.bf16 %v251, %v248
  %v269 = vpack.c.bf16 %v259, %v256
  %v270 = vld [vmem:[%s4] ss:$0 sm:$0xff]
  %v287 = vunpack.c.l.b16 %v21
  %v288 = vunpack.c.l.b16 %v22
  %v289 = vunpack.c.l.b16 %v23
  %v290 = vunpack.c.l.b16 %v24
  %v291 = vunpack.c.l.b16 %v25
  %v292 = vunpack.c.l.b16 %v26
  %v293 = vunpack.c.l.b16 %v27
  %v294 = vunpack.c.l.b16 %v28
  %v295 = vunpack.c.l.b16 %v29
  %v296 = vunpack.c.l.b16 %v30
  %v297 = vunpack.c.l.b16 %v31
  %v298 = vunpack.c.l.b16 %v32
  %v299 = vunpack.c.l.b16 %v33
  %v300 = vunpack.c.l.b16 %v34
  %v301 = vunpack.c.l.b16 %v35
  %v302 = vunpack.c.l.b16 %v36
  %v303 = vpack.c.b16 %v288, %v287
  %v304 = vpack.c.b16 %v290, %v289
  %v305 = vpack.c.b16 %v292, %v291
  %v306 = vpack.c.b16 %v294, %v293
  %v307 = vpack.c.b16 %v296, %v295
  %v308 = vpack.c.b16 %v298, %v297
  %v309 = vpack.c.b16 %v300, %v299
  %v310 = vpack.c.b16 %v302, %v301
  %319 = vmatprep.subr.bf16.mxu0 0
  %320 = vmatpush1.bf16.msra.mxu0 %v262
  %321 = vmatprep.subr.bf16.mxu0 0
  %322 = vmatpush1.bf16.msra.mxu0 %v263
  %323 = vmatprep.subr.bf16.mxu0 0
  %324 = vmatpush1.bf16.msra.mxu0 %v264
  %325 = vmatprep.subr.bf16.mxu0 0
  %326 = vmatpush1.bf16.msra.mxu0 %v265
  %327 = vmatprep.subr.bf16.mxu0 0
  %328 = vmatpush1.bf16.msra.mxu0 %v266
  %329 = vmatprep.subr.bf16.mxu0 0
  %330 = vmatpush1.bf16.msra.mxu0 %v267
  %331 = vmatprep.subr.bf16.mxu0 0
  %332 = vmatpush1.bf16.msra.mxu0 %v268
  %333 = vmatprep.subr.bf16.mxu0 0
  %334 = vmatpush1.bf16.msra.mxu0 %v269
  %335 = vmatprep.subr.bf16.mxu0 0
  %336 = vmatpush1.bf16.msra.mxu0 0
  %337 = vmatprep.subr.bf16.mxu0 0
  %338 = vmatpush1.bf16.msra.mxu0 0
  %339 = vmatprep.subr.bf16.mxu0 0
  %340 = vmatpush1.bf16.msra.mxu0 0
  %341 = vmatprep.subr.bf16.mxu0 0
  %342 = vmatpush1.bf16.msra.mxu0 0
  %343 = vmatprep.subr.bf16.mxu0 0
  %344 = vmatpush1.bf16.msra.mxu0 0
  %345 = vmatprep.subr.bf16.mxu0 0
  %346 = vmatpush1.bf16.msra.mxu0 0
  %347 = vmatprep.subr.bf16.mxu0 0
  %348 = vmatpush1.bf16.msra.mxu0 0
  %349 = vmatprep.subr.bf16.mxu0 0
  %350 = vmatpush1.bf16.msra.mxu0 0
  %351 = vmatprep.mubr.bf16.mxu0 0
  %352 = vmatmul.mubr.bf16.gmra.mrb[0].mxu0 %v303
  %v353 = vpop.f32.mrb[0].mxu0
  %v354 = vadd.f32 %v270, %v353
  %v355 = vpop.f32.mrb[0].mxu0
  %v356 = vpop.f32.mrb[0].mxu0
  %v357 = vadd.f32 %v270, %v356
  %v358 = vpop.f32.mrb[0].mxu0
  %359 = vmatprep.mubr.bf16.mxu0 0
  %360 = vmatmul.mubr.bf16.gmra.mrb[0].mxu0 %v304
  %v361 = vpop.f32.mrb[0].mxu0
  %v362 = vadd.f32 %v270, %v361
  %v363 = vpop.f32.mrb[0].mxu0
  %v364 = vpop.f32.mrb[0].mxu0
  %v365 = vadd.f32 %v270, %v364
  %v366 = vpop.f32.mrb[0].mxu0
  %367 = vmatprep.mubr.bf16.mxu0 0
  %368 = vmatmul.mubr.bf16.gmra.mrb[0].mxu0 %v305
  %v369 = vpop.f32.mrb[0].mxu0
  %v370 = vadd.f32 %v270, %v369
  %v371 = vpop.f32.mrb[0].mxu0
  %v372 = vpop.f32.mrb[0].mxu0
  %v373 = vadd.f32 %v270, %v372
  %v374 = vpop.f32.mrb[0].mxu0
  %375 = vmatprep.mubr.bf16.mxu0 0
  %376 = vmatmul.mubr.bf16.gmra.mrb[0].mxu0 %v306
  %v377 = vpop.f32.mrb[0].mxu0
  %v378 = vadd.f32 %v270, %v377
  %v379 = vpop.f32.mrb[0].mxu0
  %v380 = vpop.f32.mrb[0].mxu0
  %v381 = vadd.f32 %v270, %v380
  %v382 = vpop.f32.mrb[0].mxu0
  %383 = vmatprep.mubr.bf16.mxu0 0
  %384 = vmatmul.mubr.bf16.gmra.mrb[0].mxu0 %v307
  %v385 = vpop.f32.mrb[0].mxu0
  %v386 = vadd.f32 %v270, %v385
  %v387 = vpop.f32.mrb[0].mxu0
  %v388 = vpop.f32.mrb[0].mxu0
  %v389 = vadd.f32 %v270, %v388
  %v390 = vpop.f32.mrb[0].mxu0
  %391 = vmatprep.mubr.bf16.mxu0 0
  %392 = vmatmul.mubr.bf16.gmra.mrb[0].mxu0 %v308
  %v393 = vpop.f32.mrb[0].mxu0
  %v394 = vadd.f32 %v270, %v393
  %v395 = vpop.f32.mrb[0].mxu0
  %v396 = vpop.f32.mrb[0].mxu0
  %v397 = vadd.f32 %v270, %v396
  %v398 = vpop.f32.mrb[0].mxu0
  %399 = vmatprep.mubr.bf16.mxu0 0
  %400 = vmatmul.mubr.bf16.gmra.mrb[0].mxu0 %v309
  %v401 = vpop.f32.mrb[0].mxu0
  %v402 = vadd.f32 %v270, %v401
  %v403 = vpop.f32.mrb[0].mxu0
  %v404 = vpop.f32.mrb[0].mxu0
  %v405 = vadd.f32 %v270, %v404
  %v406 = vpop.f32.mrb[0].mxu0
  %407 = vmatprep.mubr.bf16.mxu0 0
  %408 = vmatmul.mubr.bf16.gmra.mrb[0].mxu0 %v310
  %v409 = vpop.f32.mrb[0].mxu0
  %v410 = vadd.f32 %v270, %v409
  %v411 = vpop.f32.mrb[0].mxu0
  %v412 = vpop.f32.mrb[0].mxu0
  %v413 = vadd.f32 %v270, %v412
  %v414 = vpop.f32.mrb[0].mxu0
  %415 = vdwg.mxu0
  %v416 = vtanh.pop %v354
  %v417 = vtanh.pop %v357
  %v418 = vtanh.pop %v362
  %v419 = vtanh.pop %v365
  %v420 = vtanh.pop %v370
  %v421 = vtanh.pop %v373
  %v422 = vtanh.pop %v378
  %v423 = vtanh.pop %v381
  %v424 = vtanh.pop %v386
  %v425 = vtanh.pop %v389
  %v426 = vtanh.pop %v394
  %v427 = vtanh.pop %v397
  %v428 = vtanh.pop %v402
  %v429 = vtanh.pop %v405
  %v430 = vtanh.pop %v410
  %v431 = vtanh.pop %v413
  %v432 = vpack.c.bf16 %v417, %v416
  %v433 = vpack.c.bf16 %v419, %v418
  %v434 = vpack.c.bf16 %v421, %v420
  %v435 = vpack.c.bf16 %v423, %v422
  %v436 = vpack.c.bf16 %v425, %v424
  %v437 = vpack.c.bf16 %v427, %v426
  %v438 = vpack.c.bf16 %v429, %v428
  %v439 = vpack.c.bf16 %v431, %v430
  %v440 = vld [vmem:[%s2 + $0x40] sm:$0xf]
  %v441 = vld [vmem:[%s2 + $0x44] sm:$0xf]
  %v442 = vld [vmem:[%s2 + $0x48] sm:$0xf]
  %v443 = vld [vmem:[%s2 + $0x4c] sm:$0xf]
  %v444 = vld [vmem:[%s2 + $0x50] sm:$0xf]
  %v445 = vld [vmem:[%s2 + $0x54] sm:$0xf]
  %v446 = vld [vmem:[%s2 + $0x58] sm:$0xf]
  %v447 = vld [vmem:[%s2 + $0x5c] sm:$0xf]
  %v448 = vld [vmem:[%s2 + $0x60] sm:$0xf]
  %v449 = vld [vmem:[%s2 + $0x64] sm:$0xf]
  %v450 = vld [vmem:[%s2 + $0x68] sm:$0xf]
  %v451 = vld [vmem:[%s2 + $0x6c] sm:$0xf]
  %v452 = vld [vmem:[%s2 + $0x70] sm:$0xf]
  %v453 = vld [vmem:[%s2 + $0x74] sm:$0xf]
  %v454 = vld [vmem:[%s2 + $0x78] sm:$0xf]
  %v455 = vld [vmem:[%s2 + $0x7c] sm:$0xf]
  %v472 = vunpack.c.l.b16 %v440
  %v473 = vunpack.c.l.b16 %v441
  %v474 = vunpack.c.l.b16 %v442
  %v475 = vunpack.c.l.b16 %v443
  %v476 = vunpack.c.l.b16 %v444
  %v477 = vunpack.c.l.b16 %v445
  %v478 = vunpack.c.l.b16 %v446
  %v479 = vunpack.c.l.b16 %v447
  %v480 = vunpack.c.l.b16 %v448
  %v481 = vunpack.c.l.b16 %v449
  %v482 = vunpack.c.l.b16 %v450
  %v483 = vunpack.c.l.b16 %v451
  %v484 = vunpack.c.l.b16 %v452
  %v485 = vunpack.c.l.b16 %v453
  %v486 = vunpack.c.l.b16 %v454
  %v487 = vunpack.c.l.b16 %v455
  %v488 = vpack.c.b16 %v473, %v472
  %v489 = vpack.c.b16 %v475, %v474
  %v490 = vpack.c.b16 %v477, %v476
  %v491 = vpack.c.b16 %v479, %v478
  %v492 = vpack.c.b16 %v481, %v480
  %v493 = vpack.c.b16 %v483, %v482
  %v494 = vpack.c.b16 %v485, %v484
  %v495 = vpack.c.b16 %v487, %v486
  %504 = vmatprep.subr.bf16.mxu0 0
  %505 = vmatpush1.bf16.msra.mxu0 %v488
  %506 = vmatprep.subr.bf16.mxu0 0
  %507 = vmatpush1.bf16.msra.mxu0 %v489
  %508 = vmatprep.subr.bf16.mxu0 0
  %509 = vmatpush1.bf16.msra.mxu0 %v490
  %510 = vmatprep.subr.bf16.mxu0 0
  %511 = vmatpush1.bf16.msra.mxu0 %v491
  %512 = vmatprep.subr.bf16.mxu0 0
  %513 = vmatpush1.bf16.msra.mxu0 %v492
  %514 = vmatprep.subr.bf16.mxu0 0
  %515 = vmatpush1.bf16.msra.mxu0 %v493
  %516 = vmatprep.subr.bf16.mxu0 0
  %517 = vmatpush1.bf16.msra.mxu0 %v494
  %518 = vmatprep.subr.bf16.mxu0 0
  %519 = vmatpush1.bf16.msra.mxu0 %v495
  %520 = vmatprep.subr.bf16.mxu0 0
  %521 = vmatpush1.bf16.msra.mxu0 0
  %522 = vmatprep.subr.bf16.mxu0 0
  %523 = vmatpush1.bf16.msra.mxu0 0
  %524 = vmatprep.subr.bf16.mxu0 0
  %525 = vmatpush1.bf16.msra.mxu0 0
  %526 = vmatprep.subr.bf16.mxu0 0
  %527 = vmatpush1.bf16.msra.mxu0 0
  %528 = vmatprep.subr.bf16.mxu0 0
  %529 = vmatpush1.bf16.msra.mxu0 0
  %530 = vmatprep.subr.bf16.mxu0 0
  %531 = vmatpush1.bf16.msra.mxu0 0
  %532 = vmatprep.subr.bf16.mxu0 0
  %533 = vmatpush1.bf16.msra.mxu0 0
  %534 = vmatprep.subr.bf16.mxu0 0
  %535 = vmatpush1.bf16.msra.mxu0 0
  %536 = vmatprep.mubr.bf16.mxu0 0
  %537 = vmatmul.mubr.bf16.gmra.mrb[0].mxu0 %v432
  %v538 = vpop.f32.mrb[0].mxu0
  %v539 = vadd.f32 0.0, %v538
  %v540 = vpop.f32.mrb[0].mxu0
  %v541 = vpop.f32.mrb[0].mxu0
  %v542 = vadd.f32 0.0, %v541
  %v543 = vpop.f32.mrb[0].mxu0
  %544 = vmatprep.mubr.bf16.mxu0 0
  %545 = vmatmul.mubr.bf16.gmra.mrb[0].mxu0 %v433
  %v546 = vpop.f32.mrb[0].mxu0
  %v547 = vadd.f32 0.0, %v546
  %v548 = vpop.f32.mrb[0].mxu0
  %v549 = vpop.f32.mrb[0].mxu0
  %v550 = vadd.f32 0.0, %v549
  %v551 = vpop.f32.mrb[0].mxu0
  %552 = vmatprep.mubr.bf16.mxu0 0
  %553 = vmatmul.mubr.bf16.gmra.mrb[0].mxu0 %v434
  %v554 = vpop.f32.mrb[0].mxu0
  %v555 = vadd.f32 0.0, %v554
  %v556 = vpop.f32.mrb[0].mxu0
  %v557 = vpop.f32.mrb[0].mxu0
  %v558 = vadd.f32 0.0, %v557
  %v559 = vpop.f32.mrb[0].mxu0
  %560 = vmatprep.mubr.bf16.mxu0 0
  %561 = vmatmul.mubr.bf16.gmra.mrb[0].mxu0 %v435
  %v562 = vpop.f32.mrb[0].mxu0
  %v563 = vadd.f32 0.0, %v562
  %v564 = vpop.f32.mrb[0].mxu0
  %v565 = vpop.f32.mrb[0].mxu0
  %v566 = vadd.f32 0.0, %v565
  %v567 = vpop.f32.mrb[0].mxu0
  %568 = vmatprep.mubr.bf16.mxu0 0
  %569 = vmatmul.mubr.bf16.gmra.mrb[0].mxu0 %v436
  %v570 = vpop.f32.mrb[0].mxu0
  %v571 = vadd.f32 0.0, %v570
  %v572 = vpop.f32.mrb[0].mxu0
  %v573 = vpop.f32.mrb[0].mxu0
  %v574 = vadd.f32 0.0, %v573
  %v575 = vpop.f32.mrb[0].mxu0
  %576 = vmatprep.mubr.bf16.mxu0 0
  %577 = vmatmul.mubr.bf16.gmra.mrb[0].mxu0 %v437
  %v578 = vpop.f32.mrb[0].mxu0
  %v579 = vadd.f32 0.0, %v578
  %v580 = vpop.f32.mrb[0].mxu0
  %v581 = vpop.f32.mrb[0].mxu0
  %v582 = vadd.f32 0.0, %v581
  %v583 = vpop.f32.mrb[0].mxu0
  %584 = vmatprep.mubr.bf16.mxu0 0
  %585 = vmatmul.mubr.bf16.gmra.mrb[0].mxu0 %v438
  %v586 = vpop.f32.mrb[0].mxu0
  %v587 = vadd.f32 0.0, %v586
  %v588 = vpop.f32.mrb[0].mxu0
  %v589 = vpop.f32.mrb[0].mxu0
  %v590 = vadd.f32 0.0, %v589
  %v591 = vpop.f32.mrb[0].mxu0
  %592 = vmatprep.mubr.bf16.mxu0 0
  %593 = vmatmul.mubr.bf16.gmra.mrb[0].mxu0 %v439
  %v594 = vpop.f32.mrb[0].mxu0
  %v595 = vadd.f32 0.0, %v594
  %v596 = vpop.f32.mrb[0].mxu0
  %v597 = vpop.f32.mrb[0].mxu0
  %v598 = vadd.f32 0.0, %v597
  %v599 = vpop.f32.mrb[0].mxu0
  %600 = vdwg.mxu0
  %v601 = vpack.c.bf16 %v542, %v539
  %v602 = vpack.c.bf16 %v550, %v547
  %v603 = vpack.c.bf16 %v558, %v555
  %v604 = vpack.c.bf16 %v566, %v563
  %v605 = vpack.c.bf16 %v574, %v571
  %v606 = vpack.c.bf16 %v582, %v579
  %v607 = vpack.c.bf16 %v590, %v587
  %v608 = vpack.c.bf16 %v598, %v595
  %v609 = vld [vmem:[%s4 + $0x1] ss:$0 sm:$0xff]
  %610 = vmatprep.subr.bf16.mxu0 0
  %611 = vmatpush1.bf16.msra.mxu0 %v601
  %612 = vmatprep.subr.bf16.mxu0 0
  %613 = vmatpush1.bf16.msra.mxu0 %v602
  %614 = vmatprep.subr.bf16.mxu0 0
  %615 = vmatpush1.bf16.msra.mxu0 %v603
  %616 = vmatprep.subr.bf16.mxu0 0
  %617 = vmatpush1.bf16.msra.mxu0 %v604
  %618 = vmatprep.subr.bf16.mxu0 0
  %619 = vmatpush1.bf16.msra.mxu0 %v605
  %620 = vmatprep.subr.bf16.mxu0 0
  %621 = vmatpush1.bf16.msra.mxu0 %v606
  %622 = vmatprep.subr.bf16.mxu0 0
  %623 = vmatpush1.bf16.msra.mxu0 %v607
  %624 = vmatprep.subr.bf16.mxu0 0
  %625 = vmatpush1.bf16.msra.mxu0 %v608
  %626 = vmatprep.subr.bf16.mxu0 0
  %627 = vmatpush1.bf16.msra.mxu0 0
  %628 = vmatprep.subr.bf16.mxu0 0
  %629 = vmatpush1.bf16.msra.mxu0 0
  %630 = vmatprep.subr.bf16.mxu0 0
  %631 = vmatpush1.bf16.msra.mxu0 0
  %632 = vmatprep.subr.bf16.mxu0 0
  %633 = vmatpush1.bf16.msra.mxu0 0
  %634 = vmatprep.subr.bf16.mxu0 0
  %635 = vmatpush1.bf16.msra.mxu0 0
  %636 = vmatprep.subr.bf16.mxu0 0
  %637 = vmatpush1.bf16.msra.mxu0 0
  %638 = vmatprep.subr.bf16.mxu0 0
  %639 = vmatpush1.bf16.msra.mxu0 0
  %640 = vmatprep.subr.bf16.mxu0 0
  %641 = vmatpush1.bf16.msra.mxu0 0
  %642 = vmatprep.mubr.bf16.mxu0 0
  %643 = vmatmul.mubr.bf16.gmra.mrb[0].mxu0 %v303
  %v644 = vpop.f32.mrb[0].mxu0
  %v645 = vadd.f32 %v609, %v644
  %v646 = vpop.f32.mrb[0].mxu0
  %v647 = vpop.f32.mrb[0].mxu0
  %v648 = vadd.f32 %v609, %v647
  %v649 = vpop.f32.mrb[0].mxu0
  %650 = vmatprep.mubr.bf16.mxu0 0
  %651 = vmatmul.mubr.bf16.gmra.mrb[0].mxu0 %v304
  %v652 = vpop.f32.mrb[0].mxu0
  %v653 = vadd.f32 %v609, %v652
  %v654 = vpop.f32.mrb[0].mxu0
  %v655 = vpop.f32.mrb[0].mxu0
  %v656 = vadd.f32 %v609, %v655
  %v657 = vpop.f32.mrb[0].mxu0
  %658 = vmatprep.mubr.bf16.mxu0 0
  %659 = vmatmul.mubr.bf16.gmra.mrb[0].mxu0 %v305
  %v660 = vpop.f32.mrb[0].mxu0
  %v661 = vadd.f32 %v609, %v660
  %v662 = vpop.f32.mrb[0].mxu0
  %v663 = vpop.f32.mrb[0].mxu0
  %v664 = vadd.f32 %v609, %v663
  %v665 = vpop.f32.mrb[0].mxu0
  %666 = vmatprep.mubr.bf16.mxu0 0
  %667 = vmatmul.mubr.bf16.gmra.mrb[0].mxu0 %v306
  %v668 = vpop.f32.mrb[0].mxu0
  %v669 = vadd.f32 %v609, %v668
  %v670 = vpop.f32.mrb[0].mxu0
  %v671 = vpop.f32.mrb[0].mxu0
  %v672 = vadd.f32 %v609, %v671
  %v673 = vpop.f32.mrb[0].mxu0
  %674 = vmatprep.mubr.bf16.mxu0 0
  %675 = vmatmul.mubr.bf16.gmra.mrb[0].mxu0 %v307
  %v676 = vpop.f32.mrb[0].mxu0
  %v677 = vadd.f32 %v609, %v676
  %v678 = vpop.f32.mrb[0].mxu0
  %v679 = vpop.f32.mrb[0].mxu0
  %v680 = vadd.f32 %v609, %v679
  %v681 = vpop.f32.mrb[0].mxu0
  %682 = vmatprep.mubr.bf16.mxu0 0
  %683 = vmatmul.mubr.bf16.gmra.mrb[0].mxu0 %v308
  %v684 = vpop.f32.mrb[0].mxu0
  %v685 = vadd.f32 %v609, %v684
  %v686 = vpop.f32.mrb[0].mxu0
  %v687 = vpop.f32.mrb[0].mxu0
  %v688 = vadd.f32 %v609, %v687
  %v689 = vpop.f32.mrb[0].mxu0
  %690 = vmatprep.mubr.bf16.mxu0 0
  %691 = vmatmul.mubr.bf16.gmra.mrb[0].mxu0 %v309
  %v692 = vpop.f32.mrb[0].mxu0
  %v693 = vadd.f32 %v609, %v692
  %v694 = vpop.f32.mrb[0].mxu0
  %v695 = vpop.f32.mrb[0].mxu0
  %v696 = vadd.f32 %v609, %v695
  %v697 = vpop.f32.mrb[0].mxu0
  %698 = vmatprep.mubr.bf16.mxu0 0
  %699 = vmatmul.mubr.bf16.gmra.mrb[0].mxu0 %v310
  %v700 = vpop.f32.mrb[0].mxu0
  %v701 = vadd.f32 %v609, %v700
  %v702 = vpop.f32.mrb[0].mxu0
  %v703 = vpop.f32.mrb[0].mxu0
  %v704 = vadd.f32 %v609, %v703
  %v705 = vpop.f32.mrb[0].mxu0
  %706 = vdwg.mxu0
  %v707 = vtanh.pop %v645
  %v708 = vtanh.pop %v648
  %v709 = vtanh.pop %v653
  %v710 = vtanh.pop %v656
  %v711 = vtanh.pop %v661
  %v712 = vtanh.pop %v664
  %v713 = vtanh.pop %v669
  %v714 = vtanh.pop %v672
  %v715 = vtanh.pop %v677
  %v716 = vtanh.pop %v680
  %v717 = vtanh.pop %v685
  %v718 = vtanh.pop %v688
  %v719 = vtanh.pop %v693
  %v720 = vtanh.pop %v696
  %v721 = vtanh.pop %v701
  %v722 = vtanh.pop %v704
  %v723 = vpack.c.bf16 %v708, %v707
  %v724 = vpack.c.bf16 %v710, %v709
  %v725 = vpack.c.bf16 %v712, %v711
  %v726 = vpack.c.bf16 %v714, %v713
  %v727 = vpack.c.bf16 %v716, %v715
  %v728 = vpack.c.bf16 %v718, %v717
  %v729 = vpack.c.bf16 %v720, %v719
  %v730 = vpack.c.bf16 %v722, %v721
  %v731 = vld [vmem:[%s2 + $0x80] sm:$0xf]
  %v732 = vld [vmem:[%s2 + $0x84] sm:$0xf]
  %v733 = vld [vmem:[%s2 + $0x88] sm:$0xf]
  %v734 = vld [vmem:[%s2 + $0x8c] sm:$0xf]
  %v735 = vld [vmem:[%s2 + $0x90] sm:$0xf]
  %v736 = vld [vmem:[%s2 + $0x94] sm:$0xf]
  %v737 = vld [vmem:[%s2 + $0x98] sm:$0xf]
  %v738 = vld [vmem:[%s2 + $0x9c] sm:$0xf]
  %v739 = vld [vmem:[%s2 + $0xa0] sm:$0xf]
  %v740 = vld [vmem:[%s2 + $0xa4] sm:$0xf]
  %v741 = vld [vmem:[%s2 + $0xa8] sm:$0xf]
  %v742 = vld [vmem:[%s2 + $0xac] sm:$0xf]
  %v743 = vld [vmem:[%s2 + $0xb0] sm:$0xf]
  %v744 = vld [vmem:[%s2 + $0xb4] sm:$0xf]
  %v745 = vld [vmem:[%s2 + $0xb8] sm:$0xf]
  %v746 = vld [vmem:[%s2 + $0xbc] sm:$0xf]
  %v763 = vunpack.c.l.b16 %v731
  %v764 = vunpack.c.l.b16 %v732
  %v765 = vunpack.c.l.b16 %v733
  %v766 = vunpack.c.l.b16 %v734
  %v767 = vunpack.c.l.b16 %v735
  %v768 = vunpack.c.l.b16 %v736
  %v769 = vunpack.c.l.b16 %v737
  %v770 = vunpack.c.l.b16 %v738
  %v771 = vunpack.c.l.b16 %v739
  %v772 = vunpack.c.l.b16 %v740
  %v773 = vunpack.c.l.b16 %v741
  %v774 = vunpack.c.l.b16 %v742
  %v775 = vunpack.c.l.b16 %v743
  %v776 = vunpack.c.l.b16 %v744
  %v777 = vunpack.c.l.b16 %v745
  %v778 = vunpack.c.l.b16 %v746
  %v779 = vpack.c.b16 %v764, %v763
  %v780 = vpack.c.b16 %v766, %v765
  %v781 = vpack.c.b16 %v768, %v767
  %v782 = vpack.c.b16 %v770, %v769
  %v783 = vpack.c.b16 %v772, %v771
  %v784 = vpack.c.b16 %v774, %v773
  %v785 = vpack.c.b16 %v776, %v775
  %v786 = vpack.c.b16 %v778, %v777
  %795 = vmatprep.subr.bf16.mxu0 0
  %796 = vmatpush1.bf16.msra.mxu0 %v779
  %797 = vmatprep.subr.bf16.mxu0 0
  %798 = vmatpush1.bf16.msra.mxu0 %v780
  %799 = vmatprep.subr.bf16.mxu0 0
  %800 = vmatpush1.bf16.msra.mxu0 %v781
  %801 = vmatprep.subr.bf16.mxu0 0
  %802 = vmatpush1.bf16.msra.mxu0 %v782
  %803 = vmatprep.subr.bf16.mxu0 0
  %804 = vmatpush1.bf16.msra.mxu0 %v783
  %805 = vmatprep.subr.bf16.mxu0 0
  %806 = vmatpush1.bf16.msra.mxu0 %v784
  %807 = vmatprep.subr.bf16.mxu0 0
  %808 = vmatpush1.bf16.msra.mxu0 %v785
  %809 = vmatprep.subr.bf16.mxu0 0
  %810 = vmatpush1.bf16.msra.mxu0 %v786
  %811 = vmatprep.subr.bf16.mxu0 0
  %812 = vmatpush1.bf16.msra.mxu0 0
  %813 = vmatprep.subr.bf16.mxu0 0
  %814 = vmatpush1.bf16.msra.mxu0 0
  %815 = vmatprep.subr.bf16.mxu0 0
  %816 = vmatpush1.bf16.msra.mxu0 0
  %817 = vmatprep.subr.bf16.mxu0 0
  %818 = vmatpush1.bf16.msra.mxu0 0
  %819 = vmatprep.subr.bf16.mxu0 0
  %820 = vmatpush1.bf16.msra.mxu0 0
  %821 = vmatprep.subr.bf16.mxu0 0
  %822 = vmatpush1.bf16.msra.mxu0 0
  %823 = vmatprep.subr.bf16.mxu0 0
  %824 = vmatpush1.bf16.msra.mxu0 0
  %825 = vmatprep.subr.bf16.mxu0 0
  %826 = vmatpush1.bf16.msra.mxu0 0
  %827 = vmatprep.mubr.bf16.mxu0 0
  %828 = vmatmul.mubr.bf16.gmra.mrb[0].mxu0 %v723
  %v829 = vpop.f32.mrb[0].mxu0
  %v830 = vadd.f32 0.0, %v829
  %v831 = vpop.f32.mrb[0].mxu0
  %v832 = vpop.f32.mrb[0].mxu0
  %v833 = vadd.f32 0.0, %v832
  %v834 = vpop.f32.mrb[0].mxu0
  %835 = vmatprep.mubr.bf16.mxu0 0
  %836 = vmatmul.mubr.bf16.gmra.mrb[0].mxu0 %v724
  %v837 = vpop.f32.mrb[0].mxu0
  %v838 = vadd.f32 0.0, %v837
  %v839 = vpop.f32.mrb[0].mxu0
  %v840 = vpop.f32.mrb[0].mxu0
  %v841 = vadd.f32 0.0, %v840
  %v842 = vpop.f32.mrb[0].mxu0
  %843 = vmatprep.mubr.bf16.mxu0 0
  %844 = vmatmul.mubr.bf16.gmra.mrb[0].mxu0 %v725
  %v845 = vpop.f32.mrb[0].mxu0
  %v846 = vadd.f32 0.0, %v845
  %v847 = vpop.f32.mrb[0].mxu0
  %v848 = vpop.f32.mrb[0].mxu0
  %v849 = vadd.f32 0.0, %v848
  %v850 = vpop.f32.mrb[0].mxu0
  %851 = vmatprep.mubr.bf16.mxu0 0
  %852 = vmatmul.mubr.bf16.gmra.mrb[0].mxu0 %v726
  %v853 = vpop.f32.mrb[0].mxu0
  %v854 = vadd.f32 0.0, %v853
  %v855 = vpop.f32.mrb[0].mxu0
  %v856 = vpop.f32.mrb[0].mxu0
  %v857 = vadd.f32 0.0, %v856
  %v858 = vpop.f32.mrb[0].mxu0
  %859 = vmatprep.mubr.bf16.mxu0 0
  %860 = vmatmul.mubr.bf16.gmra.mrb[0].mxu0 %v727
  %v861 = vpop.f32.mrb[0].mxu0
  %v862 = vadd.f32 0.0, %v861
  %v863 = vpop.f32.mrb[0].mxu0
  %v864 = vpop.f32.mrb[0].mxu0
  %v865 = vadd.f32 0.0, %v864
  %v866 = vpop.f32.mrb[0].mxu0
  %867 = vmatprep.mubr.bf16.mxu0 0
  %868 = vmatmul.mubr.bf16.gmra.mrb[0].mxu0 %v728
  %v869 = vpop.f32.mrb[0].mxu0
  %v870 = vadd.f32 0.0, %v869
  %v871 = vpop.f32.mrb[0].mxu0
  %v872 = vpop.f32.mrb[0].mxu0
  %v873 = vadd.f32 0.0, %v872
  %v874 = vpop.f32.mrb[0].mxu0
  %875 = vmatprep.mubr.bf16.mxu0 0
  %876 = vmatmul.mubr.bf16.gmra.mrb[0].mxu0 %v729
  %v877 = vpop.f32.mrb[0].mxu0
  %v878 = vadd.f32 0.0, %v877
  %v879 = vpop.f32.mrb[0].mxu0
  %v880 = vpop.f32.mrb[0].mxu0
  %v881 = vadd.f32 0.0, %v880
  %v882 = vpop.f32.mrb[0].mxu0
  %883 = vmatprep.mubr.bf16.mxu0 0
  %884 = vmatmul.mubr.bf16.gmra.mrb[0].mxu0 %v730
  %v885 = vpop.f32.mrb[0].mxu0
  %v886 = vadd.f32 0.0, %v885
  %v887 = vpop.f32.mrb[0].mxu0
  %v888 = vpop.f32.mrb[0].mxu0
  %v889 = vadd.f32 0.0, %v888
  %v890 = vpop.f32.mrb[0].mxu0
  %891 = vdwg.mxu0
  %v892 = vpack.c.bf16 %v833, %v830
  %v893 = vpack.c.bf16 %v841, %v838
  %v894 = vpack.c.bf16 %v849, %v846
  %v895 = vpack.c.bf16 %v857, %v854
  %v896 = vpack.c.bf16 %v865, %v862
  %v897 = vpack.c.bf16 %v873, %v870
  %v898 = vpack.c.bf16 %v881, %v878
  %v899 = vpack.c.bf16 %v889, %v886
  %v900 = vld [vmem:[%s4 + $0x2] ss:$0 sm:$0xff]
  %901 = vmatprep.subr.bf16.mxu0 0
  %902 = vmatpush1.bf16.msra.mxu0 %v892
  %903 = vmatprep.subr.bf16.mxu0 0
  %904 = vmatpush1.bf16.msra.mxu0 %v893
  %905 = vmatprep.subr.bf16.mxu0 0
  %906 = vmatpush1.bf16.msra.mxu0 %v894
  %907 = vmatprep.subr.bf16.mxu0 0
  %908 = vmatpush1.bf16.msra.mxu0 %v895
  %909 = vmatprep.subr.bf16.mxu0 0
  %910 = vmatpush1.bf16.msra.mxu0 %v896
  %911 = vmatprep.subr.bf16.mxu0 0
  %912 = vmatpush1.bf16.msra.mxu0 %v897
  %913 = vmatprep.subr.bf16.mxu0 0
  %914 = vmatpush1.bf16.msra.mxu0 %v898
  %915 = vmatprep.subr.bf16.mxu0 0
  %916 = vmatpush1.bf16.msra.mxu0 %v899
  %917 = vmatprep.subr.bf16.mxu0 0
  %918 = vmatpush1.bf16.msra.mxu0 0
  %919 = vmatprep.subr.bf16.mxu0 0
  %920 = vmatpush1.bf16.msra.mxu0 0
  %921 = vmatprep.subr.bf16.mxu0 0
  %922 = vmatpush1.bf16.msra.mxu0 0
  %923 = vmatprep.subr.bf16.mxu0 0
  %924 = vmatpush1.bf16.msra.mxu0 0
  %925 = vmatprep.subr.bf16.mxu0 0
  %926 = vmatpush1.bf16.msra.mxu0 0
  %927 = vmatprep.subr.bf16.mxu0 0
  %928 = vmatpush1.bf16.msra.mxu0 0
  %929 = vmatprep.subr.bf16.mxu0 0
  %930 = vmatpush1.bf16.msra.mxu0 0
  %931 = vmatprep.subr.bf16.mxu0 0
  %932 = vmatpush1.bf16.msra.mxu0 0
  %933 = vmatprep.mubr.bf16.mxu0 0
  %934 = vmatmul.mubr.bf16.gmra.mrb[0].mxu0 %v303
  %v935 = vpop.f32.mrb[0].mxu0
  %v936 = vadd.f32 %v900, %v935
  %v937 = vpop.f32.mrb[0].mxu0
  %v938 = vpop.f32.mrb[0].mxu0
  %v939 = vadd.f32 %v900, %v938
  %v940 = vpop.f32.mrb[0].mxu0
  %941 = vmatprep.mubr.bf16.mxu0 0
  %942 = vmatmul.mubr.bf16.gmra.mrb[0].mxu0 %v304
  %v943 = vpop.f32.mrb[0].mxu0
  %v944 = vadd.f32 %v900, %v943
  %v945 = vpop.f32.mrb[0].mxu0
  %v946 = vpop.f32.mrb[0].mxu0
  %v947 = vadd.f32 %v900, %v946
  %v948 = vpop.f32.mrb[0].mxu0
  %949 = vmatprep.mubr.bf16.mxu0 0
  %950 = vmatmul.mubr.bf16.gmra.mrb[0].mxu0 %v305
  %v951 = vpop.f32.mrb[0].mxu0
  %v952 = vadd.f32 %v900, %v951
  %v953 = vpop.f32.mrb[0].mxu0
  %v954 = vpop.f32.mrb[0].mxu0
  %v955 = vadd.f32 %v900, %v954
  %v956 = vpop.f32.mrb[0].mxu0
  %957 = vmatprep.mubr.bf16.mxu0 0
  %958 = vmatmul.mubr.bf16.gmra.mrb[0].mxu0 %v306
  %v959 = vpop.f32.mrb[0].mxu0
  %v960 = vadd.f32 %v900, %v959
  %v961 = vpop.f32.mrb[0].mxu0
  %v962 = vpop.f32.mrb[0].mxu0
  %v963 = vadd.f32 %v900, %v962
  %v964 = vpop.f32.mrb[0].mxu0
  %965 = vmatprep.mubr.bf16.mxu0 0
  %966 = vmatmul.mubr.bf16.gmra.mrb[0].mxu0 %v307
  %v967 = vpop.f32.mrb[0].mxu0
  %v968 = vadd.f32 %v900, %v967
  %v969 = vpop.f32.mrb[0].mxu0
  %v970 = vpop.f32.mrb[0].mxu0
  %v971 = vadd.f32 %v900, %v970
  %v972 = vpop.f32.mrb[0].mxu0
  %973 = vmatprep.mubr.bf16.mxu0 0
  %974 = vmatmul.mubr.bf16.gmra.mrb[0].mxu0 %v308
  %v975 = vpop.f32.mrb[0].mxu0
  %v976 = vadd.f32 %v900, %v975
  %v977 = vpop.f32.mrb[0].mxu0
  %v978 = vpop.f32.mrb[0].mxu0
  %v979 = vadd.f32 %v900, %v978
  %v980 = vpop.f32.mrb[0].mxu0
  %981 = vmatprep.mubr.bf16.mxu0 0
  %982 = vmatmul.mubr.bf16.gmra.mrb[0].mxu0 %v309
  %v983 = vpop.f32.mrb[0].mxu0
  %v984 = vadd.f32 %v900, %v983
  %v985 = vpop.f32.mrb[0].mxu0
  %v986 = vpop.f32.mrb[0].mxu0
  %v987 = vadd.f32 %v900, %v986
  %v988 = vpop.f32.mrb[0].mxu0
  %989 = vmatprep.mubr.bf16.mxu0 0
  %990 = vmatmul.mubr.bf16.gmra.mrb[0].mxu0 %v310
  %v991 = vpop.f32.mrb[0].mxu0
  %v992 = vadd.f32 %v900, %v991
  %v993 = vpop.f32.mrb[0].mxu0
  %v994 = vpop.f32.mrb[0].mxu0
  %v995 = vadd.f32 %v900, %v994
  %v996 = vpop.f32.mrb[0].mxu0
  %997 = vdwg.mxu0
  %v998 = vtanh.pop %v936
  %v999 = vtanh.pop %v939
  %v1000 = vtanh.pop %v944
  %v1001 = vtanh.pop %v947
  %v1002 = vtanh.pop %v952
  %v1003 = vtanh.pop %v955
  %v1004 = vtanh.pop %v960
  %v1005 = vtanh.pop %v963
  %v1006 = vtanh.pop %v968
  %v1007 = vtanh.pop %v971
  %v1008 = vtanh.pop %v976
  %v1009 = vtanh.pop %v979
  %v1010 = vtanh.pop %v984
  %v1011 = vtanh.pop %v987
  %v1012 = vtanh.pop %v992
  %v1013 = vtanh.pop %v995
  %v1014 = vpack.c.bf16 %v999, %v998
  %v1015 = vpack.c.bf16 %v1001, %v1000
  %v1016 = vpack.c.bf16 %v1003, %v1002
  %v1017 = vpack.c.bf16 %v1005, %v1004
  %v1018 = vpack.c.bf16 %v1007, %v1006
  %v1019 = vpack.c.bf16 %v1009, %v1008
  %v1020 = vpack.c.bf16 %v1011, %v1010
  %v1021 = vpack.c.bf16 %v1013, %v1012
  %v1022 = vld [vmem:[%s2 + $0xc0] sm:$0xf]
  %v1023 = vld [vmem:[%s2 + $0xc4] sm:$0xf]
  %v1024 = vld [vmem:[%s2 + $0xc8] sm:$0xf]
  %v1025 = vld [vmem:[%s2 + $0xcc] sm:$0xf]
  %v1026 = vld [vmem:[%s2 + $0xd0] sm:$0xf]
  %v1027 = vld [vmem:[%s2 + $0xd4] sm:$0xf]
  %v1028 = vld [vmem:[%s2 + $0xd8] sm:$0xf]
  %v1029 = vld [vmem:[%s2 + $0xdc] sm:$0xf]
  %v1030 = vld [vmem:[%s2 + $0xe0] sm:$0xf]
  %v1031 = vld [vmem:[%s2 + $0xe4] sm:$0xf]
  %v1032 = vld [vmem:[%s2 + $0xe8] sm:$0xf]
  %v1033 = vld [vmem:[%s2 + $0xec] sm:$0xf]
  %v1034 = vld [vmem:[%s2 + $0xf0] sm:$0xf]
  %v1035 = vld [vmem:[%s2 + $0xf4] sm:$0xf]
  %v1036 = vld [vmem:[%s2 + $0xf8] sm:$0xf]
  %v1037 = vld [vmem:[%s2 + $0xfc] sm:$0xf]
  %v1054 = vunpack.c.l.b16 %v1022
  %v1055 = vunpack.c.l.b16 %v1023
  %v1056 = vunpack.c.l.b16 %v1024
  %v1057 = vunpack.c.l.b16 %v1025
  %v1058 = vunpack.c.l.b16 %v1026
  %v1059 = vunpack.c.l.b16 %v1027
  %v1060 = vunpack.c.l.b16 %v1028
  %v1061 = vunpack.c.l.b16 %v1029
  %v1062 = vunpack.c.l.b16 %v1030
  %v1063 = vunpack.c.l.b16 %v1031
  %v1064 = vunpack.c.l.b16 %v1032
  %v1065 = vunpack.c.l.b16 %v1033
  %v1066 = vunpack.c.l.b16 %v1034
  %v1067 = vunpack.c.l.b16 %v1035
  %v1068 = vunpack.c.l.b16 %v1036
  %v1069 = vunpack.c.l.b16 %v1037
  %v1070 = vpack.c.b16 %v1055, %v1054
  %v1071 = vpack.c.b16 %v1057, %v1056
  %v1072 = vpack.c.b16 %v1059, %v1058
  %v1073 = vpack.c.b16 %v1061, %v1060
  %v1074 = vpack.c.b16 %v1063, %v1062
  %v1075 = vpack.c.b16 %v1065, %v1064
  %v1076 = vpack.c.b16 %v1067, %v1066
  %v1077 = vpack.c.b16 %v1069, %v1068
  %1086 = vmatprep.subr.bf16.mxu0 0
  %1087 = vmatpush1.bf16.msra.mxu0 %v1070
  %1088 = vmatprep.subr.bf16.mxu0 0
  %1089 = vmatpush1.bf16.msra.mxu0 %v1071
  %1090 = vmatprep.subr.bf16.mxu0 0
  %1091 = vmatpush1.bf16.msra.mxu0 %v1072
  %1092 = vmatprep.subr.bf16.mxu0 0
  %1093 = vmatpush1.bf16.msra.mxu0 %v1073
  %1094 = vmatprep.subr.bf16.mxu0 0
  %1095 = vmatpush1.bf16.msra.mxu0 %v1074
  %1096 = vmatprep.subr.bf16.mxu0 0
  %1097 = vmatpush1.bf16.msra.mxu0 %v1075
  %1098 = vmatprep.subr.bf16.mxu0 0
  %1099 = vmatpush1.bf16.msra.mxu0 %v1076
  %1100 = vmatprep.subr.bf16.mxu0 0
  %1101 = vmatpush1.bf16.msra.mxu0 %v1077
  %1102 = vmatprep.subr.bf16.mxu0 0
  %1103 = vmatpush1.bf16.msra.mxu0 0
  %1104 = vmatprep.subr.bf16.mxu0 0
  %1105 = vmatpush1.bf16.msra.mxu0 0
  %1106 = vmatprep.subr.bf16.mxu0 0
  %1107 = vmatpush1.bf16.msra.mxu0 0
  %1108 = vmatprep.subr.bf16.mxu0 0
  %1109 = vmatpush1.bf16.msra.mxu0 0
  %1110 = vmatprep.subr.bf16.mxu0 0
  %1111 = vmatpush1.bf16.msra.mxu0 0
  %1112 = vmatprep.subr.bf16.mxu0 0
  %1113 = vmatpush1.bf16.msra.mxu0 0
  %1114 = vmatprep.subr.bf16.mxu0 0
  %1115 = vmatpush1.bf16.msra.mxu0 0
  %1116 = vmatprep.subr.bf16.mxu0 0
  %1117 = vmatpush1.bf16.msra.mxu0 0
  %1118 = vmatprep.mubr.bf16.mxu0 0
  %1119 = vmatmul.mubr.bf16.gmra.mrb[0].mxu0 %v1014
  %v1120 = vpop.f32.mrb[0].mxu0
  %v1121 = vadd.f32 0.0, %v1120
  %v1122 = vpop.f32.mrb[0].mxu0
  %v1123 = vpop.f32.mrb[0].mxu0
  %v1124 = vadd.f32 0.0, %v1123
  %v1125 = vpop.f32.mrb[0].mxu0
  %1126 = vmatprep.mubr.bf16.mxu0 0
  %1127 = vmatmul.mubr.bf16.gmra.mrb[0].mxu0 %v1015
  %v1128 = vpop.f32.mrb[0].mxu0
  %v1129 = vadd.f32 0.0, %v1128
  %v1130 = vpop.f32.mrb[0].mxu0
  %v1131 = vpop.f32.mrb[0].mxu0
  %v1132 = vadd.f32 0.0, %v1131
  %v1133 = vpop.f32.mrb[0].mxu0
  %1134 = vmatprep.mubr.bf16.mxu0 0
  %1135 = vmatmul.mubr.bf16.gmra.mrb[0].mxu0 %v1016
  %v1136 = vpop.f32.mrb[0].mxu0
  %v1137 = vadd.f32 0.0, %v1136
  %v1138 = vpop.f32.mrb[0].mxu0
  %v1139 = vpop.f32.mrb[0].mxu0
  %v1140 = vadd.f32 0.0, %v1139
  %v1141 = vpop.f32.mrb[0].mxu0
  %1142 = vmatprep.mubr.bf16.mxu0 0
  %1143 = vmatmul.mubr.bf16.gmra.mrb[0].mxu0 %v1017
  %v1144 = vpop.f32.mrb[0].mxu0
  %v1145 = vadd.f32 0.0, %v1144
  %v1146 = vpop.f32.mrb[0].mxu0
  %v1147 = vpop.f32.mrb[0].mxu0
  %v1148 = vadd.f32 0.0, %v1147
  %v1149 = vpop.f32.mrb[0].mxu0
  %1150 = vmatprep.mubr.bf16.mxu0 0
  %1151 = vmatmul.mubr.bf16.gmra.mrb[0].mxu0 %v1018
  %v1152 = vpop.f32.mrb[0].mxu0
  %v1153 = vadd.f32 0.0, %v1152
  %v1154 = vpop.f32.mrb[0].mxu0
  %v1155 = vpop.f32.mrb[0].mxu0
  %v1156 = vadd.f32 0.0, %v1155
  %v1157 = vpop.f32.mrb[0].mxu0
  %1158 = vmatprep.mubr.bf16.mxu0 0
  %1159 = vmatmul.mubr.bf16.gmra.mrb[0].mxu0 %v1019
  %v1160 = vpop.f32.mrb[0].mxu0
  %v1161 = vadd.f32 0.0, %v1160
  %v1162 = vpop.f32.mrb[0].mxu0
  %v1163 = vpop.f32.mrb[0].mxu0
  %v1164 = vadd.f32 0.0, %v1163
  %v1165 = vpop.f32.mrb[0].mxu0
  %1166 = vmatprep.mubr.bf16.mxu0 0
  %1167 = vmatmul.mubr.bf16.gmra.mrb[0].mxu0 %v1020
  %v1168 = vpop.f32.mrb[0].mxu0
  %v1169 = vadd.f32 0.0, %v1168
  %v1170 = vpop.f32.mrb[0].mxu0
  %v1171 = vpop.f32.mrb[0].mxu0
  %v1172 = vadd.f32 0.0, %v1171
  %v1173 = vpop.f32.mrb[0].mxu0
  %1174 = vmatprep.mubr.bf16.mxu0 0
  %1175 = vmatmul.mubr.bf16.gmra.mrb[0].mxu0 %v1021
  %v1176 = vpop.f32.mrb[0].mxu0
  %v1177 = vadd.f32 0.0, %v1176
  %v1178 = vpop.f32.mrb[0].mxu0
  %v1179 = vpop.f32.mrb[0].mxu0
  %v1180 = vadd.f32 0.0, %v1179
  %v1181 = vpop.f32.mrb[0].mxu0
  %1182 = vdwg.mxu0
  %v1183 = vpack.c.bf16 %v1124, %v1121
  %v1184 = vpack.c.bf16 %v1132, %v1129
  %v1185 = vpack.c.bf16 %v1140, %v1137
  %v1186 = vpack.c.bf16 %v1148, %v1145
  %v1187 = vpack.c.bf16 %v1156, %v1153
  %v1188 = vpack.c.bf16 %v1164, %v1161
  %v1189 = vpack.c.bf16 %v1172, %v1169
  %v1190 = vpack.c.bf16 %v1180, %v1177
  %v1191 = vld [vmem:[%s4 + $0x3] ss:$0 sm:$0xff]
  %1192 = vmatprep.subr.bf16.mxu0 0
  %1193 = vmatpush1.bf16.msra.mxu0 %v1183
  %1194 = vmatprep.subr.bf16.mxu0 0
  %1195 = vmatpush1.bf16.msra.mxu0 %v1184
  %1196 = vmatprep.subr.bf16.mxu0 0
  %1197 = vmatpush1.bf16.msra.mxu0 %v1185
  %1198 = vmatprep.subr.bf16.mxu0 0
  %1199 = vmatpush1.bf16.msra.mxu0 %v1186
  %1200 = vmatprep.subr.bf16.mxu0 0
  %1201 = vmatpush1.bf16.msra.mxu0 %v1187
  %1202 = vmatprep.subr.bf16.mxu0 0
  %1203 = vmatpush1.bf16.msra.mxu0 %v1188
  %1204 = vmatprep.subr.bf16.mxu0 0
  %1205 = vmatpush1.bf16.msra.mxu0 %v1189
  %1206 = vmatprep.subr.bf16.mxu0 0
  %1207 = vmatpush1.bf16.msra.mxu0 %v1190
  %1208 = vmatprep.subr.bf16.mxu0 0
  %1209 = vmatpush1.bf16.msra.mxu0 0
  %1210 = vmatprep.subr.bf16.mxu0 0
  %1211 = vmatpush1.bf16.msra.mxu0 0
  %1212 = vmatprep.subr.bf16.mxu0 0
  %1213 = vmatpush1.bf16.msra.mxu0 0
  %1214 = vmatprep.subr.bf16.mxu0 0
  %1215 = vmatpush1.bf16.msra.mxu0 0
  %1216 = vmatprep.subr.bf16.mxu0 0
  %1217 = vmatpush1.bf16.msra.mxu0 0
  %1218 = vmatprep.subr.bf16.mxu0 0
  %1219 = vmatpush1.bf16.msra.mxu0 0
  %1220 = vmatprep.subr.bf16.mxu0 0
  %1221 = vmatpush1.bf16.msra.mxu0 0
  %1222 = vmatprep.subr.bf16.mxu0 0
  %1223 = vmatpush1.bf16.msra.mxu0 0
  %1224 = vmatprep.mubr.bf16.mxu0 0
  %1225 = vmatmul.mubr.bf16.gmra.mrb[0].mxu0 %v303
  %v1226 = vpop.f32.mrb[0].mxu0
  %v1227 = vadd.f32 %v1191, %v1226
  %v1228 = vpop.f32.mrb[0].mxu0
  %v1229 = vpop.f32.mrb[0].mxu0
  %v1230 = vadd.f32 %v1191, %v1229
  %v1231 = vpop.f32.mrb[0].mxu0
  %1232 = vmatprep.mubr.bf16.mxu0 0
  %1233 = vmatmul.mubr.bf16.gmra.mrb[0].mxu0 %v304
  %v1234 = vpop.f32.mrb[0].mxu0
  %v1235 = vadd.f32 %v1191, %v1234
  %v1236 = vpop.f32.mrb[0].mxu0
  %v1237 = vpop.f32.mrb[0].mxu0
  %v1238 = vadd.f32 %v1191, %v1237
  %v1239 = vpop.f32.mrb[0].mxu0
  %1240 = vmatprep.mubr.bf16.mxu0 0
  %1241 = vmatmul.mubr.bf16.gmra.mrb[0].mxu0 %v305
  %v1242 = vpop.f32.mrb[0].mxu0
  %v1243 = vadd.f32 %v1191, %v1242
  %v1244 = vpop.f32.mrb[0].mxu0
  %v1245 = vpop.f32.mrb[0].mxu0
  %v1246 = vadd.f32 %v1191, %v1245
  %v1247 = vpop.f32.mrb[0].mxu0
  %1248 = vmatprep.mubr.bf16.mxu0 0
  %1249 = vmatmul.mubr.bf16.gmra.mrb[0].mxu0 %v306
  %v1250 = vpop.f32.mrb[0].mxu0
  %v1251 = vadd.f32 %v1191, %v1250
  %v1252 = vpop.f32.mrb[0].mxu0
  %v1253 = vpop.f32.mrb[0].mxu0
  %v1254 = vadd.f32 %v1191, %v1253
  %v1255 = vpop.f32.mrb[0].mxu0
  %1256 = vmatprep.mubr.bf16.mxu0 0
  %1257 = vmatmul.mubr.bf16.gmra.mrb[0].mxu0 %v307
  %v1258 = vpop.f32.mrb[0].mxu0
  %v1259 = vadd.f32 %v1191, %v1258
  %v1260 = vpop.f32.mrb[0].mxu0
  %v1261 = vpop.f32.mrb[0].mxu0
  %v1262 = vadd.f32 %v1191, %v1261
  %v1263 = vpop.f32.mrb[0].mxu0
  %1264 = vmatprep.mubr.bf16.mxu0 0
  %1265 = vmatmul.mubr.bf16.gmra.mrb[0].mxu0 %v308
  %v1266 = vpop.f32.mrb[0].mxu0
  %v1267 = vadd.f32 %v1191, %v1266
  %v1268 = vpop.f32.mrb[0].mxu0
  %v1269 = vpop.f32.mrb[0].mxu0
  %v1270 = vadd.f32 %v1191, %v1269
  %v1271 = vpop.f32.mrb[0].mxu0
  %1272 = vmatprep.mubr.bf16.mxu0 0
  %1273 = vmatmul.mubr.bf16.gmra.mrb[0].mxu0 %v309
  %v1274 = vpop.f32.mrb[0].mxu0
  %v1275 = vadd.f32 %v1191, %v1274
  %v1276 = vpop.f32.mrb[0].mxu0
  %v1277 = vpop.f32.mrb[0].mxu0
  %v1278 = vadd.f32 %v1191, %v1277
  %v1279 = vpop.f32.mrb[0].mxu0
  %1280 = vmatprep.mubr.bf16.mxu0 0
  %1281 = vmatmul.mubr.bf16.gmra.mrb[0].mxu0 %v310
  %v1282 = vpop.f32.mrb[0].mxu0
  %v1283 = vadd.f32 %v1191, %v1282
  %v1284 = vpop.f32.mrb[0].mxu0
  %v1285 = vpop.f32.mrb[0].mxu0
  %v1286 = vadd.f32 %v1191, %v1285
  %v1287 = vpop.f32.mrb[0].mxu0
  %1288 = vdwg.mxu0
  %v1289 = vtanh.pop %v1227
  %v1290 = vtanh.pop %v1230
  %v1291 = vtanh.pop %v1235
  %v1292 = vtanh.pop %v1238
  %v1293 = vtanh.pop %v1243
  %v1294 = vtanh.pop %v1246
  %v1295 = vtanh.pop %v1251
  %v1296 = vtanh.pop %v1254
  %v1297 = vtanh.pop %v1259
  %v1298 = vtanh.pop %v1262
  %v1299 = vtanh.pop %v1267
  %v1300 = vtanh.pop %v1270
  %v1301 = vtanh.pop %v1275
  %v1302 = vtanh.pop %v1278
  %v1303 = vtanh.pop %v1283
  %v1304 = vtanh.pop %v1286
  %v1305 = vpack.c.bf16 %v1290, %v1289
  %v1306 = vpack.c.bf16 %v1292, %v1291
  %v1307 = vpack.c.bf16 %v1294, %v1293
  %v1308 = vpack.c.bf16 %v1296, %v1295
  %v1309 = vpack.c.bf16 %v1298, %v1297
  %v1310 = vpack.c.bf16 %v1300, %v1299
  %v1311 = vpack.c.bf16 %v1302, %v1301
  %v1312 = vpack.c.bf16 %v1304, %v1303
  %v1313 = vld [vmem:[%s2 + $0x100] sm:$0xf]
  %v1314 = vld [vmem:[%s2 + $0x104] sm:$0xf]
  %v1315 = vld [vmem:[%s2 + $0x108] sm:$0xf]
  %v1316 = vld [vmem:[%s2 + $0x10c] sm:$0xf]
  %v1317 = vld [vmem:[%s2 + $0x110] sm:$0xf]
  %v1318 = vld [vmem:[%s2 + $0x114] sm:$0xf]
  %v1319 = vld [vmem:[%s2 + $0x118] sm:$0xf]
  %v1320 = vld [vmem:[%s2 + $0x11c] sm:$0xf]
  %v1321 = vld [vmem:[%s2 + $0x120] sm:$0xf]
  %v1322 = vld [vmem:[%s2 + $0x124] sm:$0xf]
  %v1323 = vld [vmem:[%s2 + $0x128] sm:$0xf]
  %v1324 = vld [vmem:[%s2 + $0x12c] sm:$0xf]
  %v1325 = vld [vmem:[%s2 + $0x130] sm:$0xf]
  %v1326 = vld [vmem:[%s2 + $0x134] sm:$0xf]
  %v1327 = vld [vmem:[%s2 + $0x138] sm:$0xf]
  %v1328 = vld [vmem:[%s2 + $0x13c] sm:$0xf]
  %v1345 = vunpack.c.l.b16 %v1313
  %v1346 = vunpack.c.l.b16 %v1314
  %v1347 = vunpack.c.l.b16 %v1315
  %v1348 = vunpack.c.l.b16 %v1316
  %v1349 = vunpack.c.l.b16 %v1317
  %v1350 = vunpack.c.l.b16 %v1318
  %v1351 = vunpack.c.l.b16 %v1319
  %v1352 = vunpack.c.l.b16 %v1320
  %v1353 = vunpack.c.l.b16 %v1321
  %v1354 = vunpack.c.l.b16 %v1322
  %v1355 = vunpack.c.l.b16 %v1323
  %v1356 = vunpack.c.l.b16 %v1324
  %v1357 = vunpack.c.l.b16 %v1325
  %v1358 = vunpack.c.l.b16 %v1326
  %v1359 = vunpack.c.l.b16 %v1327
  %v1360 = vunpack.c.l.b16 %v1328
  %v1361 = vpack.c.b16 %v1346, %v1345
  %v1362 = vpack.c.b16 %v1348, %v1347
  %v1363 = vpack.c.b16 %v1350, %v1349
  %v1364 = vpack.c.b16 %v1352, %v1351
  %v1365 = vpack.c.b16 %v1354, %v1353
  %v1366 = vpack.c.b16 %v1356, %v1355
  %v1367 = vpack.c.b16 %v1358, %v1357
  %v1368 = vpack.c.b16 %v1360, %v1359
  %1377 = vmatprep.subr.bf16.mxu0 0
  %1378 = vmatpush1.bf16.msra.mxu0 %v1361
  %1379 = vmatprep.subr.bf16.mxu0 0
  %1380 = vmatpush1.bf16.msra.mxu0 %v1362
  %1381 = vmatprep.subr.bf16.mxu0 0
  %1382 = vmatpush1.bf16.msra.mxu0 %v1363
  %1383 = vmatprep.subr.bf16.mxu0 0
  %1384 = vmatpush1.bf16.msra.mxu0 %v1364
  %1385 = vmatprep.subr.bf16.mxu0 0
  %1386 = vmatpush1.bf16.msra.mxu0 %v1365
  %1387 = vmatprep.subr.bf16.mxu0 0
  %1388 = vmatpush1.bf16.msra.mxu0 %v1366
  %1389 = vmatprep.subr.bf16.mxu0 0
  %1390 = vmatpush1.bf16.msra.mxu0 %v1367
  %1391 = vmatprep.subr.bf16.mxu0 0
  %1392 = vmatpush1.bf16.msra.mxu0 %v1368
  %1393 = vmatprep.subr.bf16.mxu0 0
  %1394 = vmatpush1.bf16.msra.mxu0 0
  %1395 = vmatprep.subr.bf16.mxu0 0
  %1396 = vmatpush1.bf16.msra.mxu0 0
  %1397 = vmatprep.subr.bf16.mxu0 0
  %1398 = vmatpush1.bf16.msra.mxu0 0
  %1399 = vmatprep.subr.bf16.mxu0 0
  %1400 = vmatpush1.bf16.msra.mxu0 0
  %1401 = vmatprep.subr.bf16.mxu0 0
  %1402 = vmatpush1.bf16.msra.mxu0 0
  %1403 = vmatprep.subr.bf16.mxu0 0
  %1404 = vmatpush1.bf16.msra.mxu0 0
  %1405 = vmatprep.subr.bf16.mxu0 0
  %1406 = vmatpush1.bf16.msra.mxu0 0
  %1407 = vmatprep.subr.bf16.mxu0 0
  %1408 = vmatpush1.bf16.msra.mxu0 0
  %1409 = vmatprep.mubr.bf16.mxu0 0
  %1410 = vmatmul.mubr.bf16.gmra.mrb[0].mxu0 %v1305
  %v1411 = vpop.f32.mrb[0].mxu0
  %v1412 = vadd.f32 0.0, %v1411
  %v1413 = vpop.f32.mrb[0].mxu0
  %v1414 = vpop.f32.mrb[0].mxu0
  %v1415 = vadd.f32 0.0, %v1414
  %v1416 = vpop.f32.mrb[0].mxu0
  %1417 = vmatprep.mubr.bf16.mxu0 0
  %1418 = vmatmul.mubr.bf16.gmra.mrb[0].mxu0 %v1306
  %v1419 = vpop.f32.mrb[0].mxu0
  %v1420 = vadd.f32 0.0, %v1419
  %v1421 = vpop.f32.mrb[0].mxu0
  %v1422 = vpop.f32.mrb[0].mxu0
  %v1423 = vadd.f32 0.0, %v1422
  %v1424 = vpop.f32.mrb[0].mxu0
  %1425 = vmatprep.mubr.bf16.mxu0 0
  %1426 = vmatmul.mubr.bf16.gmra.mrb[0].mxu0 %v1307
  %v1427 = vpop.f32.mrb[0].mxu0
  %v1428 = vadd.f32 0.0, %v1427
  %v1429 = vpop.f32.mrb[0].mxu0
  %v1430 = vpop.f32.mrb[0].mxu0
  %v1431 = vadd.f32 0.0, %v1430
  %v1432 = vpop.f32.mrb[0].mxu0
  %1433 = vmatprep.mubr.bf16.mxu0 0
  %1434 = vmatmul.mubr.bf16.gmra.mrb[0].mxu0 %v1308
  %v1435 = vpop.f32.mrb[0].mxu0
  %v1436 = vadd.f32 0.0, %v1435
  %v1437 = vpop.f32.mrb[0].mxu0
  %v1438 = vpop.f32.mrb[0].mxu0
  %v1439 = vadd.f32 0.0, %v1438
  %v1440 = vpop.f32.mrb[0].mxu0
  %1441 = vmatprep.mubr.bf16.mxu0 0
  %1442 = vmatmul.mubr.bf16.gmra.mrb[0].mxu0 %v1309
  %v1443 = vpop.f32.mrb[0].mxu0
  %v1444 = vadd.f32 0.0, %v1443
  %v1445 = vpop.f32.mrb[0].mxu0
  %v1446 = vpop.f32.mrb[0].mxu0
  %v1447 = vadd.f32 0.0, %v1446
  %v1448 = vpop.f32.mrb[0].mxu0
  %1449 = vmatprep.mubr.bf16.mxu0 0
  %1450 = vmatmul.mubr.bf16.gmra.mrb[0].mxu0 %v1310
  %v1451 = vpop.f32.mrb[0].mxu0
  %v1452 = vadd.f32 0.0, %v1451
  %v1453 = vpop.f32.mrb[0].mxu0
  %v1454 = vpop.f32.mrb[0].mxu0
  %v1455 = vadd.f32 0.0, %v1454
  %v1456 = vpop.f32.mrb[0].mxu0
  %1457 = vmatprep.mubr.bf16.mxu0 0
  %1458 = vmatmul.mubr.bf16.gmra.mrb[0].mxu0 %v1311
  %v1459 = vpop.f32.mrb[0].mxu0
  %v1460 = vadd.f32 0.0, %v1459
  %v1461 = vpop.f32.mrb[0].mxu0
  %v1462 = vpop.f32.mrb[0].mxu0
  %v1463 = vadd.f32 0.0, %v1462
  %v1464 = vpop.f32.mrb[0].mxu0
  %1465 = vmatprep.mubr.bf16.mxu0 0
  %1466 = vmatmul.mubr.bf16.gmra.mrb[0].mxu0 %v1312
  %v1467 = vpop.f32.mrb[0].mxu0
  %v1468 = vadd.f32 0.0, %v1467
  %v1469 = vpop.f32.mrb[0].mxu0
  %v1470 = vpop.f32.mrb[0].mxu0
  %v1471 = vadd.f32 0.0, %v1470
  %v1472 = vpop.f32.mrb[0].mxu0
  %1473 = vdwg.mxu0
  %v1474 = vpack.c.bf16 %v1415, %v1412
  %v1475 = vpack.c.bf16 %v1423, %v1420
  %v1476 = vpack.c.bf16 %v1431, %v1428
  %v1477 = vpack.c.bf16 %v1439, %v1436
  %v1478 = vpack.c.bf16 %v1447, %v1444
  %v1479 = vpack.c.bf16 %v1455, %v1452
  %v1480 = vpack.c.bf16 %v1463, %v1460
  %v1481 = vpack.c.bf16 %v1471, %v1468
  %v1482 = vld [vmem:[%s4 + $0x4] ss:$0 sm:$0xff]
  %1483 = vmatprep.subr.bf16.mxu0 0
  %1484 = vmatpush1.bf16.msra.mxu0 %v1474
  %1485 = vmatprep.subr.bf16.mxu0 0
  %1486 = vmatpush1.bf16.msra.mxu0 %v1475
  %1487 = vmatprep.subr.bf16.mxu0 0
  %1488 = vmatpush1.bf16.msra.mxu0 %v1476
  %1489 = vmatprep.subr.bf16.mxu0 0
  %1490 = vmatpush1.bf16.msra.mxu0 %v1477
  %1491 = vmatprep.subr.bf16.mxu0 0
  %1492 = vmatpush1.bf16.msra.mxu0 %v1478
  %1493 = vmatprep.subr.bf16.mxu0 0
  %1494 = vmatpush1.bf16.msra.mxu0 %v1479
  %1495 = vmatprep.subr.bf16.mxu0 0
  %1496 = vmatpush1.bf16.msra.mxu0 %v1480
  %1497 = vmatprep.subr.bf16.mxu0 0
  %1498 = vmatpush1.bf16.msra.mxu0 %v1481
  %1499 = vmatprep.subr.bf16.mxu0 0
  %1500 = vmatpush1.bf16.msra.mxu0 0
  %1501 = vmatprep.subr.bf16.mxu0 0
  %1502 = vmatpush1.bf16.msra.mxu0 0
  %1503 = vmatprep.subr.bf16.mxu0 0
  %1504 = vmatpush1.bf16.msra.mxu0 0
  %1505 = vmatprep.subr.bf16.mxu0 0
  %1506 = vmatpush1.bf16.msra.mxu0 0
  %1507 = vmatprep.subr.bf16.mxu0 0
  %1508 = vmatpush1.bf16.msra.mxu0 0
  %1509 = vmatprep.subr.bf16.mxu0 0
  %1510 = vmatpush1.bf16.msra.mxu0 0
  %1511 = vmatprep.subr.bf16.mxu0 0
  %1512 = vmatpush1.bf16.msra.mxu0 0
  %1513 = vmatprep.subr.bf16.mxu0 0
  %1514 = vmatpush1.bf16.msra.mxu0 0
  %1515 = vmatprep.mubr.bf16.mxu0 0
  %1516 = vmatmul.mubr.bf16.gmra.mrb[0].mxu0 %v303
  %v1517 = vpop.f32.mrb[0].mxu0
  %v1518 = vadd.f32 %v1482, %v1517
  %v1519 = vpop.f32.mrb[0].mxu0
  %v1520 = vpop.f32.mrb[0].mxu0
  %v1521 = vadd.f32 %v1482, %v1520
  %v1522 = vpop.f32.mrb[0].mxu0
  %1523 = vmatprep.mubr.bf16.mxu0 0
  %1524 = vmatmul.mubr.bf16.gmra.mrb[0].mxu0 %v304
  %v1525 = vpop.f32.mrb[0].mxu0
  %v1526 = vadd.f32 %v1482, %v1525
  %v1527 = vpop.f32.mrb[0].mxu0
  %v1528 = vpop.f32.mrb[0].mxu0
  %v1529 = vadd.f32 %v1482, %v1528
  %v1530 = vpop.f32.mrb[0].mxu0
  %1531 = vmatprep.mubr.bf16.mxu0 0
  %1532 = vmatmul.mubr.bf16.gmra.mrb[0].mxu0 %v305
  %v1533 = vpop.f32.mrb[0].mxu0
  %v1534 = vadd.f32 %v1482, %v1533
  %v1535 = vpop.f32.mrb[0].mxu0
  %v1536 = vpop.f32.mrb[0].mxu0
  %v1537 = vadd.f32 %v1482, %v1536
  %v1538 = vpop.f32.mrb[0].mxu0
  %1539 = vmatprep.mubr.bf16.mxu0 0
  %1540 = vmatmul.mubr.bf16.gmra.mrb[0].mxu0 %v306
  %v1541 = vpop.f32.mrb[0].mxu0
  %v1542 = vadd.f32 %v1482, %v1541
  %v1543 = vpop.f32.mrb[0].mxu0
  %v1544 = vpop.f32.mrb[0].mxu0
  %v1545 = vadd.f32 %v1482, %v1544
  %v1546 = vpop.f32.mrb[0].mxu0
  %1547 = vmatprep.mubr.bf16.mxu0 0
  %1548 = vmatmul.mubr.bf16.gmra.mrb[0].mxu0 %v307
  %v1549 = vpop.f32.mrb[0].mxu0
  %v1550 = vadd.f32 %v1482, %v1549
  %v1551 = vpop.f32.mrb[0].mxu0
  %v1552 = vpop.f32.mrb[0].mxu0
  %v1553 = vadd.f32 %v1482, %v1552
  %v1554 = vpop.f32.mrb[0].mxu0
  %1555 = vmatprep.mubr.bf16.mxu0 0
  %1556 = vmatmul.mubr.bf16.gmra.mrb[0].mxu0 %v308
  %v1557 = vpop.f32.mrb[0].mxu0
  %v1558 = vadd.f32 %v1482, %v1557
  %v1559 = vpop.f32.mrb[0].mxu0
  %v1560 = vpop.f32.mrb[0].mxu0
  %v1561 = vadd.f32 %v1482, %v1560
  %v1562 = vpop.f32.mrb[0].mxu0
  %1563 = vmatprep.mubr.bf16.mxu0 0
  %1564 = vmatmul.mubr.bf16.gmra.mrb[0].mxu0 %v309
  %v1565 = vpop.f32.mrb[0].mxu0
  %v1566 = vadd.f32 %v1482, %v1565
  %v1567 = vpop.f32.mrb[0].mxu0
  %v1568 = vpop.f32.mrb[0].mxu0
  %v1569 = vadd.f32 %v1482, %v1568
  %v1570 = vpop.f32.mrb[0].mxu0
  %1571 = vmatprep.mubr.bf16.mxu0 0
  %1572 = vmatmul.mubr.bf16.gmra.mrb[0].mxu0 %v310
  %v1573 = vpop.f32.mrb[0].mxu0
  %v1574 = vadd.f32 %v1482, %v1573
  %v1575 = vpop.f32.mrb[0].mxu0
  %v1576 = vpop.f32.mrb[0].mxu0
  %v1577 = vadd.f32 %v1482, %v1576
  %v1578 = vpop.f32.mrb[0].mxu0
  %1579 = vdwg.mxu0
  %v1580 = vtanh.pop %v1518
  %v1581 = vtanh.pop %v1521
  %v1582 = vtanh.pop %v1526
  %v1583 = vtanh.pop %v1529
  %v1584 = vtanh.pop %v1534
  %v1585 = vtanh.pop %v1537
  %v1586 = vtanh.pop %v1542
  %v1587 = vtanh.pop %v1545
  %v1588 = vtanh.pop %v1550
  %v1589 = vtanh.pop %v1553
  %v1590 = vtanh.pop %v1558
  %v1591 = vtanh.pop %v1561
  %v1592 = vtanh.pop %v1566
  %v1593 = vtanh.pop %v1569
  %v1594 = vtanh.pop %v1574
  %v1595 = vtanh.pop %v1577
  %v1596 = vpack.c.bf16 %v1581, %v1580
  %v1597 = vpack.c.bf16 %v1583, %v1582
  %v1598 = vpack.c.bf16 %v1585, %v1584
  %v1599 = vpack.c.bf16 %v1587, %v1586
  %v1600 = vpack.c.bf16 %v1589, %v1588
  %v1601 = vpack.c.bf16 %v1591, %v1590
  %v1602 = vpack.c.bf16 %v1593, %v1592
  %v1603 = vpack.c.bf16 %v1595, %v1594
  %v1604 = vld [vmem:[%s3] sm:$0xff]
  %v1605 = vld [vmem:[%s3 + $0x8] sm:$0xff]
  %v1606 = vld [vmem:[%s3 + $0x10] sm:$0xff]
  %v1607 = vld [vmem:[%s3 + $0x18] sm:$0xff]
  %v1608 = vld [vmem:[%s3 + $0x20] sm:$0xff]
  %v1609 = vld [vmem:[%s3 + $0x28] sm:$0xff]
  %v1610 = vld [vmem:[%s3 + $0x30] sm:$0xff]
  %v1611 = vld [vmem:[%s3 + $0x38] sm:$0xff]
  %v1612 = vld [vmem:[%s3 + $0x40] sm:$0xff]
  %v1613 = vld [vmem:[%s3 + $0x48] sm:$0xff]
  %v1614 = vld [vmem:[%s3 + $0x50] sm:$0xff]
  %v1615 = vld [vmem:[%s3 + $0x58] sm:$0xff]
  %v1616 = vld [vmem:[%s3 + $0x60] sm:$0xff]
  %v1617 = vld [vmem:[%s3 + $0x68] sm:$0xff]
  %v1618 = vld [vmem:[%s3 + $0x70] sm:$0xff]
  %v1619 = vld [vmem:[%s3 + $0x78] sm:$0xff]
  %1620 = vmatprep.subr.bf16.mxu0 0
  %1621 = vmatpush1.bf16.msra.mxu0 %v1596
  %1622 = vmatprep.subr.bf16.mxu0 0
  %1623 = vmatpush1.bf16.msra.mxu0 %v1597
  %1624 = vmatprep.subr.bf16.mxu0 0
  %1625 = vmatpush1.bf16.msra.mxu0 %v1598
  %1626 = vmatprep.subr.bf16.mxu0 0
  %1627 = vmatpush1.bf16.msra.mxu0 %v1599
  %1628 = vmatprep.subr.bf16.mxu0 0
  %1629 = vmatpush1.bf16.msra.mxu0 %v1600
  %1630 = vmatprep.subr.bf16.mxu0 0
  %1631 = vmatpush1.bf16.msra.mxu0 %v1601
  %1632 = vmatprep.subr.bf16.mxu0 0
  %1633 = vmatpush1.bf16.msra.mxu0 %v1602
  %1634 = vmatprep.subr.bf16.mxu0 0
  %1635 = vmatpush1.bf16.msra.mxu0 %v1603
  %1636 = vmatprep.subr.bf16.mxu0 0
  %1637 = vmatpush1.bf16.msra.mxu0 0
  %1638 = vmatprep.subr.bf16.mxu0 0
  %1639 = vmatpush1.bf16.msra.mxu0 0
  %1640 = vmatprep.subr.bf16.mxu0 0
  %1641 = vmatpush1.bf16.msra.mxu0 0
  %1642 = vmatprep.subr.bf16.mxu0 0
  %1643 = vmatpush1.bf16.msra.mxu0 0
  %1644 = vmatprep.subr.bf16.mxu0 0
  %1645 = vmatpush1.bf16.msra.mxu0 0
  %1646 = vmatprep.subr.bf16.mxu0 0
  %1647 = vmatpush1.bf16.msra.mxu0 0
  %1648 = vmatprep.subr.bf16.mxu0 0
  %1649 = vmatpush1.bf16.msra.mxu0 0
  %1650 = vmatprep.subr.bf16.mxu0 0
  %1651 = vmatpush1.bf16.msra.mxu0 0
  %1652 = vmatprep.mubr.bf16.mxu0 0
  %1653 = vmatmul.mubr.bf16.gmra.mrb[0].mxu0 %v303
  %v1654 = vpop.f32.mrb[0].mxu0
  %v1655 = vadd.f32 0.0, %v1654
  %v1656 = vpop.f32.mrb[0].mxu0
  %v1657 = vpop.f32.mrb[0].mxu0
  %v1658 = vadd.f32 0.0, %v1657
  %v1659 = vpop.f32.mrb[0].mxu0
  %1660 = vmatprep.mubr.bf16.mxu0 0
  %1661 = vmatmul.mubr.bf16.gmra.mrb[0].mxu0 %v304
  %v1662 = vpop.f32.mrb[0].mxu0
  %v1663 = vadd.f32 0.0, %v1662
  %v1664 = vpop.f32.mrb[0].mxu0
  %v1665 = vpop.f32.mrb[0].mxu0
  %v1666 = vadd.f32 0.0, %v1665
  %v1667 = vpop.f32.mrb[0].mxu0
  %1668 = vmatprep.mubr.bf16.mxu0 0
  %1669 = vmatmul.mubr.bf16.gmra.mrb[0].mxu0 %v305
  %v1670 = vpop.f32.mrb[0].mxu0
  %v1671 = vadd.f32 0.0, %v1670
  %v1672 = vpop.f32.mrb[0].mxu0
  %v1673 = vpop.f32.mrb[0].mxu0
  %v1674 = vadd.f32 0.0, %v1673
  %v1675 = vpop.f32.mrb[0].mxu0
  %1676 = vmatprep.mubr.bf16.mxu0 0
  %1677 = vmatmul.mubr.bf16.gmra.mrb[0].mxu0 %v306
  %v1678 = vpop.f32.mrb[0].mxu0
  %v1679 = vadd.f32 0.0, %v1678
  %v1680 = vpop.f32.mrb[0].mxu0
  %v1681 = vpop.f32.mrb[0].mxu0
  %v1682 = vadd.f32 0.0, %v1681
  %v1683 = vpop.f32.mrb[0].mxu0
  %1684 = vmatprep.mubr.bf16.mxu0 0
  %1685 = vmatmul.mubr.bf16.gmra.mrb[0].mxu0 %v307
  %v1686 = vpop.f32.mrb[0].mxu0
  %v1687 = vadd.f32 0.0, %v1686
  %v1688 = vpop.f32.mrb[0].mxu0
  %v1689 = vpop.f32.mrb[0].mxu0
  %v1690 = vadd.f32 0.0, %v1689
  %v1691 = vpop.f32.mrb[0].mxu0
  %1692 = vmatprep.mubr.bf16.mxu0 0
  %1693 = vmatmul.mubr.bf16.gmra.mrb[0].mxu0 %v308
  %v1694 = vpop.f32.mrb[0].mxu0
  %v1695 = vadd.f32 0.0, %v1694
  %v1696 = vpop.f32.mrb[0].mxu0
  %v1697 = vpop.f32.mrb[0].mxu0
  %v1698 = vadd.f32 0.0, %v1697
  %v1699 = vpop.f32.mrb[0].mxu0
  %1700 = vmatprep.mubr.bf16.mxu0 0
  %1701 = vmatmul.mubr.bf16.gmra.mrb[0].mxu0 %v309
  %v1702 = vpop.f32.mrb[0].mxu0
  %v1703 = vadd.f32 0.0, %v1702
  %v1704 = vpop.f32.mrb[0].mxu0
  %v1705 = vpop.f32.mrb[0].mxu0
  %v1706 = vadd.f32 0.0, %v1705
  %v1707 = vpop.f32.mrb[0].mxu0
  %1708 = vmatprep.mubr.bf16.mxu0 0
  %1709 = vmatmul.mubr.bf16.gmra.mrb[0].mxu0 %v310
  %v1710 = vpop.f32.mrb[0].mxu0
  %v1711 = vadd.f32 0.0, %v1710
  %v1712 = vpop.f32.mrb[0].mxu0
  %v1713 = vpop.f32.mrb[0].mxu0
  %v1714 = vadd.f32 0.0, %v1713
  %v1715 = vpop.f32.mrb[0].mxu0
  %1716 = vdwg.mxu0
  %v1717 = vpack.c.bf16 %v1658, %v1655
  %v1718 = vpack.c.bf16 %v1666, %v1663
  %v1719 = vpack.c.bf16 %v1674, %v1671
  %v1720 = vpack.c.bf16 %v1682, %v1679
  %v1721 = vpack.c.bf16 %v1690, %v1687
  %v1722 = vpack.c.bf16 %v1698, %v1695
  %v1723 = vpack.c.bf16 %v1706, %v1703
  %v1724 = vpack.c.bf16 %v1714, %v1711
  %s1725 = scalar_lea.vmem %s4, 5
  %v1726 = vld [vmem:[%s1725] ss:$8 sm:$0x3]
  %v1728 = vlaneseq
  %v1729 = vshrl.u32 %v1728, 7
  %v1730 = vsub.s32 0, %v1729
  %v1731 = vrot.slane %v1726, %v1730
  %v1732 = vlaneseq
  %v1733 = vshrl.u32 %v1732, 7
  %v1734 = vsub.s32 1, %v1733
  %v1735 = vrot.slane %v1726, %v1734
  %v1754 = vunpack.c.l.b16 %v1604
  %v1755 = vunpack.c.h.b16 %v1604
  %v1756 = vunpack.c.l.b16 %v1605
  %v1757 = vunpack.c.h.b16 %v1605
  %v1758 = vunpack.c.l.b16 %v1606
  %v1759 = vunpack.c.h.b16 %v1606
  %v1760 = vunpack.c.l.b16 %v1607
  %v1761 = vunpack.c.h.b16 %v1607
  %v1762 = vunpack.c.l.b16 %v1608
  %v1763 = vunpack.c.h.b16 %v1608
  %v1764 = vunpack.c.l.b16 %v1609
  %v1765 = vunpack.c.h.b16 %v1609
  %v1766 = vunpack.c.l.b16 %v1610
  %v1767 = vunpack.c.h.b16 %v1610
  %v1768 = vunpack.c.l.b16 %v1611
  %v1769 = vunpack.c.h.b16 %v1611
  %v1770 = vunpack.c.l.b16 %v1612
  %v1771 = vunpack.c.h.b16 %v1612
  %v1772 = vunpack.c.l.b16 %v1613
  %v1773 = vunpack.c.h.b16 %v1613
  %v1774 = vunpack.c.l.b16 %v1614
  %v1775 = vunpack.c.h.b16 %v1614
  %v1776 = vunpack.c.l.b16 %v1615
  %v1777 = vunpack.c.h.b16 %v1615
  %v1778 = vunpack.c.l.b16 %v1616
  %v1779 = vunpack.c.h.b16 %v1616
  %v1780 = vunpack.c.l.b16 %v1617
  %v1781 = vunpack.c.h.b16 %v1617
  %v1782 = vunpack.c.l.b16 %v1618
  %v1783 = vunpack.c.h.b16 %v1618
  %v1784 = vunpack.c.l.b16 %v1619
  %v1785 = vunpack.c.h.b16 %v1619
  %v1786 = vpack.c.b16 %v1756, %v1754
  %v1787 = vpack.c.b16 %v1757, %v1755
  %v1788 = vpack.c.b16 %v1760, %v1758
  %v1789 = vpack.c.b16 %v1761, %v1759
  %v1790 = vpack.c.b16 %v1764, %v1762
  %v1791 = vpack.c.b16 %v1765, %v1763
  %v1792 = vpack.c.b16 %v1768, %v1766
  %v1793 = vpack.c.b16 %v1769, %v1767
  %v1794 = vpack.c.b16 %v1772, %v1770
  %v1795 = vpack.c.b16 %v1773, %v1771
  %v1796 = vpack.c.b16 %v1776, %v1774
  %v1797 = vpack.c.b16 %v1777, %v1775
  %v1798 = vpack.c.b16 %v1780, %v1778
  %v1799 = vpack.c.b16 %v1781, %v1779
  %v1800 = vpack.c.b16 %v1784, %v1782
  %v1801 = vpack.c.b16 %v1785, %v1783
  %1818 = vmatprep.subr.bf16.mxu0 %v1787
  %1819 = vmatpush1.bf16.msra.mxu0 %v1786
  %1820 = vmatprep.subr.bf16.mxu0 %v1789
  %1821 = vmatpush1.bf16.msra.mxu0 %v1788
  %1822 = vmatprep.subr.bf16.mxu0 %v1791
  %1823 = vmatpush1.bf16.msra.mxu0 %v1790
  %1824 = vmatprep.subr.bf16.mxu0 %v1793
  %1825 = vmatpush1.bf16.msra.mxu0 %v1792
  %1826 = vmatprep.subr.bf16.mxu0 %v1795
  %1827 = vmatpush1.bf16.msra.mxu0 %v1794
  %1828 = vmatprep.subr.bf16.mxu0 %v1797
  %1829 = vmatpush1.bf16.msra.mxu0 %v1796
  %1830 = vmatprep.subr.bf16.mxu0 %v1799
  %1831 = vmatpush1.bf16.msra.mxu0 %v1798
  %1832 = vmatprep.subr.bf16.mxu0 %v1801
  %1833 = vmatpush1.bf16.msra.mxu0 %v1800
  %1834 = vmatprep.subr.bf16.mxu0 0
  %1835 = vmatpush1.bf16.msra.mxu0 0
  %1836 = vmatprep.subr.bf16.mxu0 0
  %1837 = vmatpush1.bf16.msra.mxu0 0
  %1838 = vmatprep.subr.bf16.mxu0 0
  %1839 = vmatpush1.bf16.msra.mxu0 0
  %1840 = vmatprep.subr.bf16.mxu0 0
  %1841 = vmatpush1.bf16.msra.mxu0 0
  %1842 = vmatprep.subr.bf16.mxu0 0
  %1843 = vmatpush1.bf16.msra.mxu0 0
  %1844 = vmatprep.subr.bf16.mxu0 0
  %1845 = vmatpush1.bf16.msra.mxu0 0
  %1846 = vmatprep.subr.bf16.mxu0 0
  %1847 = vmatpush1.bf16.msra.mxu0 0
  %1848 = vmatprep.subr.bf16.mxu0 0
  %1849 = vmatpush1.bf16.msra.mxu0 0
  %1850 = vmatprep.mubr.bf16.mxu0 0
  %1851 = vmatmul.mubr.bf16.gmra.mrb[0].mxu0 %v1717
  %v1852 = vpop.f32.mrb[0].mxu0
  %v1853 = vadd.f32 %v1731, %v1852
  %v1854 = vpop.f32.mrb[0].mxu0
  %v1855 = vadd.f32 %v1735, %v1854
  %v1856 = vpop.f32.mrb[0].mxu0
  %v1857 = vadd.f32 %v1731, %v1856
  %v1858 = vpop.f32.mrb[0].mxu0
  %v1859 = vadd.f32 %v1735, %v1858
  %1860 = vmatprep.mubr.bf16.mxu0 0
  %1861 = vmatmul.mubr.bf16.gmra.mrb[0].mxu0 %v1718
  %v1862 = vpop.f32.mrb[0].mxu0
  %v1863 = vadd.f32 %v1731, %v1862
  %v1864 = vpop.f32.mrb[0].mxu0
  %v1865 = vadd.f32 %v1735, %v1864
  %v1866 = vpop.f32.mrb[0].mxu0
  %v1867 = vadd.f32 %v1731, %v1866
  %v1868 = vpop.f32.mrb[0].mxu0
  %v1869 = vadd.f32 %v1735, %v1868
  %1870 = vmatprep.mubr.bf16.mxu0 0
  %1871 = vmatmul.mubr.bf16.gmra.mrb[0].mxu0 %v1719
  %v1872 = vpop.f32.mrb[0].mxu0
  %v1873 = vadd.f32 %v1731, %v1872
  %v1874 = vpop.f32.mrb[0].mxu0
  %v1875 = vadd.f32 %v1735, %v1874
  %v1876 = vpop.f32.mrb[0].mxu0
  %v1877 = vadd.f32 %v1731, %v1876
  %v1878 = vpop.f32.mrb[0].mxu0
  %v1879 = vadd.f32 %v1735, %v1878
  %1880 = vmatprep.mubr.bf16.mxu0 0
  %1881 = vmatmul.mubr.bf16.gmra.mrb[0].mxu0 %v1720
  %v1882 = vpop.f32.mrb[0].mxu0
  %v1883 = vadd.f32 %v1731, %v1882
  %v1884 = vpop.f32.mrb[0].mxu0
  %v1885 = vadd.f32 %v1735, %v1884
  %v1886 = vpop.f32.mrb[0].mxu0
  %v1887 = vadd.f32 %v1731, %v1886
  %v1888 = vpop.f32.mrb[0].mxu0
  %v1889 = vadd.f32 %v1735, %v1888
  %1890 = vmatprep.mubr.bf16.mxu0 0
  %1891 = vmatmul.mubr.bf16.gmra.mrb[0].mxu0 %v1721
  %v1892 = vpop.f32.mrb[0].mxu0
  %v1893 = vadd.f32 %v1731, %v1892
  %v1894 = vpop.f32.mrb[0].mxu0
  %v1895 = vadd.f32 %v1735, %v1894
  %v1896 = vpop.f32.mrb[0].mxu0
  %v1897 = vadd.f32 %v1731, %v1896
  %v1898 = vpop.f32.mrb[0].mxu0
  %v1899 = vadd.f32 %v1735, %v1898
  %1900 = vmatprep.mubr.bf16.mxu0 0
  %1901 = vmatmul.mubr.bf16.gmra.mrb[0].mxu0 %v1722
  %v1902 = vpop.f32.mrb[0].mxu0
  %v1903 = vadd.f32 %v1731, %v1902
  %v1904 = vpop.f32.mrb[0].mxu0
  %v1905 = vadd.f32 %v1735, %v1904
  %v1906 = vpop.f32.mrb[0].mxu0
  %v1907 = vadd.f32 %v1731, %v1906
  %v1908 = vpop.f32.mrb[0].mxu0
  %v1909 = vadd.f32 %v1735, %v1908
  %1910 = vmatprep.mubr.bf16.mxu0 0
  %1911 = vmatmul.mubr.bf16.gmra.mrb[0].mxu0 %v1723
  %v1912 = vpop.f32.mrb[0].mxu0
  %v1913 = vadd.f32 %v1731, %v1912
  %v1914 = vpop.f32.mrb[0].mxu0
  %v1915 = vadd.f32 %v1735, %v1914
  %v1916 = vpop.f32.mrb[0].mxu0
  %v1917 = vadd.f32 %v1731, %v1916
  %v1918 = vpop.f32.mrb[0].mxu0
  %v1919 = vadd.f32 %v1735, %v1918
  %1920 = vmatprep.mubr.bf16.mxu0 0
  %1921 = vmatmul.mubr.bf16.gmra.mrb[0].mxu0 %v1724
  %v1922 = vpop.f32.mrb[0].mxu0
  %v1923 = vadd.f32 %v1731, %v1922
  %v1924 = vpop.f32.mrb[0].mxu0
  %v1925 = vadd.f32 %v1735, %v1924
  %v1926 = vpop.f32.mrb[0].mxu0
  %v1927 = vadd.f32 %v1731, %v1926
  %v1928 = vpop.f32.mrb[0].mxu0
  %v1929 = vadd.f32 %v1735, %v1928
  %1930 = vdwg.mxu0
  %v1931 = vtanh.pop %v1853
  %v1932 = vtanh.pop %v1855
  %v1933 = vtanh.pop %v1857
  %v1934 = vtanh.pop %v1859
  %v1935 = vtanh.pop %v1863
  %v1936 = vtanh.pop %v1865
  %v1937 = vtanh.pop %v1867
  %v1938 = vtanh.pop %v1869
  %v1939 = vtanh.pop %v1873
  %v1940 = vtanh.pop %v1875
  %v1941 = vtanh.pop %v1877
  %v1942 = vtanh.pop %v1879
  %v1943 = vtanh.pop %v1883
  %v1944 = vtanh.pop %v1885
  %v1945 = vtanh.pop %v1887
  %v1946 = vtanh.pop %v1889
  %v1947 = vtanh.pop %v1893
  %v1948 = vtanh.pop %v1895
  %v1949 = vtanh.pop %v1897
  %v1950 = vtanh.pop %v1899
  %v1951 = vtanh.pop %v1903
  %v1952 = vtanh.pop %v1905
  %v1953 = vtanh.pop %v1907
  %v1954 = vtanh.pop %v1909
  %v1955 = vtanh.pop %v1913
  %v1956 = vtanh.pop %v1915
  %v1957 = vtanh.pop %v1917
  %v1958 = vtanh.pop %v1919
  %v1959 = vtanh.pop %v1923
  %v1960 = vtanh.pop %v1925
  %v1961 = vtanh.pop %v1927
  %v1962 = vtanh.pop %v1929
  %v1963 = vpack.c.bf16 %v1933, %v1931
  %v1964 = vpack.c.bf16 %v1934, %v1932
  %v1965 = vpack.c.bf16 %v1937, %v1935
  %v1966 = vpack.c.bf16 %v1938, %v1936
  %v1967 = vpack.c.bf16 %v1941, %v1939
  %v1968 = vpack.c.bf16 %v1942, %v1940
  %v1969 = vpack.c.bf16 %v1945, %v1943
  %v1970 = vpack.c.bf16 %v1946, %v1944
  %v1971 = vpack.c.bf16 %v1949, %v1947
  %v1972 = vpack.c.bf16 %v1950, %v1948
  %v1973 = vpack.c.bf16 %v1953, %v1951
  %v1974 = vpack.c.bf16 %v1954, %v1952
  %v1975 = vpack.c.bf16 %v1957, %v1955
  %v1976 = vpack.c.bf16 %v1958, %v1956
  %v1977 = vpack.c.bf16 %v1961, %v1959
  %v1978 = vpack.c.bf16 %v1962, %v1960
  %v1979 = vld [vmem:[%s2 + $0x140] sm:$0xf]
  %v1980 = vld [vmem:[%s2 + $0x144] sm:$0xf]
  %v1981 = vld [vmem:[%s2 + $0x148] sm:$0xf]
  %v1982 = vld [vmem:[%s2 + $0x14c] sm:$0xf]
  %v1983 = vld [vmem:[%s2 + $0x150] sm:$0xf]
  %v1984 = vld [vmem:[%s2 + $0x154] sm:$0xf]
  %v1985 = vld [vmem:[%s2 + $0x158] sm:$0xf]
  %v1986 = vld [vmem:[%s2 + $0x15c] sm:$0xf]
  %v1987 = vld [vmem:[%s2 + $0x160] sm:$0xf]
  %v1988 = vld [vmem:[%s2 + $0x164] sm:$0xf]
  %v1989 = vld [vmem:[%s2 + $0x168] sm:$0xf]
  %v1990 = vld [vmem:[%s2 + $0x16c] sm:$0xf]
  %v1991 = vld [vmem:[%s2 + $0x170] sm:$0xf]
  %v1992 = vld [vmem:[%s2 + $0x174] sm:$0xf]
  %v1993 = vld [vmem:[%s2 + $0x178] sm:$0xf]
  %v1994 = vld [vmem:[%s2 + $0x17c] sm:$0xf]
  %v1995 = vld [vmem:[%s2 + $0x180] sm:$0xf]
  %v1996 = vld [vmem:[%s2 + $0x184] sm:$0xf]
  %v1997 = vld [vmem:[%s2 + $0x188] sm:$0xf]
  %v1998 = vld [vmem:[%s2 + $0x18c] sm:$0xf]
  %v1999 = vld [vmem:[%s2 + $0x190] sm:$0xf]
  %v2000 = vld [vmem:[%s2 + $0x194] sm:$0xf]
  %v2001 = vld [vmem:[%s2 + $0x198] sm:$0xf]
  %v2002 = vld [vmem:[%s2 + $0x19c] sm:$0xf]
  %v2003 = vld [vmem:[%s2 + $0x1a0] sm:$0xf]
  %v2004 = vld [vmem:[%s2 + $0x1a4] sm:$0xf]
  %v2005 = vld [vmem:[%s2 + $0x1a8] sm:$0xf]
  %v2006 = vld [vmem:[%s2 + $0x1ac] sm:$0xf]
  %v2007 = vld [vmem:[%s2 + $0x1b0] sm:$0xf]
  %v2008 = vld [vmem:[%s2 + $0x1b4] sm:$0xf]
  %v2009 = vld [vmem:[%s2 + $0x1b8] sm:$0xf]
  %v2010 = vld [vmem:[%s2 + $0x1bc] sm:$0xf]
  %v2011 = vld [vmem:[%s2 + $0x1c0] sm:$0xf]
  %v2012 = vld [vmem:[%s2 + $0x1c4] sm:$0xf]
  %v2013 = vld [vmem:[%s2 + $0x1c8] sm:$0xf]
  %v2014 = vld [vmem:[%s2 + $0x1cc] sm:$0xf]
  %v2015 = vld [vmem:[%s2 + $0x1d0] sm:$0xf]
  %v2016 = vld [vmem:[%s2 + $0x1d4] sm:$0xf]
  %v2017 = vld [vmem:[%s2 + $0x1d8] sm:$0xf]
  %v2018 = vld [vmem:[%s2 + $0x1dc] sm:$0xf]
  %v2019 = vld [vmem:[%s2 + $0x1e0] sm:$0xf]
  %v2020 = vld [vmem:[%s2 + $0x1e4] sm:$0xf]
  %v2021 = vld [vmem:[%s2 + $0x1e8] sm:$0xf]
  %v2022 = vld [vmem:[%s2 + $0x1ec] sm:$0xf]
  %v2023 = vld [vmem:[%s2 + $0x1f0] sm:$0xf]
  %v2024 = vld [vmem:[%s2 + $0x1f4] sm:$0xf]
  %v2025 = vld [vmem:[%s2 + $0x1f8] sm:$0xf]
  %v2026 = vld [vmem:[%s2 + $0x1fc] sm:$0xf]
  %v2043 = vunpack.c.l.b16 %v2011
  %v2044 = vunpack.c.l.b16 %v2012
  %v2045 = vunpack.c.l.b16 %v2013
  %v2046 = vunpack.c.l.b16 %v2014
  %v2047 = vunpack.c.l.b16 %v2015
  %v2048 = vunpack.c.l.b16 %v2016
  %v2049 = vunpack.c.l.b16 %v2017
  %v2050 = vunpack.c.l.b16 %v2018
  %v2051 = vunpack.c.l.b16 %v2019
  %v2052 = vunpack.c.l.b16 %v2020
  %v2053 = vunpack.c.l.b16 %v2021
  %v2054 = vunpack.c.l.b16 %v2022
  %v2055 = vunpack.c.l.b16 %v2023
  %v2056 = vunpack.c.l.b16 %v2024
  %v2057 = vunpack.c.l.b16 %v2025
  %v2058 = vunpack.c.l.b16 %v2026
  %v2059 = vpack.c.b16 %v2044, %v2043
  %v2060 = vpack.c.b16 %v2046, %v2045
  %v2061 = vpack.c.b16 %v2048, %v2047
  %v2062 = vpack.c.b16 %v2050, %v2049
  %v2063 = vpack.c.b16 %v2052, %v2051
  %v2064 = vpack.c.b16 %v2054, %v2053
  %v2065 = vpack.c.b16 %v2056, %v2055
  %v2066 = vpack.c.b16 %v2058, %v2057
  %2075 = vmatprep.subr.bf16.mxu0 0
  %2076 = vmatpush1.bf16.msra.mxu0 %v2059
  %2077 = vmatprep.subr.bf16.mxu0 0
  %2078 = vmatpush1.bf16.msra.mxu0 %v2060
  %2079 = vmatprep.subr.bf16.mxu0 0
  %2080 = vmatpush1.bf16.msra.mxu0 %v2061
  %2081 = vmatprep.subr.bf16.mxu0 0
  %2082 = vmatpush1.bf16.msra.mxu0 %v2062
  %2083 = vmatprep.subr.bf16.mxu0 0
  %2084 = vmatpush1.bf16.msra.mxu0 %v2063
  %2085 = vmatprep.subr.bf16.mxu0 0
  %2086 = vmatpush1.bf16.msra.mxu0 %v2064
  %2087 = vmatprep.subr.bf16.mxu0 0
  %2088 = vmatpush1.bf16.msra.mxu0 %v2065
  %2089 = vmatprep.subr.bf16.mxu0 0
  %2090 = vmatpush1.bf16.msra.mxu0 %v2066
  %2091 = vmatprep.subr.bf16.mxu0 0
  %2092 = vmatpush1.bf16.msra.mxu0 0
  %2093 = vmatprep.subr.bf16.mxu0 0
  %2094 = vmatpush1.bf16.msra.mxu0 0
  %2095 = vmatprep.subr.bf16.mxu0 0
  %2096 = vmatpush1.bf16.msra.mxu0 0
  %2097 = vmatprep.subr.bf16.mxu0 0
  %2098 = vmatpush1.bf16.msra.mxu0 0
  %2099 = vmatprep.subr.bf16.mxu0 0
  %2100 = vmatpush1.bf16.msra.mxu0 0
  %2101 = vmatprep.subr.bf16.mxu0 0
  %2102 = vmatpush1.bf16.msra.mxu0 0
  %2103 = vmatprep.subr.bf16.mxu0 0
  %2104 = vmatpush1.bf16.msra.mxu0 0
  %2105 = vmatprep.subr.bf16.mxu0 0
  %2106 = vmatpush1.bf16.msra.mxu0 0
  %2107 = vmatprep.mubr.bf16.mxu0 0
  %2108 = vmatmul.mubr.bf16.gmra.mrb[0].mxu0 %v101
  %v2109 = vpop.f32.mrb[0].mxu0
  %v2110 = vadd.f32 0.0, %v2109
  %v2111 = vpop.f32.mrb[0].mxu0
  %v2112 = vpop.f32.mrb[0].mxu0
  %v2113 = vadd.f32 0.0, %v2112
  %v2114 = vpop.f32.mrb[0].mxu0
  %2115 = vmatprep.mubr.bf16.mxu0 0
  %2116 = vmatmul.mubr.bf16.gmra.mrb[0].mxu0 %v102
  %v2117 = vpop.f32.mrb[0].mxu0
  %v2118 = vadd.f32 0.0, %v2117
  %v2119 = vpop.f32.mrb[0].mxu0
  %v2120 = vpop.f32.mrb[0].mxu0
  %v2121 = vadd.f32 0.0, %v2120
  %v2122 = vpop.f32.mrb[0].mxu0
  %2123 = vmatprep.mubr.bf16.mxu0 0
  %2124 = vmatmul.mubr.bf16.gmra.mrb[0].mxu0 %v103
  %v2125 = vpop.f32.mrb[0].mxu0
  %v2126 = vadd.f32 0.0, %v2125
  %v2127 = vpop.f32.mrb[0].mxu0
  %v2128 = vpop.f32.mrb[0].mxu0
  %v2129 = vadd.f32 0.0, %v2128
  %v2130 = vpop.f32.mrb[0].mxu0
  %2131 = vmatprep.mubr.bf16.mxu0 0
  %2132 = vmatmul.mubr.bf16.gmra.mrb[0].mxu0 %v104
  %v2133 = vpop.f32.mrb[0].mxu0
  %v2134 = vadd.f32 0.0, %v2133
  %v2135 = vpop.f32.mrb[0].mxu0
  %v2136 = vpop.f32.mrb[0].mxu0
  %v2137 = vadd.f32 0.0, %v2136
  %v2138 = vpop.f32.mrb[0].mxu0
  %2139 = vmatprep.mubr.bf16.mxu0 0
  %2140 = vmatmul.mubr.bf16.gmra.mrb[0].mxu0 %v105
  %v2141 = vpop.f32.mrb[0].mxu0
  %v2142 = vadd.f32 0.0, %v2141
  %v2143 = vpop.f32.mrb[0].mxu0
  %v2144 = vpop.f32.mrb[0].mxu0
  %v2145 = vadd.f32 0.0, %v2144
  %v2146 = vpop.f32.mrb[0].mxu0
  %2147 = vmatprep.mubr.bf16.mxu0 0
  %2148 = vmatmul.mubr.bf16.gmra.mrb[0].mxu0 %v106
  %v2149 = vpop.f32.mrb[0].mxu0
  %v2150 = vadd.f32 0.0, %v2149
  %v2151 = vpop.f32.mrb[0].mxu0
  %v2152 = vpop.f32.mrb[0].mxu0
  %v2153 = vadd.f32 0.0, %v2152
  %v2154 = vpop.f32.mrb[0].mxu0
  %2155 = vmatprep.mubr.bf16.mxu0 0
  %2156 = vmatmul.mubr.bf16.gmra.mrb[0].mxu0 %v107
  %v2157 = vpop.f32.mrb[0].mxu0
  %v2158 = vadd.f32 0.0, %v2157
  %v2159 = vpop.f32.mrb[0].mxu0
  %v2160 = vpop.f32.mrb[0].mxu0
  %v2161 = vadd.f32 0.0, %v2160
  %v2162 = vpop.f32.mrb[0].mxu0
  %2163 = vmatprep.mubr.bf16.mxu0 0
  %2164 = vmatmul.mubr.bf16.gmra.mrb[0].mxu0 %v108
  %v2165 = vpop.f32.mrb[0].mxu0
  %v2166 = vadd.f32 0.0, %v2165
  %v2167 = vpop.f32.mrb[0].mxu0
  %v2168 = vpop.f32.mrb[0].mxu0
  %v2169 = vadd.f32 0.0, %v2168
  %v2170 = vpop.f32.mrb[0].mxu0
  %2171 = vdwg.mxu0
  %v2204 = vunpack.c.l.b16 %v1979
  %v2205 = vunpack.c.l.b16 %v1980
  %v2206 = vunpack.c.l.b16 %v1981
  %v2207 = vunpack.c.l.b16 %v1982
  %v2208 = vunpack.c.l.b16 %v1983
  %v2209 = vunpack.c.l.b16 %v1984
  %v2210 = vunpack.c.l.b16 %v1985
  %v2211 = vunpack.c.l.b16 %v1986
  %v2212 = vunpack.c.l.b16 %v1987
  %v2213 = vunpack.c.l.b16 %v1988
  %v2214 = vunpack.c.l.b16 %v1989
  %v2215 = vunpack.c.l.b16 %v1990
  %v2216 = vunpack.c.l.b16 %v1991
  %v2217 = vunpack.c.l.b16 %v1992
  %v2218 = vunpack.c.l.b16 %v1993
  %v2219 = vunpack.c.l.b16 %v1994
  %v2220 = vunpack.c.l.b16 %v1995
  %v2221 = vunpack.c.l.b16 %v1996
  %v2222 = vunpack.c.l.b16 %v1997
  %v2223 = vunpack.c.l.b16 %v1998
  %v2224 = vunpack.c.l.b16 %v1999
  %v2225 = vunpack.c.l.b16 %v2000
  %v2226 = vunpack.c.l.b16 %v2001
  %v2227 = vunpack.c.l.b16 %v2002
  %v2228 = vunpack.c.l.b16 %v2003
  %v2229 = vunpack.c.l.b16 %v2004
  %v2230 = vunpack.c.l.b16 %v2005
  %v2231 = vunpack.c.l.b16 %v2006
  %v2232 = vunpack.c.l.b16 %v2007
  %v2233 = vunpack.c.l.b16 %v2008
  %v2234 = vunpack.c.l.b16 %v2009
  %v2235 = vunpack.c.l.b16 %v2010
  %v2236 = vpack.c.b16 %v2205, %v2204
  %v2237 = vpack.c.b16 %v2207, %v2206
  %v2238 = vpack.c.b16 %v2209, %v2208
  %v2239 = vpack.c.b16 %v2211, %v2210
  %v2240 = vpack.c.b16 %v2213, %v2212
  %v2241 = vpack.c.b16 %v2215, %v2214
  %v2242 = vpack.c.b16 %v2217, %v2216
  %v2243 = vpack.c.b16 %v2219, %v2218
  %v2244 = vpack.c.b16 %v2221, %v2220
  %v2245 = vpack.c.b16 %v2223, %v2222
  %v2246 = vpack.c.b16 %v2225, %v2224
  %v2247 = vpack.c.b16 %v2227, %v2226
  %v2248 = vpack.c.b16 %v2229, %v2228
  %v2249 = vpack.c.b16 %v2231, %v2230
  %v2250 = vpack.c.b16 %v2233, %v2232
  %v2251 = vpack.c.b16 %v2235, %v2234
  %2268 = vmatprep.subr.bf16.mxu0 0
  %2269 = vmatpush1.bf16.msra.mxu0 %v2236
  %2270 = vmatprep.subr.bf16.mxu0 0
  %2271 = vmatpush1.bf16.msra.mxu0 %v2237
  %2272 = vmatprep.subr.bf16.mxu0 0
  %2273 = vmatpush1.bf16.msra.mxu0 %v2238
  %2274 = vmatprep.subr.bf16.mxu0 0
  %2275 = vmatpush1.bf16.msra.mxu0 %v2239
  %2276 = vmatprep.subr.bf16.mxu0 0
  %2277 = vmatpush1.bf16.msra.mxu0 %v2240
  %2278 = vmatprep.subr.bf16.mxu0 0
  %2279 = vmatpush1.bf16.msra.mxu0 %v2241
  %2280 = vmatprep.subr.bf16.mxu0 0
  %2281 = vmatpush1.bf16.msra.mxu0 %v2242
  %2282 = vmatprep.subr.bf16.mxu0 0
  %2283 = vmatpush1.bf16.msra.mxu0 %v2243
  %2284 = vmatprep.subr.bf16.mxu0 0
  %2285 = vmatpush1.bf16.msra.mxu0 %v2244
  %2286 = vmatprep.subr.bf16.mxu0 0
  %2287 = vmatpush1.bf16.msra.mxu0 %v2245
  %2288 = vmatprep.subr.bf16.mxu0 0
  %2289 = vmatpush1.bf16.msra.mxu0 %v2246
  %2290 = vmatprep.subr.bf16.mxu0 0
  %2291 = vmatpush1.bf16.msra.mxu0 %v2247
  %2292 = vmatprep.subr.bf16.mxu0 0
  %2293 = vmatpush1.bf16.msra.mxu0 %v2248
  %2294 = vmatprep.subr.bf16.mxu0 0
  %2295 = vmatpush1.bf16.msra.mxu0 %v2249
  %2296 = vmatprep.subr.bf16.mxu0 0
  %2297 = vmatpush1.bf16.msra.mxu0 %v2250
  %2298 = vmatprep.subr.bf16.mxu0 0
  %2299 = vmatpush1.bf16.msra.mxu0 %v2251
  %2300 = vmatprep.mubr.bf16.mxu0 %v1964
  %2301 = vmatmul.mubr.bf16.gmra.mrb[0].mxu0 %v1963
  %v2302 = vpop.f32.mrb[0].mxu0
  %v2303 = vadd.f32 %v2110, %v2302
  %v2304 = vpop.f32.mrb[0].mxu0
  %v2305 = vpop.f32.mrb[0].mxu0
  %v2306 = vadd.f32 %v2113, %v2305
  %v2307 = vpop.f32.mrb[0].mxu0
  %2308 = vmatprep.mubr.bf16.mxu0 %v1966
  %2309 = vmatmul.mubr.bf16.gmra.mrb[0].mxu0 %v1965
  %v2310 = vpop.f32.mrb[0].mxu0
  %v2311 = vadd.f32 %v2118, %v2310
  %v2312 = vpop.f32.mrb[0].mxu0
  %v2313 = vpop.f32.mrb[0].mxu0
  %v2314 = vadd.f32 %v2121, %v2313
  %v2315 = vpop.f32.mrb[0].mxu0
  %2316 = vmatprep.mubr.bf16.mxu0 %v1968
  %2317 = vmatmul.mubr.bf16.gmra.mrb[0].mxu0 %v1967
  %v2318 = vpop.f32.mrb[0].mxu0
  %v2319 = vadd.f32 %v2126, %v2318
  %v2320 = vpop.f32.mrb[0].mxu0
  %v2321 = vpop.f32.mrb[0].mxu0
  %v2322 = vadd.f32 %v2129, %v2321
  %v2323 = vpop.f32.mrb[0].mxu0
  %2324 = vmatprep.mubr.bf16.mxu0 %v1970
  %2325 = vmatmul.mubr.bf16.gmra.mrb[0].mxu0 %v1969
  %v2326 = vpop.f32.mrb[0].mxu0
  %v2327 = vadd.f32 %v2134, %v2326
  %v2328 = vpop.f32.mrb[0].mxu0
  %v2329 = vpop.f32.mrb[0].mxu0
  %v2330 = vadd.f32 %v2137, %v2329
  %v2331 = vpop.f32.mrb[0].mxu0
  %2332 = vmatprep.mubr.bf16.mxu0 %v1972
  %2333 = vmatmul.mubr.bf16.gmra.mrb[0].mxu0 %v1971
  %v2334 = vpop.f32.mrb[0].mxu0
  %v2335 = vadd.f32 %v2142, %v2334
  %v2336 = vpop.f32.mrb[0].mxu0
  %v2337 = vpop.f32.mrb[0].mxu0
  %v2338 = vadd.f32 %v2145, %v2337
  %v2339 = vpop.f32.mrb[0].mxu0
  %2340 = vmatprep.mubr.bf16.mxu0 %v1974
  %2341 = vmatmul.mubr.bf16.gmra.mrb[0].mxu0 %v1973
  %v2342 = vpop.f32.mrb[0].mxu0
  %v2343 = vadd.f32 %v2150, %v2342
  %v2344 = vpop.f32.mrb[0].mxu0
  %v2345 = vpop.f32.mrb[0].mxu0
  %v2346 = vadd.f32 %v2153, %v2345
  %v2347 = vpop.f32.mrb[0].mxu0
  %2348 = vmatprep.mubr.bf16.mxu0 %v1976
  %2349 = vmatmul.mubr.bf16.gmra.mrb[0].mxu0 %v1975
  %v2350 = vpop.f32.mrb[0].mxu0
  %v2351 = vadd.f32 %v2158, %v2350
  %v2352 = vpop.f32.mrb[0].mxu0
  %v2353 = vpop.f32.mrb[0].mxu0
  %v2354 = vadd.f32 %v2161, %v2353
  %v2355 = vpop.f32.mrb[0].mxu0
  %2356 = vmatprep.mubr.bf16.mxu0 %v1978
  %2357 = vmatmul.mubr.bf16.gmra.mrb[0].mxu0 %v1977
  %v2358 = vpop.f32.mrb[0].mxu0
  %v2359 = vadd.f32 %v2166, %v2358
  %v2360 = vpop.f32.mrb[0].mxu0
  %v2361 = vpop.f32.mrb[0].mxu0
  %v2362 = vadd.f32 %v2169, %v2361
  %v2363 = vpop.f32.mrb[0].mxu0
  %2364 = vdwg.mxu0
  %v2365 = vpack.c.bf16 %v2306, %v2303
  %v2366 = vpack.c.bf16 %v2314, %v2311
  %v2367 = vpack.c.bf16 %v2322, %v2319
  %v2368 = vpack.c.bf16 %v2330, %v2327
  %v2369 = vpack.c.bf16 %v2338, %v2335
  %v2370 = vpack.c.bf16 %v2346, %v2343
  %v2371 = vpack.c.bf16 %v2354, %v2351
  %v2372 = vpack.c.bf16 %v2362, %v2359
  %v2373 = vld [vmem:[%s4 + $0x6] ss:$0 sm:$0xff]
  %2374 = vmatprep.subr.bf16.mxu0 0
  %2375 = vmatpush1.bf16.msra.mxu0 %v2365
  %2376 = vmatprep.subr.bf16.mxu0 0
  %2377 = vmatpush1.bf16.msra.mxu0 %v2366
  %2378 = vmatprep.subr.bf16.mxu0 0
  %2379 = vmatpush1.bf16.msra.mxu0 %v2367
  %2380 = vmatprep.subr.bf16.mxu0 0
  %2381 = vmatpush1.bf16.msra.mxu0 %v2368
  %2382 = vmatprep.subr.bf16.mxu0 0
  %2383 = vmatpush1.bf16.msra.mxu0 %v2369
  %2384 = vmatprep.subr.bf16.mxu0 0
  %2385 = vmatpush1.bf16.msra.mxu0 %v2370
  %2386 = vmatprep.subr.bf16.mxu0 0
  %2387 = vmatpush1.bf16.msra.mxu0 %v2371
  %2388 = vmatprep.subr.bf16.mxu0 0
  %2389 = vmatpush1.bf16.msra.mxu0 %v2372
  %2390 = vmatprep.subr.bf16.mxu0 0
  %2391 = vmatpush1.bf16.msra.mxu0 0
  %2392 = vmatprep.subr.bf16.mxu0 0
  %2393 = vmatpush1.bf16.msra.mxu0 0
  %2394 = vmatprep.subr.bf16.mxu0 0
  %2395 = vmatpush1.bf16.msra.mxu0 0
  %2396 = vmatprep.subr.bf16.mxu0 0
  %2397 = vmatpush1.bf16.msra.mxu0 0
  %2398 = vmatprep.subr.bf16.mxu0 0
  %2399 = vmatpush1.bf16.msra.mxu0 0
  %2400 = vmatprep.subr.bf16.mxu0 0
  %2401 = vmatpush1.bf16.msra.mxu0 0
  %2402 = vmatprep.subr.bf16.mxu0 0
  %2403 = vmatpush1.bf16.msra.mxu0 0
  %2404 = vmatprep.subr.bf16.mxu0 0
  %2405 = vmatpush1.bf16.msra.mxu0 0
  %2406 = vmatprep.mubr.bf16.mxu0 0
  %2407 = vmatmul.mubr.bf16.gmra.mrb[0].mxu0 %v303
  %v2408 = vpop.f32.mrb[0].mxu0
  %v2409 = vadd.f32 %v2373, %v2408
  %v2410 = vpop.f32.mrb[0].mxu0
  %v2411 = vpop.f32.mrb[0].mxu0
  %v2412 = vadd.f32 %v2373, %v2411
  %v2413 = vpop.f32.mrb[0].mxu0
  %2414 = vmatprep.mubr.bf16.mxu0 0
  %2415 = vmatmul.mubr.bf16.gmra.mrb[0].mxu0 %v304
  %v2416 = vpop.f32.mrb[0].mxu0
  %v2417 = vadd.f32 %v2373, %v2416
  %v2418 = vpop.f32.mrb[0].mxu0
  %v2419 = vpop.f32.mrb[0].mxu0
  %v2420 = vadd.f32 %v2373, %v2419
  %v2421 = vpop.f32.mrb[0].mxu0
  %2422 = vmatprep.mubr.bf16.mxu0 0
  %2423 = vmatmul.mubr.bf16.gmra.mrb[0].mxu0 %v305
  %v2424 = vpop.f32.mrb[0].mxu0
  %v2425 = vadd.f32 %v2373, %v2424
  %v2426 = vpop.f32.mrb[0].mxu0
  %v2427 = vpop.f32.mrb[0].mxu0
  %v2428 = vadd.f32 %v2373, %v2427
  %v2429 = vpop.f32.mrb[0].mxu0
  %2430 = vmatprep.mubr.bf16.mxu0 0
  %2431 = vmatmul.mubr.bf16.gmra.mrb[0].mxu0 %v306
  %v2432 = vpop.f32.mrb[0].mxu0
  %v2433 = vadd.f32 %v2373, %v2432
  %v2434 = vpop.f32.mrb[0].mxu0
  %v2435 = vpop.f32.mrb[0].mxu0
  %v2436 = vadd.f32 %v2373, %v2435
  %v2437 = vpop.f32.mrb[0].mxu0
  %2438 = vmatprep.mubr.bf16.mxu0 0
  %2439 = vmatmul.mubr.bf16.gmra.mrb[0].mxu0 %v307
  %v2440 = vpop.f32.mrb[0].mxu0
  %v2441 = vadd.f32 %v2373, %v2440
  %v2442 = vpop.f32.mrb[0].mxu0
  %v2443 = vpop.f32.mrb[0].mxu0
  %v2444 = vadd.f32 %v2373, %v2443
  %v2445 = vpop.f32.mrb[0].mxu0
  %2446 = vmatprep.mubr.bf16.mxu0 0
  %2447 = vmatmul.mubr.bf16.gmra.mrb[0].mxu0 %v308
  %v2448 = vpop.f32.mrb[0].mxu0
  %v2449 = vadd.f32 %v2373, %v2448
  %v2450 = vpop.f32.mrb[0].mxu0
  %v2451 = vpop.f32.mrb[0].mxu0
  %v2452 = vadd.f32 %v2373, %v2451
  %v2453 = vpop.f32.mrb[0].mxu0
  %2454 = vmatprep.mubr.bf16.mxu0 0
  %2455 = vmatmul.mubr.bf16.gmra.mrb[0].mxu0 %v309
  %v2456 = vpop.f32.mrb[0].mxu0
  %v2457 = vadd.f32 %v2373, %v2456
  %v2458 = vpop.f32.mrb[0].mxu0
  %v2459 = vpop.f32.mrb[0].mxu0
  %v2460 = vadd.f32 %v2373, %v2459
  %v2461 = vpop.f32.mrb[0].mxu0
  %2462 = vmatprep.mubr.bf16.mxu0 0
  %2463 = vmatmul.mubr.bf16.gmra.mrb[0].mxu0 %v310
  %v2464 = vpop.f32.mrb[0].mxu0
  %v2465 = vadd.f32 %v2373, %v2464
  %v2466 = vpop.f32.mrb[0].mxu0
  %v2467 = vpop.f32.mrb[0].mxu0
  %v2468 = vadd.f32 %v2373, %v2467
  %v2469 = vpop.f32.mrb[0].mxu0
  %2470 = vdwg.mxu0
  %v2471 = vtanh.pop %v2409
  %v2472 = vtanh.pop %v2412
  %v2473 = vtanh.pop %v2417
  %v2474 = vtanh.pop %v2420
  %v2475 = vtanh.pop %v2425
  %v2476 = vtanh.pop %v2428
  %v2477 = vtanh.pop %v2433
  %v2478 = vtanh.pop %v2436
  %v2479 = vtanh.pop %v2441
  %v2480 = vtanh.pop %v2444
  %v2481 = vtanh.pop %v2449
  %v2482 = vtanh.pop %v2452
  %v2483 = vtanh.pop %v2457
  %v2484 = vtanh.pop %v2460
  %v2485 = vtanh.pop %v2465
  %v2486 = vtanh.pop %v2468
  %v2487 = vpack.c.bf16 %v2472, %v2471
  %v2488 = vpack.c.bf16 %v2474, %v2473
  %v2489 = vpack.c.bf16 %v2476, %v2475
  %v2490 = vpack.c.bf16 %v2478, %v2477
  %v2491 = vpack.c.bf16 %v2480, %v2479
  %v2492 = vpack.c.bf16 %v2482, %v2481
  %v2493 = vpack.c.bf16 %v2484, %v2483
  %v2494 = vpack.c.bf16 %v2486, %v2485
  %v2495 = vld [vmem:[%s2 + $0x200] sm:$0xf]
  %v2496 = vld [vmem:[%s2 + $0x204] sm:$0xf]
  %v2497 = vld [vmem:[%s2 + $0x208] sm:$0xf]
  %v2498 = vld [vmem:[%s2 + $0x20c] sm:$0xf]
  %v2499 = vld [vmem:[%s2 + $0x210] sm:$0xf]
  %v2500 = vld [vmem:[%s2 + $0x214] sm:$0xf]
  %v2501 = vld [vmem:[%s2 + $0x218] sm:$0xf]
  %v2502 = vld [vmem:[%s2 + $0x21c] sm:$0xf]
  %v2503 = vld [vmem:[%s2 + $0x220] sm:$0xf]
  %v2504 = vld [vmem:[%s2 + $0x224] sm:$0xf]
  %v2505 = vld [vmem:[%s2 + $0x228] sm:$0xf]
  %v2506 = vld [vmem:[%s2 + $0x22c] sm:$0xf]
  %v2507 = vld [vmem:[%s2 + $0x230] sm:$0xf]
  %v2508 = vld [vmem:[%s2 + $0x234] sm:$0xf]
  %v2509 = vld [vmem:[%s2 + $0x238] sm:$0xf]
  %v2510 = vld [vmem:[%s2 + $0x23c] sm:$0xf]
  %v2527 = vunpack.c.l.b16 %v2495
  %v2528 = vunpack.c.l.b16 %v2496
  %v2529 = vunpack.c.l.b16 %v2497
  %v2530 = vunpack.c.l.b16 %v2498
  %v2531 = vunpack.c.l.b16 %v2499
  %v2532 = vunpack.c.l.b16 %v2500
  %v2533 = vunpack.c.l.b16 %v2501
  %v2534 = vunpack.c.l.b16 %v2502
  %v2535 = vunpack.c.l.b16 %v2503
  %v2536 = vunpack.c.l.b16 %v2504
  %v2537 = vunpack.c.l.b16 %v2505
  %v2538 = vunpack.c.l.b16 %v2506
  %v2539 = vunpack.c.l.b16 %v2507
  %v2540 = vunpack.c.l.b16 %v2508
  %v2541 = vunpack.c.l.b16 %v2509
  %v2542 = vunpack.c.l.b16 %v2510
  %v2543 = vpack.c.b16 %v2528, %v2527
  %v2544 = vpack.c.b16 %v2530, %v2529
  %v2545 = vpack.c.b16 %v2532, %v2531
  %v2546 = vpack.c.b16 %v2534, %v2533
  %v2547 = vpack.c.b16 %v2536, %v2535
  %v2548 = vpack.c.b16 %v2538, %v2537
  %v2549 = vpack.c.b16 %v2540, %v2539
  %v2550 = vpack.c.b16 %v2542, %v2541
  %2559 = vmatprep.subr.bf16.mxu0 0
  %2560 = vmatpush1.bf16.msra.mxu0 %v2543
  %2561 = vmatprep.subr.bf16.mxu0 0
  %2562 = vmatpush1.bf16.msra.mxu0 %v2544
  %2563 = vmatprep.subr.bf16.mxu0 0
  %2564 = vmatpush1.bf16.msra.mxu0 %v2545
  %2565 = vmatprep.subr.bf16.mxu0 0
  %2566 = vmatpush1.bf16.msra.mxu0 %v2546
  %2567 = vmatprep.subr.bf16.mxu0 0
  %2568 = vmatpush1.bf16.msra.mxu0 %v2547
  %2569 = vmatprep.subr.bf16.mxu0 0
  %2570 = vmatpush1.bf16.msra.mxu0 %v2548
  %2571 = vmatprep.subr.bf16.mxu0 0
  %2572 = vmatpush1.bf16.msra.mxu0 %v2549
  %2573 = vmatprep.subr.bf16.mxu0 0
  %2574 = vmatpush1.bf16.msra.mxu0 %v2550
  %2575 = vmatprep.subr.bf16.mxu0 0
  %2576 = vmatpush1.bf16.msra.mxu0 0
  %2577 = vmatprep.subr.bf16.mxu0 0
  %2578 = vmatpush1.bf16.msra.mxu0 0
  %2579 = vmatprep.subr.bf16.mxu0 0
  %2580 = vmatpush1.bf16.msra.mxu0 0
  %2581 = vmatprep.subr.bf16.mxu0 0
  %2582 = vmatpush1.bf16.msra.mxu0 0
  %2583 = vmatprep.subr.bf16.mxu0 0
  %2584 = vmatpush1.bf16.msra.mxu0 0
  %2585 = vmatprep.subr.bf16.mxu0 0
  %2586 = vmatpush1.bf16.msra.mxu0 0
  %2587 = vmatprep.subr.bf16.mxu0 0
  %2588 = vmatpush1.bf16.msra.mxu0 0
  %2589 = vmatprep.subr.bf16.mxu0 0
  %2590 = vmatpush1.bf16.msra.mxu0 0
  %2591 = vmatprep.mubr.bf16.mxu0 0
  %2592 = vmatmul.mubr.bf16.gmra.mrb[0].mxu0 %v2487
  %v2593 = vpop.f32.mrb[0].mxu0
  %v2594 = vadd.f32 0.0, %v2593
  %v2595 = vpop.f32.mrb[0].mxu0
  %v2596 = vpop.f32.mrb[0].mxu0
  %v2597 = vadd.f32 0.0, %v2596
  %v2598 = vpop.f32.mrb[0].mxu0
  %2599 = vmatprep.mubr.bf16.mxu0 0
  %2600 = vmatmul.mubr.bf16.gmra.mrb[0].mxu0 %v2488
  %v2601 = vpop.f32.mrb[0].mxu0
  %v2602 = vadd.f32 0.0, %v2601
  %v2603 = vpop.f32.mrb[0].mxu0
  %v2604 = vpop.f32.mrb[0].mxu0
  %v2605 = vadd.f32 0.0, %v2604
  %v2606 = vpop.f32.mrb[0].mxu0
  %2607 = vmatprep.mubr.bf16.mxu0 0
  %2608 = vmatmul.mubr.bf16.gmra.mrb[0].mxu0 %v2489
  %v2609 = vpop.f32.mrb[0].mxu0
  %v2610 = vadd.f32 0.0, %v2609
  %v2611 = vpop.f32.mrb[0].mxu0
  %v2612 = vpop.f32.mrb[0].mxu0
  %v2613 = vadd.f32 0.0, %v2612
  %v2614 = vpop.f32.mrb[0].mxu0
  %2615 = vmatprep.mubr.bf16.mxu0 0
  %2616 = vmatmul.mubr.bf16.gmra.mrb[0].mxu0 %v2490
  %v2617 = vpop.f32.mrb[0].mxu0
  %v2618 = vadd.f32 0.0, %v2617
  %v2619 = vpop.f32.mrb[0].mxu0
  %v2620 = vpop.f32.mrb[0].mxu0
  %v2621 = vadd.f32 0.0, %v2620
  %v2622 = vpop.f32.mrb[0].mxu0
  %2623 = vmatprep.mubr.bf16.mxu0 0
  %2624 = vmatmul.mubr.bf16.gmra.mrb[0].mxu0 %v2491
  %v2625 = vpop.f32.mrb[0].mxu0
  %v2626 = vadd.f32 0.0, %v2625
  %v2627 = vpop.f32.mrb[0].mxu0
  %v2628 = vpop.f32.mrb[0].mxu0
  %v2629 = vadd.f32 0.0, %v2628
  %v2630 = vpop.f32.mrb[0].mxu0
  %2631 = vmatprep.mubr.bf16.mxu0 0
  %2632 = vmatmul.mubr.bf16.gmra.mrb[0].mxu0 %v2492
  %v2633 = vpop.f32.mrb[0].mxu0
  %v2634 = vadd.f32 0.0, %v2633
  %v2635 = vpop.f32.mrb[0].mxu0
  %v2636 = vpop.f32.mrb[0].mxu0
  %v2637 = vadd.f32 0.0, %v2636
  %v2638 = vpop.f32.mrb[0].mxu0
  %2639 = vmatprep.mubr.bf16.mxu0 0
  %2640 = vmatmul.mubr.bf16.gmra.mrb[0].mxu0 %v2493
  %v2641 = vpop.f32.mrb[0].mxu0
  %v2642 = vadd.f32 0.0, %v2641
  %v2643 = vpop.f32.mrb[0].mxu0
  %v2644 = vpop.f32.mrb[0].mxu0
  %v2645 = vadd.f32 0.0, %v2644
  %v2646 = vpop.f32.mrb[0].mxu0
  %2647 = vmatprep.mubr.bf16.mxu0 0
  %2648 = vmatmul.mubr.bf16.gmra.mrb[0].mxu0 %v2494
  %v2649 = vpop.f32.mrb[0].mxu0
  %v2650 = vadd.f32 0.0, %v2649
  %v2651 = vpop.f32.mrb[0].mxu0
  %v2652 = vpop.f32.mrb[0].mxu0
  %v2653 = vadd.f32 0.0, %v2652
  %v2654 = vpop.f32.mrb[0].mxu0
  %2655 = vdwg.mxu0
  %v2656 = vpack.c.bf16 %v2597, %v2594
  %v2657 = vpack.c.bf16 %v2605, %v2602
  %v2658 = vpack.c.bf16 %v2613, %v2610
  %v2659 = vpack.c.bf16 %v2621, %v2618
  %v2660 = vpack.c.bf16 %v2629, %v2626
  %v2661 = vpack.c.bf16 %v2637, %v2634
  %v2662 = vpack.c.bf16 %v2645, %v2642
  %v2663 = vpack.c.bf16 %v2653, %v2650
  %v2664 = vld [vmem:[%s4 + $0x7] ss:$0 sm:$0xff]
  %2665 = vmatprep.subr.bf16.mxu0 0
  %2666 = vmatpush1.bf16.msra.mxu0 %v2656
  %2667 = vmatprep.subr.bf16.mxu0 0
  %2668 = vmatpush1.bf16.msra.mxu0 %v2657
  %2669 = vmatprep.subr.bf16.mxu0 0
  %2670 = vmatpush1.bf16.msra.mxu0 %v2658
  %2671 = vmatprep.subr.bf16.mxu0 0
  %2672 = vmatpush1.bf16.msra.mxu0 %v2659
  %2673 = vmatprep.subr.bf16.mxu0 0
  %2674 = vmatpush1.bf16.msra.mxu0 %v2660
  %2675 = vmatprep.subr.bf16.mxu0 0
  %2676 = vmatpush1.bf16.msra.mxu0 %v2661
  %2677 = vmatprep.subr.bf16.mxu0 0
  %2678 = vmatpush1.bf16.msra.mxu0 %v2662
  %2679 = vmatprep.subr.bf16.mxu0 0
  %2680 = vmatpush1.bf16.msra.mxu0 %v2663
  %2681 = vmatprep.subr.bf16.mxu0 0
  %2682 = vmatpush1.bf16.msra.mxu0 0
  %2683 = vmatprep.subr.bf16.mxu0 0
  %2684 = vmatpush1.bf16.msra.mxu0 0
  %2685 = vmatprep.subr.bf16.mxu0 0
  %2686 = vmatpush1.bf16.msra.mxu0 0
  %2687 = vmatprep.subr.bf16.mxu0 0
  %2688 = vmatpush1.bf16.msra.mxu0 0
  %2689 = vmatprep.subr.bf16.mxu0 0
  %2690 = vmatpush1.bf16.msra.mxu0 0
  %2691 = vmatprep.subr.bf16.mxu0 0
  %2692 = vmatpush1.bf16.msra.mxu0 0
  %2693 = vmatprep.subr.bf16.mxu0 0
  %2694 = vmatpush1.bf16.msra.mxu0 0
  %2695 = vmatprep.subr.bf16.mxu0 0
  %2696 = vmatpush1.bf16.msra.mxu0 0
  %2697 = vmatprep.mubr.bf16.mxu0 0
  %2698 = vmatmul.mubr.bf16.gmra.mrb[0].mxu0 %v303
  %v2699 = vpop.f32.mrb[0].mxu0
  %v2700 = vadd.f32 %v2664, %v2699
  %v2701 = vpop.f32.mrb[0].mxu0
  %v2702 = vpop.f32.mrb[0].mxu0
  %v2703 = vadd.f32 %v2664, %v2702
  %v2704 = vpop.f32.mrb[0].mxu0
  %2705 = vmatprep.mubr.bf16.mxu0 0
  %2706 = vmatmul.mubr.bf16.gmra.mrb[0].mxu0 %v304
  %v2707 = vpop.f32.mrb[0].mxu0
  %v2708 = vadd.f32 %v2664, %v2707
  %v2709 = vpop.f32.mrb[0].mxu0
  %v2710 = vpop.f32.mrb[0].mxu0
  %v2711 = vadd.f32 %v2664, %v2710
  %v2712 = vpop.f32.mrb[0].mxu0
  %2713 = vmatprep.mubr.bf16.mxu0 0
  %2714 = vmatmul.mubr.bf16.gmra.mrb[0].mxu0 %v305
  %v2715 = vpop.f32.mrb[0].mxu0
  %v2716 = vadd.f32 %v2664, %v2715
  %v2717 = vpop.f32.mrb[0].mxu0
  %v2718 = vpop.f32.mrb[0].mxu0
  %v2719 = vadd.f32 %v2664, %v2718
  %v2720 = vpop.f32.mrb[0].mxu0
  %2721 = vmatprep.mubr.bf16.mxu0 0
  %2722 = vmatmul.mubr.bf16.gmra.mrb[0].mxu0 %v306
  %v2723 = vpop.f32.mrb[0].mxu0
  %v2724 = vadd.f32 %v2664, %v2723
  %v2725 = vpop.f32.mrb[0].mxu0
  %v2726 = vpop.f32.mrb[0].mxu0
  %v2727 = vadd.f32 %v2664, %v2726
  %v2728 = vpop.f32.mrb[0].mxu0
  %2729 = vmatprep.mubr.bf16.mxu0 0
  %2730 = vmatmul.mubr.bf16.gmra.mrb[0].mxu0 %v307
  %v2731 = vpop.f32.mrb[0].mxu0
  %v2732 = vadd.f32 %v2664, %v2731
  %v2733 = vpop.f32.mrb[0].mxu0
  %v2734 = vpop.f32.mrb[0].mxu0
  %v2735 = vadd.f32 %v2664, %v2734
  %v2736 = vpop.f32.mrb[0].mxu0
  %2737 = vmatprep.mubr.bf16.mxu0 0
  %2738 = vmatmul.mubr.bf16.gmra.mrb[0].mxu0 %v308
  %v2739 = vpop.f32.mrb[0].mxu0
  %v2740 = vadd.f32 %v2664, %v2739
  %v2741 = vpop.f32.mrb[0].mxu0
  %v2742 = vpop.f32.mrb[0].mxu0
  %v2743 = vadd.f32 %v2664, %v2742
  %v2744 = vpop.f32.mrb[0].mxu0
  %2745 = vmatprep.mubr.bf16.mxu0 0
  %2746 = vmatmul.mubr.bf16.gmra.mrb[0].mxu0 %v309
  %v2747 = vpop.f32.mrb[0].mxu0
  %v2748 = vadd.f32 %v2664, %v2747
  %v2749 = vpop.f32.mrb[0].mxu0
  %v2750 = vpop.f32.mrb[0].mxu0
  %v2751 = vadd.f32 %v2664, %v2750
  %v2752 = vpop.f32.mrb[0].mxu0
  %2753 = vmatprep.mubr.bf16.mxu0 0
  %2754 = vmatmul.mubr.bf16.gmra.mrb[0].mxu0 %v310
  %v2755 = vpop.f32.mrb[0].mxu0
  %v2756 = vadd.f32 %v2664, %v2755
  %v2757 = vpop.f32.mrb[0].mxu0
  %v2758 = vpop.f32.mrb[0].mxu0
  %v2759 = vadd.f32 %v2664, %v2758
  %v2760 = vpop.f32.mrb[0].mxu0
  %2761 = vdwg.mxu0
  %v2762 = vtanh.pop %v2700
  %v2763 = vtanh.pop %v2703
  %v2764 = vtanh.pop %v2708
  %v2765 = vtanh.pop %v2711
  %v2766 = vtanh.pop %v2716
  %v2767 = vtanh.pop %v2719
  %v2768 = vtanh.pop %v2724
  %v2769 = vtanh.pop %v2727
  %v2770 = vtanh.pop %v2732
  %v2771 = vtanh.pop %v2735
  %v2772 = vtanh.pop %v2740
  %v2773 = vtanh.pop %v2743
  %v2774 = vtanh.pop %v2748
  %v2775 = vtanh.pop %v2751
  %v2776 = vtanh.pop %v2756
  %v2777 = vtanh.pop %v2759
  %v2778 = vpack.c.bf16 %v2763, %v2762
  %v2779 = vpack.c.bf16 %v2765, %v2764
  %v2780 = vpack.c.bf16 %v2767, %v2766
  %v2781 = vpack.c.bf16 %v2769, %v2768
  %v2782 = vpack.c.bf16 %v2771, %v2770
  %v2783 = vpack.c.bf16 %v2773, %v2772
  %v2784 = vpack.c.bf16 %v2775, %v2774
  %v2785 = vpack.c.bf16 %v2777, %v2776
  %v2786 = vld [vmem:[%s2 + $0x240] sm:$0xf]
  %v2787 = vld [vmem:[%s2 + $0x244] sm:$0xf]
  %v2788 = vld [vmem:[%s2 + $0x248] sm:$0xf]
  %v2789 = vld [vmem:[%s2 + $0x24c] sm:$0xf]
  %v2790 = vld [vmem:[%s2 + $0x250] sm:$0xf]
  %v2791 = vld [vmem:[%s2 + $0x254] sm:$0xf]
  %v2792 = vld [vmem:[%s2 + $0x258] sm:$0xf]
  %v2793 = vld [vmem:[%s2 + $0x25c] sm:$0xf]
  %v2794 = vld [vmem:[%s2 + $0x260] sm:$0xf]
  %v2795 = vld [vmem:[%s2 + $0x264] sm:$0xf]
  %v2796 = vld [vmem:[%s2 + $0x268] sm:$0xf]
  %v2797 = vld [vmem:[%s2 + $0x26c] sm:$0xf]
  %v2798 = vld [vmem:[%s2 + $0x270] sm:$0xf]
  %v2799 = vld [vmem:[%s2 + $0x274] sm:$0xf]
  %v2800 = vld [vmem:[%s2 + $0x278] sm:$0xf]
  %v2801 = vld [vmem:[%s2 + $0x27c] sm:$0xf]
  %v2818 = vunpack.c.l.b16 %v2786
  %v2819 = vunpack.c.l.b16 %v2787
  %v2820 = vunpack.c.l.b16 %v2788
  %v2821 = vunpack.c.l.b16 %v2789
  %v2822 = vunpack.c.l.b16 %v2790
  %v2823 = vunpack.c.l.b16 %v2791
  %v2824 = vunpack.c.l.b16 %v2792
  %v2825 = vunpack.c.l.b16 %v2793
  %v2826 = vunpack.c.l.b16 %v2794
  %v2827 = vunpack.c.l.b16 %v2795
  %v2828 = vunpack.c.l.b16 %v2796
  %v2829 = vunpack.c.l.b16 %v2797
  %v2830 = vunpack.c.l.b16 %v2798
  %v2831 = vunpack.c.l.b16 %v2799
  %v2832 = vunpack.c.l.b16 %v2800
  %v2833 = vunpack.c.l.b16 %v2801
  %v2834 = vpack.c.b16 %v2819, %v2818
  %v2835 = vpack.c.b16 %v2821, %v2820
  %v2836 = vpack.c.b16 %v2823, %v2822
  %v2837 = vpack.c.b16 %v2825, %v2824
  %v2838 = vpack.c.b16 %v2827, %v2826
  %v2839 = vpack.c.b16 %v2829, %v2828
  %v2840 = vpack.c.b16 %v2831, %v2830
  %v2841 = vpack.c.b16 %v2833, %v2832
  %2850 = vmatprep.subr.bf16.mxu0 0
  %2851 = vmatpush1.bf16.msra.mxu0 %v2834
  %2852 = vmatprep.subr.bf16.mxu0 0
  %2853 = vmatpush1.bf16.msra.mxu0 %v2835
  %2854 = vmatprep.subr.bf16.mxu0 0
  %2855 = vmatpush1.bf16.msra.mxu0 %v2836
  %2856 = vmatprep.subr.bf16.mxu0 0
  %2857 = vmatpush1.bf16.msra.mxu0 %v2837
  %2858 = vmatprep.subr.bf16.mxu0 0
  %2859 = vmatpush1.bf16.msra.mxu0 %v2838
  %2860 = vmatprep.subr.bf16.mxu0 0
  %2861 = vmatpush1.bf16.msra.mxu0 %v2839
  %2862 = vmatprep.subr.bf16.mxu0 0
  %2863 = vmatpush1.bf16.msra.mxu0 %v2840
  %2864 = vmatprep.subr.bf16.mxu0 0
  %2865 = vmatpush1.bf16.msra.mxu0 %v2841
  %2866 = vmatprep.subr.bf16.mxu0 0
  %2867 = vmatpush1.bf16.msra.mxu0 0
  %2868 = vmatprep.subr.bf16.mxu0 0
  %2869 = vmatpush1.bf16.msra.mxu0 0
  %2870 = vmatprep.subr.bf16.mxu0 0
  %2871 = vmatpush1.bf16.msra.mxu0 0
  %2872 = vmatprep.subr.bf16.mxu0 0
  %2873 = vmatpush1.bf16.msra.mxu0 0
  %2874 = vmatprep.subr.bf16.mxu0 0
  %2875 = vmatpush1.bf16.msra.mxu0 0
  %2876 = vmatprep.subr.bf16.mxu0 0
  %2877 = vmatpush1.bf16.msra.mxu0 0
  %2878 = vmatprep.subr.bf16.mxu0 0
  %2879 = vmatpush1.bf16.msra.mxu0 0
  %2880 = vmatprep.subr.bf16.mxu0 0
  %2881 = vmatpush1.bf16.msra.mxu0 0
  %2882 = vmatprep.mubr.bf16.mxu0 0
  %2883 = vmatmul.mubr.bf16.gmra.mrb[0].mxu0 %v2778
  %v2884 = vpop.f32.mrb[0].mxu0
  %v2885 = vadd.f32 0.0, %v2884
  %v2886 = vpop.f32.mrb[0].mxu0
  %v2887 = vpop.f32.mrb[0].mxu0
  %v2888 = vadd.f32 0.0, %v2887
  %v2889 = vpop.f32.mrb[0].mxu0
  %2890 = vmatprep.mubr.bf16.mxu0 0
  %2891 = vmatmul.mubr.bf16.gmra.mrb[0].mxu0 %v2779
  %v2892 = vpop.f32.mrb[0].mxu0
  %v2893 = vadd.f32 0.0, %v2892
  %v2894 = vpop.f32.mrb[0].mxu0
  %v2895 = vpop.f32.mrb[0].mxu0
  %v2896 = vadd.f32 0.0, %v2895
  %v2897 = vpop.f32.mrb[0].mxu0
  %2898 = vmatprep.mubr.bf16.mxu0 0
  %2899 = vmatmul.mubr.bf16.gmra.mrb[0].mxu0 %v2780
  %v2900 = vpop.f32.mrb[0].mxu0
  %v2901 = vadd.f32 0.0, %v2900
  %v2902 = vpop.f32.mrb[0].mxu0
  %v2903 = vpop.f32.mrb[0].mxu0
  %v2904 = vadd.f32 0.0, %v2903
  %v2905 = vpop.f32.mrb[0].mxu0
  %2906 = vmatprep.mubr.bf16.mxu0 0
  %2907 = vmatmul.mubr.bf16.gmra.mrb[0].mxu0 %v2781
  %v2908 = vpop.f32.mrb[0].mxu0
  %v2909 = vadd.f32 0.0, %v2908
  %v2910 = vpop.f32.mrb[0].mxu0
  %v2911 = vpop.f32.mrb[0].mxu0
  %v2912 = vadd.f32 0.0, %v2911
  %v2913 = vpop.f32.mrb[0].mxu0
  %2914 = vmatprep.mubr.bf16.mxu0 0
  %2915 = vmatmul.mubr.bf16.gmra.mrb[0].mxu0 %v2782
  %v2916 = vpop.f32.mrb[0].mxu0
  %v2917 = vadd.f32 0.0, %v2916
  %v2918 = vpop.f32.mrb[0].mxu0
  %v2919 = vpop.f32.mrb[0].mxu0
  %v2920 = vadd.f32 0.0, %v2919
  %v2921 = vpop.f32.mrb[0].mxu0
  %2922 = vmatprep.mubr.bf16.mxu0 0
  %2923 = vmatmul.mubr.bf16.gmra.mrb[0].mxu0 %v2783
  %v2924 = vpop.f32.mrb[0].mxu0
  %v2925 = vadd.f32 0.0, %v2924
  %v2926 = vpop.f32.mrb[0].mxu0
  %v2927 = vpop.f32.mrb[0].mxu0
  %v2928 = vadd.f32 0.0, %v2927
  %v2929 = vpop.f32.mrb[0].mxu0
  %2930 = vmatprep.mubr.bf16.mxu0 0
  %2931 = vmatmul.mubr.bf16.gmra.mrb[0].mxu0 %v2784
  %v2932 = vpop.f32.mrb[0].mxu0
  %v2933 = vadd.f32 0.0, %v2932
  %v2934 = vpop.f32.mrb[0].mxu0
  %v2935 = vpop.f32.mrb[0].mxu0
  %v2936 = vadd.f32 0.0, %v2935
  %v2937 = vpop.f32.mrb[0].mxu0
  %2938 = vmatprep.mubr.bf16.mxu0 0
  %2939 = vmatmul.mubr.bf16.gmra.mrb[0].mxu0 %v2785
  %v2940 = vpop.f32.mrb[0].mxu0
  %v2941 = vadd.f32 0.0, %v2940
  %v2942 = vpop.f32.mrb[0].mxu0
  %v2943 = vpop.f32.mrb[0].mxu0
  %v2944 = vadd.f32 0.0, %v2943
  %v2945 = vpop.f32.mrb[0].mxu0
  %2946 = vdwg.mxu0
  %v2947 = vpack.c.bf16 %v2888, %v2885
  %v2948 = vpack.c.bf16 %v2896, %v2893
  %v2949 = vpack.c.bf16 %v2904, %v2901
  %v2950 = vpack.c.bf16 %v2912, %v2909
  %v2951 = vpack.c.bf16 %v2920, %v2917
  %v2952 = vpack.c.bf16 %v2928, %v2925
  %v2953 = vpack.c.bf16 %v2936, %v2933
  %v2954 = vpack.c.bf16 %v2944, %v2941
  %v2955 = vld [vmem:[%s4 + $0x10] ss:$0 sm:$0xff]
  %2956 = vmatprep.subr.bf16.mxu0 0
  %2957 = vmatpush1.bf16.msra.mxu0 %v2947
  %2958 = vmatprep.subr.bf16.mxu0 0
  %2959 = vmatpush1.bf16.msra.mxu0 %v2948
  %2960 = vmatprep.subr.bf16.mxu0 0
  %2961 = vmatpush1.bf16.msra.mxu0 %v2949
  %2962 = vmatprep.subr.bf16.mxu0 0
  %2963 = vmatpush1.bf16.msra.mxu0 %v2950
  %2964 = vmatprep.subr.bf16.mxu0 0
  %2965 = vmatpush1.bf16.msra.mxu0 %v2951
  %2966 = vmatprep.subr.bf16.mxu0 0
  %2967 = vmatpush1.bf16.msra.mxu0 %v2952
  %2968 = vmatprep.subr.bf16.mxu0 0
  %2969 = vmatpush1.bf16.msra.mxu0 %v2953
  %2970 = vmatprep.subr.bf16.mxu0 0
  %2971 = vmatpush1.bf16.msra.mxu0 %v2954
  %2972 = vmatprep.subr.bf16.mxu0 0
  %2973 = vmatpush1.bf16.msra.mxu0 0
  %2974 = vmatprep.subr.bf16.mxu0 0
  %2975 = vmatpush1.bf16.msra.mxu0 0
  %2976 = vmatprep.subr.bf16.mxu0 0
  %2977 = vmatpush1.bf16.msra.mxu0 0
  %2978 = vmatprep.subr.bf16.mxu0 0
  %2979 = vmatpush1.bf16.msra.mxu0 0
  %2980 = vmatprep.subr.bf16.mxu0 0
  %2981 = vmatpush1.bf16.msra.mxu0 0
  %2982 = vmatprep.subr.bf16.mxu0 0
  %2983 = vmatpush1.bf16.msra.mxu0 0
  %2984 = vmatprep.subr.bf16.mxu0 0
  %2985 = vmatpush1.bf16.msra.mxu0 0
  %2986 = vmatprep.subr.bf16.mxu0 0
  %2987 = vmatpush1.bf16.msra.mxu0 0
  %2988 = vmatprep.mubr.bf16.mxu0 0
  %2989 = vmatmul.mubr.bf16.gmra.mrb[0].mxu0 %v303
  %v2990 = vpop.f32.mrb[0].mxu0
  %v2991 = vadd.f32 %v2955, %v2990
  %v2992 = vpop.f32.mrb[0].mxu0
  %v2993 = vpop.f32.mrb[0].mxu0
  %v2994 = vadd.f32 %v2955, %v2993
  %v2995 = vpop.f32.mrb[0].mxu0
  %2996 = vmatprep.mubr.bf16.mxu0 0
  %2997 = vmatmul.mubr.bf16.gmra.mrb[0].mxu0 %v304
  %v2998 = vpop.f32.mrb[0].mxu0
  %v2999 = vadd.f32 %v2955, %v2998
  %v3000 = vpop.f32.mrb[0].mxu0
  %v3001 = vpop.f32.mrb[0].mxu0
  %v3002 = vadd.f32 %v2955, %v3001
  %v3003 = vpop.f32.mrb[0].mxu0
  %3004 = vmatprep.mubr.bf16.mxu0 0
  %3005 = vmatmul.mubr.bf16.gmra.mrb[0].mxu0 %v305
  %v3006 = vpop.f32.mrb[0].mxu0
  %v3007 = vadd.f32 %v2955, %v3006
  %v3008 = vpop.f32.mrb[0].mxu0
  %v3009 = vpop.f32.mrb[0].mxu0
  %v3010 = vadd.f32 %v2955, %v3009
  %v3011 = vpop.f32.mrb[0].mxu0
  %3012 = vmatprep.mubr.bf16.mxu0 0
  %3013 = vmatmul.mubr.bf16.gmra.mrb[0].mxu0 %v306
  %v3014 = vpop.f32.mrb[0].mxu0
  %v3015 = vadd.f32 %v2955, %v3014
  %v3016 = vpop.f32.mrb[0].mxu0
  %v3017 = vpop.f32.mrb[0].mxu0
  %v3018 = vadd.f32 %v2955, %v3017
  %v3019 = vpop.f32.mrb[0].mxu0
  %3020 = vmatprep.mubr.bf16.mxu0 0
  %3021 = vmatmul.mubr.bf16.gmra.mrb[0].mxu0 %v307
  %v3022 = vpop.f32.mrb[0].mxu0
  %v3023 = vadd.f32 %v2955, %v3022
  %v3024 = vpop.f32.mrb[0].mxu0
  %v3025 = vpop.f32.mrb[0].mxu0
  %v3026 = vadd.f32 %v2955, %v3025
  %v3027 = vpop.f32.mrb[0].mxu0
  %3028 = vmatprep.mubr.bf16.mxu0 0
  %3029 = vmatmul.mubr.bf16.gmra.mrb[0].mxu0 %v308
  %v3030 = vpop.f32.mrb[0].mxu0
  %v3031 = vadd.f32 %v2955, %v3030
  %v3032 = vpop.f32.mrb[0].mxu0
  %v3033 = vpop.f32.mrb[0].mxu0
  %v3034 = vadd.f32 %v2955, %v3033
  %v3035 = vpop.f32.mrb[0].mxu0
  %3036 = vmatprep.mubr.bf16.mxu0 0
  %3037 = vmatmul.mubr.bf16.gmra.mrb[0].mxu0 %v309
  %v3038 = vpop.f32.mrb[0].mxu0
  %v3039 = vadd.f32 %v2955, %v3038
  %v3040 = vpop.f32.mrb[0].mxu0
  %v3041 = vpop.f32.mrb[0].mxu0
  %v3042 = vadd.f32 %v2955, %v3041
  %v3043 = vpop.f32.mrb[0].mxu0
  %3044 = vmatprep.mubr.bf16.mxu0 0
  %3045 = vmatmul.mubr.bf16.gmra.mrb[0].mxu0 %v310
  %v3046 = vpop.f32.mrb[0].mxu0
  %v3047 = vadd.f32 %v2955, %v3046
  %v3048 = vpop.f32.mrb[0].mxu0
  %v3049 = vpop.f32.mrb[0].mxu0
  %v3050 = vadd.f32 %v2955, %v3049
  %v3051 = vpop.f32.mrb[0].mxu0
  %3052 = vdwg.mxu0
  %v3053 = vtanh.pop %v2991
  %v3054 = vtanh.pop %v2994
  %v3055 = vtanh.pop %v2999
  %v3056 = vtanh.pop %v3002
  %v3057 = vtanh.pop %v3007
  %v3058 = vtanh.pop %v3010
  %v3059 = vtanh.pop %v3015
  %v3060 = vtanh.pop %v3018
  %v3061 = vtanh.pop %v3023
  %v3062 = vtanh.pop %v3026
  %v3063 = vtanh.pop %v3031
  %v3064 = vtanh.pop %v3034
  %v3065 = vtanh.pop %v3039
  %v3066 = vtanh.pop %v3042
  %v3067 = vtanh.pop %v3047
  %v3068 = vtanh.pop %v3050
  %v3069 = vpack.c.bf16 %v3054, %v3053
  %v3070 = vpack.c.bf16 %v3056, %v3055
  %v3071 = vpack.c.bf16 %v3058, %v3057
  %v3072 = vpack.c.bf16 %v3060, %v3059
  %v3073 = vpack.c.bf16 %v3062, %v3061
  %v3074 = vpack.c.bf16 %v3064, %v3063
  %v3075 = vpack.c.bf16 %v3066, %v3065
  %v3076 = vpack.c.bf16 %v3068, %v3067
  %v3077 = vld [vmem:[%s2 + $0x280] sm:$0xf]
  %v3078 = vld [vmem:[%s2 + $0x284] sm:$0xf]
  %v3079 = vld [vmem:[%s2 + $0x288] sm:$0xf]
  %v3080 = vld [vmem:[%s2 + $0x28c] sm:$0xf]
  %v3081 = vld [vmem:[%s2 + $0x290] sm:$0xf]
  %v3082 = vld [vmem:[%s2 + $0x294] sm:$0xf]
  %v3083 = vld [vmem:[%s2 + $0x298] sm:$0xf]
  %v3084 = vld [vmem:[%s2 + $0x29c] sm:$0xf]
  %v3085 = vld [vmem:[%s2 + $0x2a0] sm:$0xf]
  %v3086 = vld [vmem:[%s2 + $0x2a4] sm:$0xf]
  %v3087 = vld [vmem:[%s2 + $0x2a8] sm:$0xf]
  %v3088 = vld [vmem:[%s2 + $0x2ac] sm:$0xf]
  %v3089 = vld [vmem:[%s2 + $0x2b0] sm:$0xf]
  %v3090 = vld [vmem:[%s2 + $0x2b4] sm:$0xf]
  %v3091 = vld [vmem:[%s2 + $0x2b8] sm:$0xf]
  %v3092 = vld [vmem:[%s2 + $0x2bc] sm:$0xf]
  %v3109 = vunpack.c.l.b16 %v3077
  %v3110 = vunpack.c.l.b16 %v3078
  %v3111 = vunpack.c.l.b16 %v3079
  %v3112 = vunpack.c.l.b16 %v3080
  %v3113 = vunpack.c.l.b16 %v3081
  %v3114 = vunpack.c.l.b16 %v3082
  %v3115 = vunpack.c.l.b16 %v3083
  %v3116 = vunpack.c.l.b16 %v3084
  %v3117 = vunpack.c.l.b16 %v3085
  %v3118 = vunpack.c.l.b16 %v3086
  %v3119 = vunpack.c.l.b16 %v3087
  %v3120 = vunpack.c.l.b16 %v3088
  %v3121 = vunpack.c.l.b16 %v3089
  %v3122 = vunpack.c.l.b16 %v3090
  %v3123 = vunpack.c.l.b16 %v3091
  %v3124 = vunpack.c.l.b16 %v3092
  %v3125 = vpack.c.b16 %v3110, %v3109
  %v3126 = vpack.c.b16 %v3112, %v3111
  %v3127 = vpack.c.b16 %v3114, %v3113
  %v3128 = vpack.c.b16 %v3116, %v3115
  %v3129 = vpack.c.b16 %v3118, %v3117
  %v3130 = vpack.c.b16 %v3120, %v3119
  %v3131 = vpack.c.b16 %v3122, %v3121
  %v3132 = vpack.c.b16 %v3124, %v3123
  %3141 = vmatprep.subr.bf16.mxu0 0
  %3142 = vmatpush1.bf16.msra.mxu0 %v3125
  %3143 = vmatprep.subr.bf16.mxu0 0
  %3144 = vmatpush1.bf16.msra.mxu0 %v3126
  %3145 = vmatprep.subr.bf16.mxu0 0
  %3146 = vmatpush1.bf16.msra.mxu0 %v3127
  %3147 = vmatprep.subr.bf16.mxu0 0
  %3148 = vmatpush1.bf16.msra.mxu0 %v3128
  %3149 = vmatprep.subr.bf16.mxu0 0
  %3150 = vmatpush1.bf16.msra.mxu0 %v3129
  %3151 = vmatprep.subr.bf16.mxu0 0
  %3152 = vmatpush1.bf16.msra.mxu0 %v3130
  %3153 = vmatprep.subr.bf16.mxu0 0
  %3154 = vmatpush1.bf16.msra.mxu0 %v3131
  %3155 = vmatprep.subr.bf16.mxu0 0
  %3156 = vmatpush1.bf16.msra.mxu0 %v3132
  %3157 = vmatprep.subr.bf16.mxu0 0
  %3158 = vmatpush1.bf16.msra.mxu0 0
  %3159 = vmatprep.subr.bf16.mxu0 0
  %3160 = vmatpush1.bf16.msra.mxu0 0
  %3161 = vmatprep.subr.bf16.mxu0 0
  %3162 = vmatpush1.bf16.msra.mxu0 0
  %3163 = vmatprep.subr.bf16.mxu0 0
  %3164 = vmatpush1.bf16.msra.mxu0 0
  %3165 = vmatprep.subr.bf16.mxu0 0
  %3166 = vmatpush1.bf16.msra.mxu0 0
  %3167 = vmatprep.subr.bf16.mxu0 0
  %3168 = vmatpush1.bf16.msra.mxu0 0
  %3169 = vmatprep.subr.bf16.mxu0 0
  %3170 = vmatpush1.bf16.msra.mxu0 0
  %3171 = vmatprep.subr.bf16.mxu0 0
  %3172 = vmatpush1.bf16.msra.mxu0 0
  %3173 = vmatprep.mubr.bf16.mxu0 0
  %3174 = vmatmul.mubr.bf16.gmra.mrb[0].mxu0 %v3069
  %v3175 = vpop.f32.mrb[0].mxu0
  %v3176 = vadd.f32 0.0, %v3175
  %v3177 = vpop.f32.mrb[0].mxu0
  %v3178 = vpop.f32.mrb[0].mxu0
  %v3179 = vadd.f32 0.0, %v3178
  %v3180 = vpop.f32.mrb[0].mxu0
  %3181 = vmatprep.mubr.bf16.mxu0 0
  %3182 = vmatmul.mubr.bf16.gmra.mrb[0].mxu0 %v3070
  %v3183 = vpop.f32.mrb[0].mxu0
  %v3184 = vadd.f32 0.0, %v3183
  %v3185 = vpop.f32.mrb[0].mxu0
  %v3186 = vpop.f32.mrb[0].mxu0
  %v3187 = vadd.f32 0.0, %v3186
  %v3188 = vpop.f32.mrb[0].mxu0
  %3189 = vmatprep.mubr.bf16.mxu0 0
  %3190 = vmatmul.mubr.bf16.gmra.mrb[0].mxu0 %v3071
  %v3191 = vpop.f32.mrb[0].mxu0
  %v3192 = vadd.f32 0.0, %v3191
  %v3193 = vpop.f32.mrb[0].mxu0
  %v3194 = vpop.f32.mrb[0].mxu0
  %v3195 = vadd.f32 0.0, %v3194
  %v3196 = vpop.f32.mrb[0].mxu0
  %3197 = vmatprep.mubr.bf16.mxu0 0
  %3198 = vmatmul.mubr.bf16.gmra.mrb[0].mxu0 %v3072
  %v3199 = vpop.f32.mrb[0].mxu0
  %v3200 = vadd.f32 0.0, %v3199
  %v3201 = vpop.f32.mrb[0].mxu0
  %v3202 = vpop.f32.mrb[0].mxu0
  %v3203 = vadd.f32 0.0, %v3202
  %v3204 = vpop.f32.mrb[0].mxu0
  %3205 = vmatprep.mubr.bf16.mxu0 0
  %3206 = vmatmul.mubr.bf16.gmra.mrb[0].mxu0 %v3073
  %v3207 = vpop.f32.mrb[0].mxu0
  %v3208 = vadd.f32 0.0, %v3207
  %v3209 = vpop.f32.mrb[0].mxu0
  %v3210 = vpop.f32.mrb[0].mxu0
  %v3211 = vadd.f32 0.0, %v3210
  %v3212 = vpop.f32.mrb[0].mxu0
  %3213 = vmatprep.mubr.bf16.mxu0 0
  %3214 = vmatmul.mubr.bf16.gmra.mrb[0].mxu0 %v3074
  %v3215 = vpop.f32.mrb[0].mxu0
  %v3216 = vadd.f32 0.0, %v3215
  %v3217 = vpop.f32.mrb[0].mxu0
  %v3218 = vpop.f32.mrb[0].mxu0
  %v3219 = vadd.f32 0.0, %v3218
  %v3220 = vpop.f32.mrb[0].mxu0
  %3221 = vmatprep.mubr.bf16.mxu0 0
  %3222 = vmatmul.mubr.bf16.gmra.mrb[0].mxu0 %v3075
  %v3223 = vpop.f32.mrb[0].mxu0
  %v3224 = vadd.f32 0.0, %v3223
  %v3225 = vpop.f32.mrb[0].mxu0
  %v3226 = vpop.f32.mrb[0].mxu0
  %v3227 = vadd.f32 0.0, %v3226
  %v3228 = vpop.f32.mrb[0].mxu0
  %3229 = vmatprep.mubr.bf16.mxu0 0
  %3230 = vmatmul.mubr.bf16.gmra.mrb[0].mxu0 %v3076
  %v3231 = vpop.f32.mrb[0].mxu0
  %v3232 = vadd.f32 0.0, %v3231
  %v3233 = vpop.f32.mrb[0].mxu0
  %v3234 = vpop.f32.mrb[0].mxu0
  %v3235 = vadd.f32 0.0, %v3234
  %v3236 = vpop.f32.mrb[0].mxu0
  %3237 = vdwg.mxu0
  %v3238 = vpack.c.bf16 %v3179, %v3176
  %v3239 = vpack.c.bf16 %v3187, %v3184
  %v3240 = vpack.c.bf16 %v3195, %v3192
  %v3241 = vpack.c.bf16 %v3203, %v3200
  %v3242 = vpack.c.bf16 %v3211, %v3208
  %v3243 = vpack.c.bf16 %v3219, %v3216
  %v3244 = vpack.c.bf16 %v3227, %v3224
  %v3245 = vpack.c.bf16 %v3235, %v3232
  %v3246 = vld [vmem:[%s4 + $0x11] ss:$0 sm:$0xff]
  %3247 = vmatprep.subr.bf16.mxu0 0
  %3248 = vmatpush1.bf16.msra.mxu0 %v3238
  %3249 = vmatprep.subr.bf16.mxu0 0
  %3250 = vmatpush1.bf16.msra.mxu0 %v3239
  %3251 = vmatprep.subr.bf16.mxu0 0
  %3252 = vmatpush1.bf16.msra.mxu0 %v3240
  %3253 = vmatprep.subr.bf16.mxu0 0
  %3254 = vmatpush1.bf16.msra.mxu0 %v3241
  %3255 = vmatprep.subr.bf16.mxu0 0
  %3256 = vmatpush1.bf16.msra.mxu0 %v3242
  %3257 = vmatprep.subr.bf16.mxu0 0
  %3258 = vmatpush1.bf16.msra.mxu0 %v3243
  %3259 = vmatprep.subr.bf16.mxu0 0
  %3260 = vmatpush1.bf16.msra.mxu0 %v3244
  %3261 = vmatprep.subr.bf16.mxu0 0
  %3262 = vmatpush1.bf16.msra.mxu0 %v3245
  %3263 = vmatprep.subr.bf16.mxu0 0
  %3264 = vmatpush1.bf16.msra.mxu0 0
  %3265 = vmatprep.subr.bf16.mxu0 0
  %3266 = vmatpush1.bf16.msra.mxu0 0
  %3267 = vmatprep.subr.bf16.mxu0 0
  %3268 = vmatpush1.bf16.msra.mxu0 0
  %3269 = vmatprep.subr.bf16.mxu0 0
  %3270 = vmatpush1.bf16.msra.mxu0 0
  %3271 = vmatprep.subr.bf16.mxu0 0
  %3272 = vmatpush1.bf16.msra.mxu0 0
  %3273 = vmatprep.subr.bf16.mxu0 0
  %3274 = vmatpush1.bf16.msra.mxu0 0
  %3275 = vmatprep.subr.bf16.mxu0 0
  %3276 = vmatpush1.bf16.msra.mxu0 0
  %3277 = vmatprep.subr.bf16.mxu0 0
  %3278 = vmatpush1.bf16.msra.mxu0 0
  %3279 = vmatprep.mubr.bf16.mxu0 0
  %3280 = vmatmul.mubr.bf16.gmra.mrb[0].mxu0 %v303
  %v3281 = vpop.f32.mrb[0].mxu0
  %v3282 = vadd.f32 %v3246, %v3281
  %v3283 = vpop.f32.mrb[0].mxu0
  %v3284 = vpop.f32.mrb[0].mxu0
  %v3285 = vadd.f32 %v3246, %v3284
  %v3286 = vpop.f32.mrb[0].mxu0
  %3287 = vmatprep.mubr.bf16.mxu0 0
  %3288 = vmatmul.mubr.bf16.gmra.mrb[0].mxu0 %v304
  %v3289 = vpop.f32.mrb[0].mxu0
  %v3290 = vadd.f32 %v3246, %v3289
  %v3291 = vpop.f32.mrb[0].mxu0
  %v3292 = vpop.f32.mrb[0].mxu0
  %v3293 = vadd.f32 %v3246, %v3292
  %v3294 = vpop.f32.mrb[0].mxu0
  %3295 = vmatprep.mubr.bf16.mxu0 0
  %3296 = vmatmul.mubr.bf16.gmra.mrb[0].mxu0 %v305
  %v3297 = vpop.f32.mrb[0].mxu0
  %v3298 = vadd.f32 %v3246, %v3297
  %v3299 = vpop.f32.mrb[0].mxu0
  %v3300 = vpop.f32.mrb[0].mxu0
  %v3301 = vadd.f32 %v3246, %v3300
  %v3302 = vpop.f32.mrb[0].mxu0
  %3303 = vmatprep.mubr.bf16.mxu0 0
  %3304 = vmatmul.mubr.bf16.gmra.mrb[0].mxu0 %v306
  %v3305 = vpop.f32.mrb[0].mxu0
  %v3306 = vadd.f32 %v3246, %v3305
  %v3307 = vpop.f32.mrb[0].mxu0
  %v3308 = vpop.f32.mrb[0].mxu0
  %v3309 = vadd.f32 %v3246, %v3308
  %v3310 = vpop.f32.mrb[0].mxu0
  %3311 = vmatprep.mubr.bf16.mxu0 0
  %3312 = vmatmul.mubr.bf16.gmra.mrb[0].mxu0 %v307
  %v3313 = vpop.f32.mrb[0].mxu0
  %v3314 = vadd.f32 %v3246, %v3313
  %v3315 = vpop.f32.mrb[0].mxu0
  %v3316 = vpop.f32.mrb[0].mxu0
  %v3317 = vadd.f32 %v3246, %v3316
  %v3318 = vpop.f32.mrb[0].mxu0
  %3319 = vmatprep.mubr.bf16.mxu0 0
  %3320 = vmatmul.mubr.bf16.gmra.mrb[0].mxu0 %v308
  %v3321 = vpop.f32.mrb[0].mxu0
  %v3322 = vadd.f32 %v3246, %v3321
  %v3323 = vpop.f32.mrb[0].mxu0
  %v3324 = vpop.f32.mrb[0].mxu0
  %v3325 = vadd.f32 %v3246, %v3324
  %v3326 = vpop.f32.mrb[0].mxu0
  %3327 = vmatprep.mubr.bf16.mxu0 0
  %3328 = vmatmul.mubr.bf16.gmra.mrb[0].mxu0 %v309
  %v3329 = vpop.f32.mrb[0].mxu0
  %v3330 = vadd.f32 %v3246, %v3329
  %v3331 = vpop.f32.mrb[0].mxu0
  %v3332 = vpop.f32.mrb[0].mxu0
  %v3333 = vadd.f32 %v3246, %v3332
  %v3334 = vpop.f32.mrb[0].mxu0
  %3335 = vmatprep.mubr.bf16.mxu0 0
  %3336 = vmatmul.mubr.bf16.gmra.mrb[0].mxu0 %v310
  %v3337 = vpop.f32.mrb[0].mxu0
  %v3338 = vadd.f32 %v3246, %v3337
  %v3339 = vpop.f32.mrb[0].mxu0
  %v3340 = vpop.f32.mrb[0].mxu0
  %v3341 = vadd.f32 %v3246, %v3340
  %v3342 = vpop.f32.mrb[0].mxu0
  %3343 = vdwg.mxu0
  %v3344 = vtanh.pop %v3282
  %v3345 = vtanh.pop %v3285
  %v3346 = vtanh.pop %v3290
  %v3347 = vtanh.pop %v3293
  %v3348 = vtanh.pop %v3298
  %v3349 = vtanh.pop %v3301
  %v3350 = vtanh.pop %v3306
  %v3351 = vtanh.pop %v3309
  %v3352 = vtanh.pop %v3314
  %v3353 = vtanh.pop %v3317
  %v3354 = vtanh.pop %v3322
  %v3355 = vtanh.pop %v3325
  %v3356 = vtanh.pop %v3330
  %v3357 = vtanh.pop %v3333
  %v3358 = vtanh.pop %v3338
  %v3359 = vtanh.pop %v3341
  %v3360 = vpack.c.bf16 %v3345, %v3344
  %v3361 = vpack.c.bf16 %v3347, %v3346
  %v3362 = vpack.c.bf16 %v3349, %v3348
  %v3363 = vpack.c.bf16 %v3351, %v3350
  %v3364 = vpack.c.bf16 %v3353, %v3352
  %v3365 = vpack.c.bf16 %v3355, %v3354
  %v3366 = vpack.c.bf16 %v3357, %v3356
  %v3367 = vpack.c.bf16 %v3359, %v3358
  %v3368 = vld [vmem:[%s2 + $0x2c0] sm:$0xf]
  %v3369 = vld [vmem:[%s2 + $0x2c4] sm:$0xf]
  %v3370 = vld [vmem:[%s2 + $0x2c8] sm:$0xf]
  %v3371 = vld [vmem:[%s2 + $0x2cc] sm:$0xf]
  %v3372 = vld [vmem:[%s2 + $0x2d0] sm:$0xf]
  %v3373 = vld [vmem:[%s2 + $0x2d4] sm:$0xf]
  %v3374 = vld [vmem:[%s2 + $0x2d8] sm:$0xf]
  %v3375 = vld [vmem:[%s2 + $0x2dc] sm:$0xf]
  %v3376 = vld [vmem:[%s2 + $0x2e0] sm:$0xf]
  %v3377 = vld [vmem:[%s2 + $0x2e4] sm:$0xf]
  %v3378 = vld [vmem:[%s2 + $0x2e8] sm:$0xf]
  %v3379 = vld [vmem:[%s2 + $0x2ec] sm:$0xf]
  %v3380 = vld [vmem:[%s2 + $0x2f0] sm:$0xf]
  %v3381 = vld [vmem:[%s2 + $0x2f4] sm:$0xf]
  %v3382 = vld [vmem:[%s2 + $0x2f8] sm:$0xf]
  %v3383 = vld [vmem:[%s2 + $0x2fc] sm:$0xf]
  %v3400 = vunpack.c.l.b16 %v3368
  %v3401 = vunpack.c.l.b16 %v3369
  %v3402 = vunpack.c.l.b16 %v3370
  %v3403 = vunpack.c.l.b16 %v3371
  %v3404 = vunpack.c.l.b16 %v3372
  %v3405 = vunpack.c.l.b16 %v3373
  %v3406 = vunpack.c.l.b16 %v3374
  %v3407 = vunpack.c.l.b16 %v3375
  %v3408 = vunpack.c.l.b16 %v3376
  %v3409 = vunpack.c.l.b16 %v3377
  %v3410 = vunpack.c.l.b16 %v3378
  %v3411 = vunpack.c.l.b16 %v3379
  %v3412 = vunpack.c.l.b16 %v3380
  %v3413 = vunpack.c.l.b16 %v3381
  %v3414 = vunpack.c.l.b16 %v3382
  %v3415 = vunpack.c.l.b16 %v3383
  %v3416 = vpack.c.b16 %v3401, %v3400
  %v3417 = vpack.c.b16 %v3403, %v3402
  %v3418 = vpack.c.b16 %v3405, %v3404
  %v3419 = vpack.c.b16 %v3407, %v3406
  %v3420 = vpack.c.b16 %v3409, %v3408
  %v3421 = vpack.c.b16 %v3411, %v3410
  %v3422 = vpack.c.b16 %v3413, %v3412
  %v3423 = vpack.c.b16 %v3415, %v3414
  %3432 = vmatprep.subr.bf16.mxu0 0
  %3433 = vmatpush1.bf16.msra.mxu0 %v3416
  %3434 = vmatprep.subr.bf16.mxu0 0
  %3435 = vmatpush1.bf16.msra.mxu0 %v3417
  %3436 = vmatprep.subr.bf16.mxu0 0
  %3437 = vmatpush1.bf16.msra.mxu0 %v3418
  %3438 = vmatprep.subr.bf16.mxu0 0
  %3439 = vmatpush1.bf16.msra.mxu0 %v3419
  %3440 = vmatprep.subr.bf16.mxu0 0
  %3441 = vmatpush1.bf16.msra.mxu0 %v3420
  %3442 = vmatprep.subr.bf16.mxu0 0
  %3443 = vmatpush1.bf16.msra.mxu0 %v3421
  %3444 = vmatprep.subr.bf16.mxu0 0
  %3445 = vmatpush1.bf16.msra.mxu0 %v3422
  %3446 = vmatprep.subr.bf16.mxu0 0
  %3447 = vmatpush1.bf16.msra.mxu0 %v3423
  %3448 = vmatprep.subr.bf16.mxu0 0
  %3449 = vmatpush1.bf16.msra.mxu0 0
  %3450 = vmatprep.subr.bf16.mxu0 0
  %3451 = vmatpush1.bf16.msra.mxu0 0
  %3452 = vmatprep.subr.bf16.mxu0 0
  %3453 = vmatpush1.bf16.msra.mxu0 0
  %3454 = vmatprep.subr.bf16.mxu0 0
  %3455 = vmatpush1.bf16.msra.mxu0 0
  %3456 = vmatprep.subr.bf16.mxu0 0
  %3457 = vmatpush1.bf16.msra.mxu0 0
  %3458 = vmatprep.subr.bf16.mxu0 0
  %3459 = vmatpush1.bf16.msra.mxu0 0
  %3460 = vmatprep.subr.bf16.mxu0 0
  %3461 = vmatpush1.bf16.msra.mxu0 0
  %3462 = vmatprep.subr.bf16.mxu0 0
  %3463 = vmatpush1.bf16.msra.mxu0 0
  %3464 = vmatprep.mubr.bf16.mxu0 0
  %3465 = vmatmul.mubr.bf16.gmra.mrb[0].mxu0 %v3360
  %v3466 = vpop.f32.mrb[0].mxu0
  %v3467 = vadd.f32 0.0, %v3466
  %v3468 = vpop.f32.mrb[0].mxu0
  %v3469 = vpop.f32.mrb[0].mxu0
  %v3470 = vadd.f32 0.0, %v3469
  %v3471 = vpop.f32.mrb[0].mxu0
  %3472 = vmatprep.mubr.bf16.mxu0 0
  %3473 = vmatmul.mubr.bf16.gmra.mrb[0].mxu0 %v3361
  %v3474 = vpop.f32.mrb[0].mxu0
  %v3475 = vadd.f32 0.0, %v3474
  %v3476 = vpop.f32.mrb[0].mxu0
  %v3477 = vpop.f32.mrb[0].mxu0
  %v3478 = vadd.f32 0.0, %v3477
  %v3479 = vpop.f32.mrb[0].mxu0
  %3480 = vmatprep.mubr.bf16.mxu0 0
  %3481 = vmatmul.mubr.bf16.gmra.mrb[0].mxu0 %v3362
  %v3482 = vpop.f32.mrb[0].mxu0
  %v3483 = vadd.f32 0.0, %v3482
  %v3484 = vpop.f32.mrb[0].mxu0
  %v3485 = vpop.f32.mrb[0].mxu0
  %v3486 = vadd.f32 0.0, %v3485
  %v3487 = vpop.f32.mrb[0].mxu0
  %3488 = vmatprep.mubr.bf16.mxu0 0
  %3489 = vmatmul.mubr.bf16.gmra.mrb[0].mxu0 %v3363
  %v3490 = vpop.f32.mrb[0].mxu0
  %v3491 = vadd.f32 0.0, %v3490
  %v3492 = vpop.f32.mrb[0].mxu0
  %v3493 = vpop.f32.mrb[0].mxu0
  %v3494 = vadd.f32 0.0, %v3493
  %v3495 = vpop.f32.mrb[0].mxu0
  %3496 = vmatprep.mubr.bf16.mxu0 0
  %3497 = vmatmul.mubr.bf16.gmra.mrb[0].mxu0 %v3364
  %v3498 = vpop.f32.mrb[0].mxu0
  %v3499 = vadd.f32 0.0, %v3498
  %v3500 = vpop.f32.mrb[0].mxu0
  %v3501 = vpop.f32.mrb[0].mxu0
  %v3502 = vadd.f32 0.0, %v3501
  %v3503 = vpop.f32.mrb[0].mxu0
  %3504 = vmatprep.mubr.bf16.mxu0 0
  %3505 = vmatmul.mubr.bf16.gmra.mrb[0].mxu0 %v3365
  %v3506 = vpop.f32.mrb[0].mxu0
  %v3507 = vadd.f32 0.0, %v3506
  %v3508 = vpop.f32.mrb[0].mxu0
  %v3509 = vpop.f32.mrb[0].mxu0
  %v3510 = vadd.f32 0.0, %v3509
  %v3511 = vpop.f32.mrb[0].mxu0
  %3512 = vmatprep.mubr.bf16.mxu0 0
  %3513 = vmatmul.mubr.bf16.gmra.mrb[0].mxu0 %v3366
  %v3514 = vpop.f32.mrb[0].mxu0
  %v3515 = vadd.f32 0.0, %v3514
  %v3516 = vpop.f32.mrb[0].mxu0
  %v3517 = vpop.f32.mrb[0].mxu0
  %v3518 = vadd.f32 0.0, %v3517
  %v3519 = vpop.f32.mrb[0].mxu0
  %3520 = vmatprep.mubr.bf16.mxu0 0
  %3521 = vmatmul.mubr.bf16.gmra.mrb[0].mxu0 %v3367
  %v3522 = vpop.f32.mrb[0].mxu0
  %v3523 = vadd.f32 0.0, %v3522
  %v3524 = vpop.f32.mrb[0].mxu0
  %v3525 = vpop.f32.mrb[0].mxu0
  %v3526 = vadd.f32 0.0, %v3525
  %v3527 = vpop.f32.mrb[0].mxu0
  %3528 = vdwg.mxu0
  %v3529 = vpack.c.bf16 %v3470, %v3467
  %v3530 = vpack.c.bf16 %v3478, %v3475
  %v3531 = vpack.c.bf16 %v3486, %v3483
  %v3532 = vpack.c.bf16 %v3494, %v3491
  %v3533 = vpack.c.bf16 %v3502, %v3499
  %v3534 = vpack.c.bf16 %v3510, %v3507
  %v3535 = vpack.c.bf16 %v3518, %v3515
  %v3536 = vpack.c.bf16 %v3526, %v3523
  %v3537 = vld [vmem:[%s4 + $0x12] ss:$0 sm:$0xff]
  %3538 = vmatprep.subr.bf16.mxu0 0
  %3539 = vmatpush1.bf16.msra.mxu0 %v3529
  %3540 = vmatprep.subr.bf16.mxu0 0
  %3541 = vmatpush1.bf16.msra.mxu0 %v3530
  %3542 = vmatprep.subr.bf16.mxu0 0
  %3543 = vmatpush1.bf16.msra.mxu0 %v3531
  %3544 = vmatprep.subr.bf16.mxu0 0
  %3545 = vmatpush1.bf16.msra.mxu0 %v3532
  %3546 = vmatprep.subr.bf16.mxu0 0
  %3547 = vmatpush1.bf16.msra.mxu0 %v3533
  %3548 = vmatprep.subr.bf16.mxu0 0
  %3549 = vmatpush1.bf16.msra.mxu0 %v3534
  %3550 = vmatprep.subr.bf16.mxu0 0
  %3551 = vmatpush1.bf16.msra.mxu0 %v3535
  %3552 = vmatprep.subr.bf16.mxu0 0
  %3553 = vmatpush1.bf16.msra.mxu0 %v3536
  %3554 = vmatprep.subr.bf16.mxu0 0
  %3555 = vmatpush1.bf16.msra.mxu0 0
  %3556 = vmatprep.subr.bf16.mxu0 0
  %3557 = vmatpush1.bf16.msra.mxu0 0
  %3558 = vmatprep.subr.bf16.mxu0 0
  %3559 = vmatpush1.bf16.msra.mxu0 0
  %3560 = vmatprep.subr.bf16.mxu0 0
  %3561 = vmatpush1.bf16.msra.mxu0 0
  %3562 = vmatprep.subr.bf16.mxu0 0
  %3563 = vmatpush1.bf16.msra.mxu0 0
  %3564 = vmatprep.subr.bf16.mxu0 0
  %3565 = vmatpush1.bf16.msra.mxu0 0
  %3566 = vmatprep.subr.bf16.mxu0 0
  %3567 = vmatpush1.bf16.msra.mxu0 0
  %3568 = vmatprep.subr.bf16.mxu0 0
  %3569 = vmatpush1.bf16.msra.mxu0 0
  %3570 = vmatprep.mubr.bf16.mxu0 0
  %3571 = vmatmul.mubr.bf16.gmra.mrb[0].mxu0 %v303
  %v3572 = vpop.f32.mrb[0].mxu0
  %v3573 = vadd.f32 %v3537, %v3572
  %v3574 = vpop.f32.mrb[0].mxu0
  %v3575 = vpop.f32.mrb[0].mxu0
  %v3576 = vadd.f32 %v3537, %v3575
  %v3577 = vpop.f32.mrb[0].mxu0
  %3578 = vmatprep.mubr.bf16.mxu0 0
  %3579 = vmatmul.mubr.bf16.gmra.mrb[0].mxu0 %v304
  %v3580 = vpop.f32.mrb[0].mxu0
  %v3581 = vadd.f32 %v3537, %v3580
  %v3582 = vpop.f32.mrb[0].mxu0
  %v3583 = vpop.f32.mrb[0].mxu0
  %v3584 = vadd.f32 %v3537, %v3583
  %v3585 = vpop.f32.mrb[0].mxu0
  %3586 = vmatprep.mubr.bf16.mxu0 0
  %3587 = vmatmul.mubr.bf16.gmra.mrb[0].mxu0 %v305
  %v3588 = vpop.f32.mrb[0].mxu0
  %v3589 = vadd.f32 %v3537, %v3588
  %v3590 = vpop.f32.mrb[0].mxu0
  %v3591 = vpop.f32.mrb[0].mxu0
  %v3592 = vadd.f32 %v3537, %v3591
  %v3593 = vpop.f32.mrb[0].mxu0
  %3594 = vmatprep.mubr.bf16.mxu0 0
  %3595 = vmatmul.mubr.bf16.gmra.mrb[0].mxu0 %v306
  %v3596 = vpop.f32.mrb[0].mxu0
  %v3597 = vadd.f32 %v3537, %v3596
  %v3598 = vpop.f32.mrb[0].mxu0
  %v3599 = vpop.f32.mrb[0].mxu0
  %v3600 = vadd.f32 %v3537, %v3599
  %v3601 = vpop.f32.mrb[0].mxu0
  %3602 = vmatprep.mubr.bf16.mxu0 0
  %3603 = vmatmul.mubr.bf16.gmra.mrb[0].mxu0 %v307
  %v3604 = vpop.f32.mrb[0].mxu0
  %v3605 = vadd.f32 %v3537, %v3604
  %v3606 = vpop.f32.mrb[0].mxu0
  %v3607 = vpop.f32.mrb[0].mxu0
  %v3608 = vadd.f32 %v3537, %v3607
  %v3609 = vpop.f32.mrb[0].mxu0
  %3610 = vmatprep.mubr.bf16.mxu0 0
  %3611 = vmatmul.mubr.bf16.gmra.mrb[0].mxu0 %v308
  %v3612 = vpop.f32.mrb[0].mxu0
  %v3613 = vadd.f32 %v3537, %v3612
  %v3614 = vpop.f32.mrb[0].mxu0
  %v3615 = vpop.f32.mrb[0].mxu0
  %v3616 = vadd.f32 %v3537, %v3615
  %v3617 = vpop.f32.mrb[0].mxu0
  %3618 = vmatprep.mubr.bf16.mxu0 0
  %3619 = vmatmul.mubr.bf16.gmra.mrb[0].mxu0 %v309
  %v3620 = vpop.f32.mrb[0].mxu0
  %v3621 = vadd.f32 %v3537, %v3620
  %v3622 = vpop.f32.mrb[0].mxu0
  %v3623 = vpop.f32.mrb[0].mxu0
  %v3624 = vadd.f32 %v3537, %v3623
  %v3625 = vpop.f32.mrb[0].mxu0
  %3626 = vmatprep.mubr.bf16.mxu0 0
  %3627 = vmatmul.mubr.bf16.gmra.mrb[0].mxu0 %v310
  %v3628 = vpop.f32.mrb[0].mxu0
  %v3629 = vadd.f32 %v3537, %v3628
  %v3630 = vpop.f32.mrb[0].mxu0
  %v3631 = vpop.f32.mrb[0].mxu0
  %v3632 = vadd.f32 %v3537, %v3631
  %v3633 = vpop.f32.mrb[0].mxu0
  %3634 = vdwg.mxu0
  %v3635 = vtanh.pop %v3573
  %v3636 = vtanh.pop %v3576
  %v3637 = vtanh.pop %v3581
  %v3638 = vtanh.pop %v3584
  %v3639 = vtanh.pop %v3589
  %v3640 = vtanh.pop %v3592
  %v3641 = vtanh.pop %v3597
  %v3642 = vtanh.pop %v3600
  %v3643 = vtanh.pop %v3605
  %v3644 = vtanh.pop %v3608
  %v3645 = vtanh.pop %v3613
  %v3646 = vtanh.pop %v3616
  %v3647 = vtanh.pop %v3621
  %v3648 = vtanh.pop %v3624
  %v3649 = vtanh.pop %v3629
  %v3650 = vtanh.pop %v3632
  %v3651 = vpack.c.bf16 %v3636, %v3635
  %v3652 = vpack.c.bf16 %v3638, %v3637
  %v3653 = vpack.c.bf16 %v3640, %v3639
  %v3654 = vpack.c.bf16 %v3642, %v3641
  %v3655 = vpack.c.bf16 %v3644, %v3643
  %v3656 = vpack.c.bf16 %v3646, %v3645
  %v3657 = vpack.c.bf16 %v3648, %v3647
  %v3658 = vpack.c.bf16 %v3650, %v3649
  %v3659 = vld [vmem:[%s2 + $0x300] sm:$0xf]
  %v3660 = vld [vmem:[%s2 + $0x304] sm:$0xf]
  %v3661 = vld [vmem:[%s2 + $0x308] sm:$0xf]
  %v3662 = vld [vmem:[%s2 + $0x30c] sm:$0xf]
  %v3663 = vld [vmem:[%s2 + $0x310] sm:$0xf]
  %v3664 = vld [vmem:[%s2 + $0x314] sm:$0xf]
  %v3665 = vld [vmem:[%s2 + $0x318] sm:$0xf]
  %v3666 = vld [vmem:[%s2 + $0x31c] sm:$0xf]
  %v3667 = vld [vmem:[%s2 + $0x320] sm:$0xf]
  %v3668 = vld [vmem:[%s2 + $0x324] sm:$0xf]
  %v3669 = vld [vmem:[%s2 + $0x328] sm:$0xf]
  %v3670 = vld [vmem:[%s2 + $0x32c] sm:$0xf]
  %v3671 = vld [vmem:[%s2 + $0x330] sm:$0xf]
  %v3672 = vld [vmem:[%s2 + $0x334] sm:$0xf]
  %v3673 = vld [vmem:[%s2 + $0x338] sm:$0xf]
  %v3674 = vld [vmem:[%s2 + $0x33c] sm:$0xf]
  %v3691 = vunpack.c.l.b16 %v3659
  %v3692 = vunpack.c.l.b16 %v3660
  %v3693 = vunpack.c.l.b16 %v3661
  %v3694 = vunpack.c.l.b16 %v3662
  %v3695 = vunpack.c.l.b16 %v3663
  %v3696 = vunpack.c.l.b16 %v3664
  %v3697 = vunpack.c.l.b16 %v3665
  %v3698 = vunpack.c.l.b16 %v3666
  %v3699 = vunpack.c.l.b16 %v3667
  %v3700 = vunpack.c.l.b16 %v3668
  %v3701 = vunpack.c.l.b16 %v3669
  %v3702 = vunpack.c.l.b16 %v3670
  %v3703 = vunpack.c.l.b16 %v3671
  %v3704 = vunpack.c.l.b16 %v3672
  %v3705 = vunpack.c.l.b16 %v3673
  %v3706 = vunpack.c.l.b16 %v3674
  %v3707 = vpack.c.b16 %v3692, %v3691
  %v3708 = vpack.c.b16 %v3694, %v3693
  %v3709 = vpack.c.b16 %v3696, %v3695
  %v3710 = vpack.c.b16 %v3698, %v3697
  %v3711 = vpack.c.b16 %v3700, %v3699
  %v3712 = vpack.c.b16 %v3702, %v3701
  %v3713 = vpack.c.b16 %v3704, %v3703
  %v3714 = vpack.c.b16 %v3706, %v3705
  %3723 = vmatprep.subr.bf16.mxu0 0
  %3724 = vmatpush1.bf16.msra.mxu0 %v3707
  %3725 = vmatprep.subr.bf16.mxu0 0
  %3726 = vmatpush1.bf16.msra.mxu0 %v3708
  %3727 = vmatprep.subr.bf16.mxu0 0
  %3728 = vmatpush1.bf16.msra.mxu0 %v3709
  %3729 = vmatprep.subr.bf16.mxu0 0
  %3730 = vmatpush1.bf16.msra.mxu0 %v3710
  %3731 = vmatprep.subr.bf16.mxu0 0
  %3732 = vmatpush1.bf16.msra.mxu0 %v3711
  %3733 = vmatprep.subr.bf16.mxu0 0
  %3734 = vmatpush1.bf16.msra.mxu0 %v3712
  %3735 = vmatprep.subr.bf16.mxu0 0
  %3736 = vmatpush1.bf16.msra.mxu0 %v3713
  %3737 = vmatprep.subr.bf16.mxu0 0
  %3738 = vmatpush1.bf16.msra.mxu0 %v3714
  %3739 = vmatprep.subr.bf16.mxu0 0
  %3740 = vmatpush1.bf16.msra.mxu0 0
  %3741 = vmatprep.subr.bf16.mxu0 0
  %3742 = vmatpush1.bf16.msra.mxu0 0
  %3743 = vmatprep.subr.bf16.mxu0 0
  %3744 = vmatpush1.bf16.msra.mxu0 0
  %3745 = vmatprep.subr.bf16.mxu0 0
  %3746 = vmatpush1.bf16.msra.mxu0 0
  %3747 = vmatprep.subr.bf16.mxu0 0
  %3748 = vmatpush1.bf16.msra.mxu0 0
  %3749 = vmatprep.subr.bf16.mxu0 0
  %3750 = vmatpush1.bf16.msra.mxu0 0
  %3751 = vmatprep.subr.bf16.mxu0 0
  %3752 = vmatpush1.bf16.msra.mxu0 0
  %3753 = vmatprep.subr.bf16.mxu0 0
  %3754 = vmatpush1.bf16.msra.mxu0 0
  %3755 = vmatprep.mubr.bf16.mxu0 0
  %3756 = vmatmul.mubr.bf16.gmra.mrb[0].mxu0 %v3651
  %v3757 = vpop.f32.mrb[0].mxu0
  %v3758 = vadd.f32 0.0, %v3757
  %v3759 = vpop.f32.mrb[0].mxu0
  %v3760 = vpop.f32.mrb[0].mxu0
  %v3761 = vadd.f32 0.0, %v3760
  %v3762 = vpop.f32.mrb[0].mxu0
  %3763 = vmatprep.mubr.bf16.mxu0 0
  %3764 = vmatmul.mubr.bf16.gmra.mrb[0].mxu0 %v3652
  %v3765 = vpop.f32.mrb[0].mxu0
  %v3766 = vadd.f32 0.0, %v3765
  %v3767 = vpop.f32.mrb[0].mxu0
  %v3768 = vpop.f32.mrb[0].mxu0
  %v3769 = vadd.f32 0.0, %v3768
  %v3770 = vpop.f32.mrb[0].mxu0
  %3771 = vmatprep.mubr.bf16.mxu0 0
  %3772 = vmatmul.mubr.bf16.gmra.mrb[0].mxu0 %v3653
  %v3773 = vpop.f32.mrb[0].mxu0
  %v3774 = vadd.f32 0.0, %v3773
  %v3775 = vpop.f32.mrb[0].mxu0
  %v3776 = vpop.f32.mrb[0].mxu0
  %v3777 = vadd.f32 0.0, %v3776
  %v3778 = vpop.f32.mrb[0].mxu0
  %3779 = vmatprep.mubr.bf16.mxu0 0
  %3780 = vmatmul.mubr.bf16.gmra.mrb[0].mxu0 %v3654
  %v3781 = vpop.f32.mrb[0].mxu0
  %v3782 = vadd.f32 0.0, %v3781
  %v3783 = vpop.f32.mrb[0].mxu0
  %v3784 = vpop.f32.mrb[0].mxu0
  %v3785 = vadd.f32 0.0, %v3784
  %v3786 = vpop.f32.mrb[0].mxu0
  %3787 = vmatprep.mubr.bf16.mxu0 0
  %3788 = vmatmul.mubr.bf16.gmra.mrb[0].mxu0 %v3655
  %v3789 = vpop.f32.mrb[0].mxu0
  %v3790 = vadd.f32 0.0, %v3789
  %v3791 = vpop.f32.mrb[0].mxu0
  %v3792 = vpop.f32.mrb[0].mxu0
  %v3793 = vadd.f32 0.0, %v3792
  %v3794 = vpop.f32.mrb[0].mxu0
  %3795 = vmatprep.mubr.bf16.mxu0 0
  %3796 = vmatmul.mubr.bf16.gmra.mrb[0].mxu0 %v3656
  %v3797 = vpop.f32.mrb[0].mxu0
  %v3798 = vadd.f32 0.0, %v3797
  %v3799 = vpop.f32.mrb[0].mxu0
  %v3800 = vpop.f32.mrb[0].mxu0
  %v3801 = vadd.f32 0.0, %v3800
  %v3802 = vpop.f32.mrb[0].mxu0
  %3803 = vmatprep.mubr.bf16.mxu0 0
  %3804 = vmatmul.mubr.bf16.gmra.mrb[0].mxu0 %v3657
  %v3805 = vpop.f32.mrb[0].mxu0
  %v3806 = vadd.f32 0.0, %v3805
  %v3807 = vpop.f32.mrb[0].mxu0
  %v3808 = vpop.f32.mrb[0].mxu0
  %v3809 = vadd.f32 0.0, %v3808
  %v3810 = vpop.f32.mrb[0].mxu0
  %3811 = vmatprep.mubr.bf16.mxu0 0
  %3812 = vmatmul.mubr.bf16.gmra.mrb[0].mxu0 %v3658
  %v3813 = vpop.f32.mrb[0].mxu0
  %v3814 = vadd.f32 0.0, %v3813
  %v3815 = vpop.f32.mrb[0].mxu0
  %v3816 = vpop.f32.mrb[0].mxu0
  %v3817 = vadd.f32 0.0, %v3816
  %v3818 = vpop.f32.mrb[0].mxu0
  %3819 = vdwg.mxu0
  %v3820 = vpack.c.bf16 %v3761, %v3758
  %v3821 = vpack.c.bf16 %v3769, %v3766
  %v3822 = vpack.c.bf16 %v3777, %v3774
  %v3823 = vpack.c.bf16 %v3785, %v3782
  %v3824 = vpack.c.bf16 %v3793, %v3790
  %v3825 = vpack.c.bf16 %v3801, %v3798
  %v3826 = vpack.c.bf16 %v3809, %v3806
  %v3827 = vpack.c.bf16 %v3817, %v3814
  %v3828 = vld [vmem:[%s4 + $0x13] ss:$0 sm:$0xff]
  %3829 = vmatprep.subr.bf16.mxu0 0
  %3830 = vmatpush1.bf16.msra.mxu0 %v3820
  %3831 = vmatprep.subr.bf16.mxu0 0
  %3832 = vmatpush1.bf16.msra.mxu0 %v3821
  %3833 = vmatprep.subr.bf16.mxu0 0
  %3834 = vmatpush1.bf16.msra.mxu0 %v3822
  %3835 = vmatprep.subr.bf16.mxu0 0
  %3836 = vmatpush1.bf16.msra.mxu0 %v3823
  %3837 = vmatprep.subr.bf16.mxu0 0
  %3838 = vmatpush1.bf16.msra.mxu0 %v3824
  %3839 = vmatprep.subr.bf16.mxu0 0
  %3840 = vmatpush1.bf16.msra.mxu0 %v3825
  %3841 = vmatprep.subr.bf16.mxu0 0
  %3842 = vmatpush1.bf16.msra.mxu0 %v3826
  %3843 = vmatprep.subr.bf16.mxu0 0
  %3844 = vmatpush1.bf16.msra.mxu0 %v3827
  %3845 = vmatprep.subr.bf16.mxu0 0
  %3846 = vmatpush1.bf16.msra.mxu0 0
  %3847 = vmatprep.subr.bf16.mxu0 0
  %3848 = vmatpush1.bf16.msra.mxu0 0
  %3849 = vmatprep.subr.bf16.mxu0 0
  %3850 = vmatpush1.bf16.msra.mxu0 0
  %3851 = vmatprep.subr.bf16.mxu0 0
  %3852 = vmatpush1.bf16.msra.mxu0 0
  %3853 = vmatprep.subr.bf16.mxu0 0
  %3854 = vmatpush1.bf16.msra.mxu0 0
  %3855 = vmatprep.subr.bf16.mxu0 0
  %3856 = vmatpush1.bf16.msra.mxu0 0
  %3857 = vmatprep.subr.bf16.mxu0 0
  %3858 = vmatpush1.bf16.msra.mxu0 0
  %3859 = vmatprep.subr.bf16.mxu0 0
  %3860 = vmatpush1.bf16.msra.mxu0 0
  %3861 = vmatprep.mubr.bf16.mxu0 0
  %3862 = vmatmul.mubr.bf16.gmra.mrb[0].mxu0 %v303
  %v3863 = vpop.f32.mrb[0].mxu0
  %v3864 = vadd.f32 %v3828, %v3863
  %v3865 = vpop.f32.mrb[0].mxu0
  %v3866 = vpop.f32.mrb[0].mxu0
  %v3867 = vadd.f32 %v3828, %v3866
  %v3868 = vpop.f32.mrb[0].mxu0
  %3869 = vmatprep.mubr.bf16.mxu0 0
  %3870 = vmatmul.mubr.bf16.gmra.mrb[0].mxu0 %v304
  %v3871 = vpop.f32.mrb[0].mxu0
  %v3872 = vadd.f32 %v3828, %v3871
  %v3873 = vpop.f32.mrb[0].mxu0
  %v3874 = vpop.f32.mrb[0].mxu0
  %v3875 = vadd.f32 %v3828, %v3874
  %v3876 = vpop.f32.mrb[0].mxu0
  %3877 = vmatprep.mubr.bf16.mxu0 0
  %3878 = vmatmul.mubr.bf16.gmra.mrb[0].mxu0 %v305
  %v3879 = vpop.f32.mrb[0].mxu0
  %v3880 = vadd.f32 %v3828, %v3879
  %v3881 = vpop.f32.mrb[0].mxu0
  %v3882 = vpop.f32.mrb[0].mxu0
  %v3883 = vadd.f32 %v3828, %v3882
  %v3884 = vpop.f32.mrb[0].mxu0
  %3885 = vmatprep.mubr.bf16.mxu0 0
  %3886 = vmatmul.mubr.bf16.gmra.mrb[0].mxu0 %v306
  %v3887 = vpop.f32.mrb[0].mxu0
  %v3888 = vadd.f32 %v3828, %v3887
  %v3889 = vpop.f32.mrb[0].mxu0
  %v3890 = vpop.f32.mrb[0].mxu0
  %v3891 = vadd.f32 %v3828, %v3890
  %v3892 = vpop.f32.mrb[0].mxu0
  %3893 = vmatprep.mubr.bf16.mxu0 0
  %3894 = vmatmul.mubr.bf16.gmra.mrb[0].mxu0 %v307
  %v3895 = vpop.f32.mrb[0].mxu0
  %v3896 = vadd.f32 %v3828, %v3895
  %v3897 = vpop.f32.mrb[0].mxu0
  %v3898 = vpop.f32.mrb[0].mxu0
  %v3899 = vadd.f32 %v3828, %v3898
  %v3900 = vpop.f32.mrb[0].mxu0
  %3901 = vmatprep.mubr.bf16.mxu0 0
  %3902 = vmatmul.mubr.bf16.gmra.mrb[0].mxu0 %v308
  %v3903 = vpop.f32.mrb[0].mxu0
  %v3904 = vadd.f32 %v3828, %v3903
  %v3905 = vpop.f32.mrb[0].mxu0
  %v3906 = vpop.f32.mrb[0].mxu0
  %v3907 = vadd.f32 %v3828, %v3906
  %v3908 = vpop.f32.mrb[0].mxu0
  %3909 = vmatprep.mubr.bf16.mxu0 0
  %3910 = vmatmul.mubr.bf16.gmra.mrb[0].mxu0 %v309
  %v3911 = vpop.f32.mrb[0].mxu0
  %v3912 = vadd.f32 %v3828, %v3911
  %v3913 = vpop.f32.mrb[0].mxu0
  %v3914 = vpop.f32.mrb[0].mxu0
  %v3915 = vadd.f32 %v3828, %v3914
  %v3916 = vpop.f32.mrb[0].mxu0
  %3917 = vmatprep.mubr.bf16.mxu0 0
  %3918 = vmatmul.mubr.bf16.gmra.mrb[0].mxu0 %v310
  %v3919 = vpop.f32.mrb[0].mxu0
  %v3920 = vadd.f32 %v3828, %v3919
  %v3921 = vpop.f32.mrb[0].mxu0
  %v3922 = vpop.f32.mrb[0].mxu0
  %v3923 = vadd.f32 %v3828, %v3922
  %v3924 = vpop.f32.mrb[0].mxu0
  %3925 = vdwg.mxu0
  %3926 = vst [vmem:[%s5] sm:$0xff] %v3864
  %3927 = vst [vmem:[%s5 + $0x8] sm:$0xff] %v3867
  %3928 = vst [vmem:[%s5 + $0x10] sm:$0xff] %v3872
  %3929 = vst [vmem:[%s5 + $0x18] sm:$0xff] %v3875
  %3930 = vst [vmem:[%s5 + $0x20] sm:$0xff] %v3880
  %3931 = vst [vmem:[%s5 + $0x28] sm:$0xff] %v3883
  %3932 = vst [vmem:[%s5 + $0x30] sm:$0xff] %v3888
  %3933 = vst [vmem:[%s5 + $0x38] sm:$0xff] %v3891
  %3934 = vst [vmem:[%s5 + $0x40] sm:$0xff] %v3896
  %3935 = vst [vmem:[%s5 + $0x48] sm:$0xff] %v3899
  %3936 = vst [vmem:[%s5 + $0x50] sm:$0xff] %v3904
  %3937 = vst [vmem:[%s5 + $0x58] sm:$0xff] %v3907
  %3938 = vst [vmem:[%s5 + $0x60] sm:$0xff] %v3912
  %3939 = vst [vmem:[%s5 + $0x68] sm:$0xff] %v3915
  %3940 = vst [vmem:[%s5 + $0x70] sm:$0xff] %v3920
  %3941 = vst [vmem:[%s5 + $0x78] sm:$0xff] %v3923
  // Predicated region
  $region22: #{gcn_forward.1} parent=0 // pred_check
    _
  $region23: #{gcn_forward.1} parent=0 // pred_check_branch
    %3943 = sbr.rel (0) target = $region25
  $region24: #{gcn_forward.1} parent=0 // pred_region
    _
  $region25: #{gcn_forward.1} parent=0 // pred_fallthru
    _
  // Predicated region
  $region26: #{gcn_forward.1} parent=0 // pred_check
    _
  $region27: #{gcn_forward.1} parent=0 // pred_check_branch
    %3945 = sbr.rel (0) target = $region29
  $region28: #{gcn_forward.1} parent=0 // pred_region
    _
  $region29: #{gcn_forward.1} parent=0 // pred_fallthru
    _

</llo_original>
